<compile_context>
chip_gen: v6e
topology: v6e:2x2x1
jax: 0.10.0
libtpu: 0.0.40
codegen_flags: <defaults>
</compile_context>

<pallas_src>
import math

import jax
import jax.numpy as jnp
import numpy as np
from jax import lax
from jax.experimental import pallas as pl
from jax.experimental.pallas import tpu as pltpu


# ----------------------------------------------------------------------------
# helpers
# ----------------------------------------------------------------------------
def _round_up(x, m):
    return (x + m - 1) // m * m


def _vmem_capacity_bytes():
    """Physical VMEM of the current generation (conservative fallback)."""
    try:
        info = pltpu.get_tpu_info()
        cap = getattr(info, "vmem_capacity_bytes", None)
        if cap:
            return int(cap)
    except Exception:
        pass
    return 64 * 1024 * 1024          # v7x per-core physical — safe lower bound


def _choose_tiling(n, hw, c_pad, n_rows, itemsize, budget, target_lanes, sub):
    """Pick (images_per_tile, channel_chunk) so one pipelined step fits VMEM.

    Tiles are whole images (so the in-kernel lane shifts never need halos)
    and the lane width npt*hw is kept a multiple of 128 (lane-dense stores).
    """
    base = 128 // math.gcd(hw, 128)              # min images for 128-lane tiles
    n_groups = -(-n // base)
    npt = base
    while npt * hw < target_lanes and npt // base < n_groups:
        npt += base

    def step_bytes(npt_, cc_):
        lanes = npt_ * hw
        return (2 * 4 * cc_ * lanes * itemsize   # double-buffered phase planes
                + 6 * cc_ * lanes * itemsize     # shifted-tap temporaries
                + 2 * n_rows * lanes * 4)        # resident f32 output block

    cc = c_pad
    while cc > sub and step_bytes(npt, cc) > budget:
        cc -= sub
        while cc > sub and c_pad % cc:           # must divide c_pad exactly
            cc -= sub
    while npt > base and step_bytes(npt, cc) > budget:
        npt -= base
    return npt, cc


# ----------------------------------------------------------------------------
# kernel
# ----------------------------------------------------------------------------
def _make_kernel(n_conv, row0_pool, c_chunk, wo, l_tile, has_pool, precision):
    """Fused conv(3x3,s2) + maxpool(2x2,s2) + BN(eval) + PReLU kernel body."""

    def kernel(ph_ref, w_ref, prm_ref, msk_ref, out_ref):
        k = pl.program_id(1)                     # channel-chunk (reduction)
        c0 = k * c_chunk
        cdt = ph_ref.dtype

        p00 = ph_ref[0]                          # (c_chunk, l_tile)
        p01 = ph_ref[1]
        p10 = ph_ref[2]
        p11 = ph_ref[3]
        m_up = msk_ref[0]                        # (1, l_tile): 0 on first out row
        m_left = msk_ref[1]                      # (1, l_tile): 0 on first out col

        def shift(p, s):                         # result[l] = p[l - s], zero fill
            if s >= l_tile:
                return jnp.zeros_like(p)
            z = jnp.zeros((p.shape[0], s), cdt)
            return jnp.concatenate([z, p[:, : l_tile - s]], axis=1)

        up = lambda p: shift(p, wo) * m_up
        left = lambda p: shift(p, 1) * m_left
        upleft = lambda p: shift(p, wo + 1) * m_up * m_left

        # 3x3 taps at output (i, j) read x[2i+kh-1, 2j+kw-1]; tap index kh*3+kw.
        taps = (upleft(p11), up(p10), up(p11),     # kh = 0
                left(p01),   p00,     p01,         # kh = 1
                left(p11),   p10,     p11)         # kh = 2

        # ---- conv partial sum for this channel chunk (9 MXU dots) ----------
        partial = None
        for t in range(9):
            w_t = w_ref[t, pl.ds(c0, c_chunk), :]          # (c_chunk, n_conv)
            d = lax.dot_general(
                w_t, taps[t],
                dimension_numbers=(((0,), (0,)), ((), ())),
                preferred_element_type=jnp.float32,
                precision=precision)                       # (n_conv, l_tile)
            partial = d if partial is None else partial + d

        @pl.when(k == 0)
        def _init():
            out_ref[0:n_conv, :] = jnp.zeros((n_conv, l_tile), jnp.float32)

        out_ref[0:n_conv, :] = out_ref[0:n_conv, :] + partial

        # ---- max-pool rows of this chunk: BN + PReLU and store immediately -
        if has_pool:
            pooled = jnp.maximum(jnp.maximum(p00, p01),
                                 jnp.maximum(p10, p11)).astype(jnp.float32)
            sp = prm_ref[0, pl.ds(row0_pool + c0, c_chunk), :]
            bp = prm_ref[1, pl.ds(row0_pool + c0, c_chunk), :]
            ap = prm_ref[2, pl.ds(row0_pool + c0, c_chunk), :]
            y = pooled * sp + bp
            out_ref[pl.ds(row0_pool + c0, c_chunk), :] = jnp.where(y > 0, y,
                                                                   ap * y)

        # ---- finalize conv rows after the last channel chunk ---------------
        @pl.when(k == pl.num_programs(1) - 1)
        def _finalize():
            sc = prm_ref[0, 0:n_conv, :]
            bc = prm_ref[1, 0:n_conv, :]
            ac = prm_ref[2, 0:n_conv, :]
            y = out_ref[0:n_conv, :] * sc + bc
            out_ref[0:n_conv, :] = jnp.where(y > 0, y, ac * y)

    return kernel


# ----------------------------------------------------------------------------
# wrapper
# ----------------------------------------------------------------------------
def downsampling_block(x, conv_w, gamma, beta, run_mean, run_var, alpha, *,
                       eps=1e-3, compute_dtype=jnp.float32, target_lanes=4096):
    """Pallas implementation of DownSamplingBlock.forward (eval-mode BN).

    x       : (N, nIn, H, W) float32, H and W even.
    conv_w  : (nConv, nIn, 3, 3) (PyTorch OIHW, bias=False)
    returns : (N, nOut, H//2, W//2) float32.
    """
    N, c_in, H, W = x.shape
    assert H % 2 == 0 and W % 2 == 0, "H and W must be even"
    n_conv = conv_w.shape[0]
    n_out = gamma.shape[0]
    has_pool = c_in < n_out
    assert n_out == (n_conv + c_in if has_pool else n_conv)

    ho, wo = H // 2, W // 2
    hw = ho * wo
    itemsize = jnp.dtype(compute_dtype).itemsize
    sub = 8 if itemsize == 4 else 16                # sublane granularity
    c_pad = _round_up(c_in, sub)                    # padded input channels
    nc8 = _round_up(n_conv, 8)                      # pool rows start 8-aligned
    row0_pool = nc8
    n_rows = (nc8 + c_pad) if has_pool else n_conv  # kernel output rows

    cap = _vmem_capacity_bytes()
    npt, c_chunk = _choose_tiling(N, hw, c_pad, n_rows, itemsize,
                                  int(cap * 0.4), target_lanes, sub)
    n_pad = _round_up(N, npt)
    l_tile = npt * hw
    l_total = n_pad * hw
    n_tiles = n_pad // npt
    n_chunks = c_pad // c_chunk

    # ---- phase planes: one read of x, lane-dense (batch folded into lanes) -
    p = jnp.stack([x[:, :, 0::2, 0::2], x[:, :, 0::2, 1::2],
                   x[:, :, 1::2, 0::2], x[:, :, 1::2, 1::2]], axis=0)
    p = jnp.transpose(p, (0, 2, 1, 3, 4)).reshape(4, c_in, N * hw)
    p = jnp.pad(p, ((0, 0), (0, c_pad - c_in), (0, l_total - N * hw)))
    p = p.astype(compute_dtype)

    # ---- conv weights, tap-major: (9, C_pad, n_conv) ------------------------
    w = jnp.transpose(conv_w, (2, 3, 1, 0)).reshape(9, c_in, n_conv)
    w = jnp.pad(w, ((0, 0), (0, c_pad - c_in), (0, 0))).astype(compute_dtype)

    # ---- fused BN(eval) + PReLU params, laid out to match output rows ------
    scale = gamma / jnp.sqrt(run_var + eps)
    shift = beta - run_mean * scale

    def rows(v):
        v = v.astype(jnp.float32)
        if not has_pool:
            return v
        return jnp.concatenate([
            v[:n_conv], jnp.zeros((nc8 - n_conv,), jnp.float32),
            v[n_conv:], jnp.zeros((c_pad - c_in,), jnp.float32)])

    params = jnp.stack([rows(scale), rows(shift),
                        rows(alpha)]).reshape(3, n_rows, 1)

    # ---- image-boundary masks for the shifted taps --------------------------
    g = np.arange(l_tile)
    masks = jnp.asarray(np.stack([(g % hw) >= wo, (g % wo) != 0])[:, None, :],
                        dtype=compute_dtype)

    precision = lax.Precision.HIGHEST if itemsize == 4 else None
    kernel = _make_kernel(n_conv, row0_pool, c_chunk, wo, l_tile, has_pool,
                          precision)

    out = pl.pallas_call(
        kernel,
        out_shape=jax.ShapeDtypeStruct((n_rows, l_total), jnp.float32),
        grid=(n_tiles, n_chunks),
        in_specs=[
            pl.BlockSpec((4, c_chunk, l_tile), lambda t, k: (0, k, t)),
            pl.BlockSpec((9, c_pad, n_conv), lambda t, k: (0, 0, 0)),
            pl.BlockSpec((3, n_rows, 1), lambda t, k: (0, 0, 0)),
            pl.BlockSpec((2, 1, l_tile), lambda t, k: (0, 0, 0)),
        ],
        out_specs=pl.BlockSpec((n_rows, l_tile), lambda t, k: (0, t)),
        compiler_params=pltpu.CompilerParams(
            dimension_semantics=("parallel", "arbitrary"),
            vmem_limit_bytes=int(cap * 0.85)),
    )(p, w, params, masks)

    # ---- un-pad / re-assemble: (N, nOut, Ho, Wo) -----------------------------
    conv_rows = out[:n_conv]
    if has_pool:
        out = jnp.concatenate([conv_rows, out[row0_pool:row0_pool + c_in]],
                              axis=0)
    else:
        out = conv_rows
    out = out[:, :N * hw].reshape(n_out, N, ho, wo)
    return jnp.transpose(out, (1, 0, 2, 3))


# ----------------------------------------------------------------------------
# pure-JAX reference (mirrors the PyTorch forward in eval mode)
# ----------------------------------------------------------------------------
def downsampling_block_ref(x, conv_w, gamma, beta, run_mean, run_var, alpha,
                           *, eps=1e-3):
    n_out = gamma.shape[0]
    c_in = x.shape[1]
    conv = lax.conv_general_dilated(
        x, conv_w, window_strides=(2, 2), padding=((1, 1), (1, 1)),
        dimension_numbers=("NCHW", "OIHW", "NCHW"),
        precision=lax.Precision.HIGHEST)
    if c_in < n_out:
        pool = lax.reduce_window(x, -jnp.inf, lax.max,
                                 (1, 1, 2, 2), (1, 1, 2, 2), "VALID")
        y = jnp.concatenate([conv, pool], axis=1)
    else:
        y = conv
    g = gamma[None, :, None, None]
    b = beta[None, :, None, None]
    mu = run_mean[None, :, None, None]
    var = run_var[None, :, None, None]
    y = (y - mu) / jnp.sqrt(var + eps) * g + b
    a = alpha[None, :, None, None]
    return jnp.where(y > 0, y, a * y)


# ----------------------------------------------------------------------------
# self-test
# ----------------------------------------------------------------------------
def _run_case(key, N, nIn, nOut, H, W, compute_dtype, atol, rtol):
    nConv = nOut - nIn if nIn < nOut else nOut
    k = jax.random.split(key, 7)
    x = jax.random.normal(k[0], (N, nIn, H, W), jnp.float32)
    conv_w = 0.1 * jax.random.normal(k[1], (nConv, nIn, 3, 3), jnp.float32)
    gamma = 1.0 + 0.1 * jax.random.normal(k[2], (nOut,), jnp.float32)
    beta = 0.1 * jax.random.normal(k[3], (nOut,), jnp.float32)
    run_mean = 0.05 * jax.random.normal(k[4], (nOut,), jnp.float32)
    run_var = jax.random.uniform(k[5], (nOut,), jnp.float32, 0.5, 1.5)
    alpha = jnp.full((nOut,), 0.25, jnp.float32)      # PReLU default init

    out = downsampling_block(x, conv_w, gamma, beta, run_mean, run_var, alpha,
                             compute_dtype=compute_dtype)
    out = jax.block_until_ready(out)
    ref = downsampling_block_ref(x, conv_w, gamma, beta, run_mean, run_var,
                                 alpha)
    assert out.shape == (N, nOut, H // 2, W // 2), out.shape
    np.testing.assert_allclose(np.asarray(out), np.asarray(ref),
                               rtol=rtol, atol=atol)


if __name__ == "__main__":
    key = jax.random.PRNGKey(0)
    k1, k2, k3 = jax.random.split(key, 3)
    # nIn < nOut : conv + max-pool concat branch (f32, MXU precision HIGHEST)
    _run_case(k1, N=2, nIn=4, nOut=8, H=16, W=16,
              compute_dtype=jnp.float32, atol=1e-4, rtol=1e-4)
    # nIn >= nOut : conv-only branch (f32)
    _run_case(k2, N=2, nIn=8, nOut=8, H=16, W=16,
              compute_dtype=jnp.float32, atol=1e-4, rtol=1e-4)
    # fast path: bf16 phase/weight stream (halves HBM traffic), f32 accumulate
    _run_case(k3, N=2, nIn=4, nOut=8, H=16, W=16,
              compute_dtype=jnp.bfloat16, atol=5e-2, rtol=5e-2)
    print("KERNEL_OK")
</pallas_src>

<mosaic_0001>
module attributes {stable_mosaic.version = 11 : i64} {
  func.func @kernel(%arg0: i32, %arg1: i32, %arg2: memref<4x8x128xf32, #tpu.memory_space<vmem>>, %arg3: memref<9x8x4xf32, #tpu.memory_space<vmem>>, %arg4: memref<3x16x1xf32, #tpu.memory_space<vmem>>, %arg5: memref<2x1x128xf32, #tpu.memory_space<vmem>>, %arg6: memref<16x128xf32, #tpu.memory_space<vmem>>) attributes {dimension_semantics = [#tpu.dimension_semantics<parallel>, #tpu.dimension_semantics<arbitrary>], iteration_bounds = array<i64: 1, 1>, scalar_prefetch = 0 : i64, scratch_operands = 0 : i64, tpu.core_type = #tpu.core_type<tc>, window_params = [{transform_indices = @transform_0, window_bounds = array<i64: 4, 8, 128>}, {pipeline_mode = #tpu.pipeline_mode<synchronous>, transform_indices = @transform_1, window_bounds = array<i64: 9, 8, 4>}, {pipeline_mode = #tpu.pipeline_mode<synchronous>, transform_indices = @transform_2, window_bounds = array<i64: 3, 16, 1>}, {pipeline_mode = #tpu.pipeline_mode<synchronous>, transform_indices = @transform_3, window_bounds = array<i64: 2, 1, 128>}, {transform_indices = @transform_4, window_bounds = array<i64: 16, 128>}]} {
    %c8_i32 = arith.constant 8 : i32
    %0 = arith.muli %arg1, %c8_i32 : i32
    %c0 = arith.constant 0 : index
    %c0_0 = arith.constant 0 : index
    %c0_1 = arith.constant 0 : index
    %1 = vector.load %arg2[%c0, %c0_0, %c0_1] : memref<4x8x128xf32, #tpu.memory_space<vmem>>, vector<1x8x128xf32>
    %2 = vector.shape_cast %1 : vector<1x8x128xf32> to vector<8x128xf32>
    %c1 = arith.constant 1 : index
    %c0_2 = arith.constant 0 : index
    %c0_3 = arith.constant 0 : index
    %3 = vector.load %arg2[%c1, %c0_2, %c0_3] : memref<4x8x128xf32, #tpu.memory_space<vmem>>, vector<1x8x128xf32>
    %4 = vector.shape_cast %3 : vector<1x8x128xf32> to vector<8x128xf32>
    %c2 = arith.constant 2 : index
    %c0_4 = arith.constant 0 : index
    %c0_5 = arith.constant 0 : index
    %5 = vector.load %arg2[%c2, %c0_4, %c0_5] : memref<4x8x128xf32, #tpu.memory_space<vmem>>, vector<1x8x128xf32>
    %6 = vector.shape_cast %5 : vector<1x8x128xf32> to vector<8x128xf32>
    %c3 = arith.constant 3 : index
    %c0_6 = arith.constant 0 : index
    %c0_7 = arith.constant 0 : index
    %7 = vector.load %arg2[%c3, %c0_6, %c0_7] : memref<4x8x128xf32, #tpu.memory_space<vmem>>, vector<1x8x128xf32>
    %8 = vector.shape_cast %7 : vector<1x8x128xf32> to vector<8x128xf32>
    %c0_8 = arith.constant 0 : index
    %c0_9 = arith.constant 0 : index
    %c0_10 = arith.constant 0 : index
    %9 = vector.load %arg5[%c0_8, %c0_9, %c0_10] : memref<2x1x128xf32, #tpu.memory_space<vmem>>, vector<1x1x128xf32>
    %10 = vector.shape_cast %9 : vector<1x1x128xf32> to vector<1x128xf32>
    %c1_11 = arith.constant 1 : index
    %c0_12 = arith.constant 0 : index
    %c0_13 = arith.constant 0 : index
    %11 = vector.load %arg5[%c1_11, %c0_12, %c0_13] : memref<2x1x128xf32, #tpu.memory_space<vmem>>, vector<1x1x128xf32>
    %12 = vector.shape_cast %11 : vector<1x1x128xf32> to vector<1x128xf32>
    %cst = arith.constant 0.000000e+00 : f32
    %13 = vector.broadcast %cst : f32 to vector<8x9xf32>
    %14 = vector.extract_strided_slice %8 {offsets = [0, 0], sizes = [8, 119], strides = [1, 1]} : vector<8x128xf32> to vector<8x119xf32>
    %15 = tpu.concatenate %13, %14 in 1 : vector<8x9xf32>, vector<8x119xf32> -> vector<8x128xf32>
    %16 = vector.broadcast %10 : vector<1x128xf32> to vector<8x128xf32>
    %17 = arith.mulf %15, %16 : vector<8x128xf32>
    %18 = vector.broadcast %12 : vector<1x128xf32> to vector<8x128xf32>
    %19 = arith.mulf %17, %18 : vector<8x128xf32>
    %cst_14 = arith.constant 0.000000e+00 : f32
    %20 = vector.broadcast %cst_14 : f32 to vector<8x8xf32>
    %21 = vector.extract_strided_slice %6 {offsets = [0, 0], sizes = [8, 120], strides = [1, 1]} : vector<8x128xf32> to vector<8x120xf32>
    %22 = tpu.concatenate %20, %21 in 1 : vector<8x8xf32>, vector<8x120xf32> -> vector<8x128xf32>
    %23 = vector.broadcast %10 : vector<1x128xf32> to vector<8x128xf32>
    %24 = arith.mulf %22, %23 : vector<8x128xf32>
    %cst_15 = arith.constant 0.000000e+00 : f32
    %25 = vector.broadcast %cst_15 : f32 to vector<8x8xf32>
    %26 = vector.extract_strided_slice %8 {offsets = [0, 0], sizes = [8, 120], strides = [1, 1]} : vector<8x128xf32> to vector<8x120xf32>
    %27 = tpu.concatenate %25, %26 in 1 : vector<8x8xf32>, vector<8x120xf32> -> vector<8x128xf32>
    %28 = vector.broadcast %10 : vector<1x128xf32> to vector<8x128xf32>
    %29 = arith.mulf %27, %28 : vector<8x128xf32>
    %cst_16 = arith.constant 0.000000e+00 : f32
    %30 = vector.broadcast %cst_16 : f32 to vector<8x1xf32>
    %31 = vector.extract_strided_slice %4 {offsets = [0, 0], sizes = [8, 127], strides = [1, 1]} : vector<8x128xf32> to vector<8x127xf32>
    %32 = tpu.concatenate %30, %31 in 1 : vector<8x1xf32>, vector<8x127xf32> -> vector<8x128xf32>
    %33 = vector.broadcast %12 : vector<1x128xf32> to vector<8x128xf32>
    %34 = arith.mulf %32, %33 : vector<8x128xf32>
    %cst_17 = arith.constant 0.000000e+00 : f32
    %35 = vector.broadcast %cst_17 : f32 to vector<8x1xf32>
    %36 = vector.extract_strided_slice %8 {offsets = [0, 0], sizes = [8, 127], strides = [1, 1]} : vector<8x128xf32> to vector<8x127xf32>
    %37 = tpu.concatenate %35, %36 in 1 : vector<8x1xf32>, vector<8x127xf32> -> vector<8x128xf32>
    %38 = vector.broadcast %12 : vector<1x128xf32> to vector<8x128xf32>
    %39 = arith.mulf %37, %38 : vector<8x128xf32>
    %c0_18 = arith.constant 0 : index
    %40 = arith.index_cast %0 : i32 to index
    %c0_19 = arith.constant 0 : index
    %41 = vector.load %arg3[%c0_18, %40, %c0_19] : memref<9x8x4xf32, #tpu.memory_space<vmem>>, vector<1x8x4xf32>
    %42 = vector.shape_cast %41 : vector<1x8x4xf32> to vector<8x4xf32>
    %cst_20 = arith.constant dense<0.000000e+00> : vector<4x128xf32>
    %43 = tpu.matmul %42, %19, %cst_20 {dimension_numbers = #tpu.dot_dimension_numbers<[0], [0], [1], [1], [0, 1, 1, 1], [], []>, precision = #tpu.contract_precision<fp32>} : vector<8x4xf32>, vector<8x128xf32>, vector<4x128xf32> -> vector<4x128xf32>
    %c1_21 = arith.constant 1 : index
    %44 = arith.index_cast %0 : i32 to index
    %c0_22 = arith.constant 0 : index
    %45 = vector.load %arg3[%c1_21, %44, %c0_22] : memref<9x8x4xf32, #tpu.memory_space<vmem>>, vector<1x8x4xf32>
    %46 = vector.shape_cast %45 : vector<1x8x4xf32> to vector<8x4xf32>
    %cst_23 = arith.constant dense<0.000000e+00> : vector<4x128xf32>
    %47 = tpu.matmul %46, %24, %cst_23 {dimension_numbers = #tpu.dot_dimension_numbers<[0], [0], [1], [1], [0, 1, 1, 1], [], []>, precision = #tpu.contract_precision<fp32>} : vector<8x4xf32>, vector<8x128xf32>, vector<4x128xf32> -> vector<4x128xf32>
    %48 = arith.addf %43, %47 : vector<4x128xf32>
    %c2_24 = arith.constant 2 : index
    %49 = arith.index_cast %0 : i32 to index
    %c0_25 = arith.constant 0 : index
    %50 = vector.load %arg3[%c2_24, %49, %c0_25] : memref<9x8x4xf32, #tpu.memory_space<vmem>>, vector<1x8x4xf32>
    %51 = vector.shape_cast %50 : vector<1x8x4xf32> to vector<8x4xf32>
    %cst_26 = arith.constant dense<0.000000e+00> : vector<4x128xf32>
    %52 = tpu.matmul %51, %29, %cst_26 {dimension_numbers = #tpu.dot_dimension_numbers<[0], [0], [1], [1], [0, 1, 1, 1], [], []>, precision = #tpu.contract_precision<fp32>} : vector<8x4xf32>, vector<8x128xf32>, vector<4x128xf32> -> vector<4x128xf32>
    %53 = arith.addf %48, %52 : vector<4x128xf32>
    %c3_27 = arith.constant 3 : index
    %54 = arith.index_cast %0 : i32 to index
    %c0_28 = arith.constant 0 : index
    %55 = vector.load %arg3[%c3_27, %54, %c0_28] : memref<9x8x4xf32, #tpu.memory_space<vmem>>, vector<1x8x4xf32>
    %56 = vector.shape_cast %55 : vector<1x8x4xf32> to vector<8x4xf32>
    %cst_29 = arith.constant dense<0.000000e+00> : vector<4x128xf32>
    %57 = tpu.matmul %56, %34, %cst_29 {dimension_numbers = #tpu.dot_dimension_numbers<[0], [0], [1], [1], [0, 1, 1, 1], [], []>, precision = #tpu.contract_precision<fp32>} : vector<8x4xf32>, vector<8x128xf32>, vector<4x128xf32> -> vector<4x128xf32>
    %58 = arith.addf %53, %57 : vector<4x128xf32>
    %c4 = arith.constant 4 : index
    %59 = arith.index_cast %0 : i32 to index
    %c0_30 = arith.constant 0 : index
    %60 = vector.load %arg3[%c4, %59, %c0_30] : memref<9x8x4xf32, #tpu.memory_space<vmem>>, vector<1x8x4xf32>
    %61 = vector.shape_cast %60 : vector<1x8x4xf32> to vector<8x4xf32>
    %cst_31 = arith.constant dense<0.000000e+00> : vector<4x128xf32>
    %62 = tpu.matmul %61, %2, %cst_31 {dimension_numbers = #tpu.dot_dimension_numbers<[0], [0], [1], [1], [0, 1, 1, 1], [], []>, precision = #tpu.contract_precision<fp32>} : vector<8x4xf32>, vector<8x128xf32>, vector<4x128xf32> -> vector<4x128xf32>
    %63 = arith.addf %58, %62 : vector<4x128xf32>
    %c5 = arith.constant 5 : index
    %64 = arith.index_cast %0 : i32 to index
    %c0_32 = arith.constant 0 : index
    %65 = vector.load %arg3[%c5, %64, %c0_32] : memref<9x8x4xf32, #tpu.memory_space<vmem>>, vector<1x8x4xf32>
    %66 = vector.shape_cast %65 : vector<1x8x4xf32> to vector<8x4xf32>
    %cst_33 = arith.constant dense<0.000000e+00> : vector<4x128xf32>
    %67 = tpu.matmul %66, %4, %cst_33 {dimension_numbers = #tpu.dot_dimension_numbers<[0], [0], [1], [1], [0, 1, 1, 1], [], []>, precision = #tpu.contract_precision<fp32>} : vector<8x4xf32>, vector<8x128xf32>, vector<4x128xf32> -> vector<4x128xf32>
    %68 = arith.addf %63, %67 : vector<4x128xf32>
    %c6 = arith.constant 6 : index
    %69 = arith.index_cast %0 : i32 to index
    %c0_34 = arith.constant 0 : index
    %70 = vector.load %arg3[%c6, %69, %c0_34] : memref<9x8x4xf32, #tpu.memory_space<vmem>>, vector<1x8x4xf32>
    %71 = vector.shape_cast %70 : vector<1x8x4xf32> to vector<8x4xf32>
    %cst_35 = arith.constant dense<0.000000e+00> : vector<4x128xf32>
    %72 = tpu.matmul %71, %39, %cst_35 {dimension_numbers = #tpu.dot_dimension_numbers<[0], [0], [1], [1], [0, 1, 1, 1], [], []>, precision = #tpu.contract_precision<fp32>} : vector<8x4xf32>, vector<8x128xf32>, vector<4x128xf32> -> vector<4x128xf32>
    %73 = arith.addf %68, %72 : vector<4x128xf32>
    %c7 = arith.constant 7 : index
    %74 = arith.index_cast %0 : i32 to index
    %c0_36 = arith.constant 0 : index
    %75 = vector.load %arg3[%c7, %74, %c0_36] : memref<9x8x4xf32, #tpu.memory_space<vmem>>, vector<1x8x4xf32>
    %76 = vector.shape_cast %75 : vector<1x8x4xf32> to vector<8x4xf32>
    %cst_37 = arith.constant dense<0.000000e+00> : vector<4x128xf32>
    %77 = tpu.matmul %76, %6, %cst_37 {dimension_numbers = #tpu.dot_dimension_numbers<[0], [0], [1], [1], [0, 1, 1, 1], [], []>, precision = #tpu.contract_precision<fp32>} : vector<8x4xf32>, vector<8x128xf32>, vector<4x128xf32> -> vector<4x128xf32>
    %78 = arith.addf %73, %77 : vector<4x128xf32>
    %c8 = arith.constant 8 : index
    %79 = arith.index_cast %0 : i32 to index
    %c0_38 = arith.constant 0 : index
    %80 = vector.load %arg3[%c8, %79, %c0_38] : memref<9x8x4xf32, #tpu.memory_space<vmem>>, vector<1x8x4xf32>
    %81 = vector.shape_cast %80 : vector<1x8x4xf32> to vector<8x4xf32>
    %cst_39 = arith.constant dense<0.000000e+00> : vector<4x128xf32>
    %82 = tpu.matmul %81, %8, %cst_39 {dimension_numbers = #tpu.dot_dimension_numbers<[0], [0], [1], [1], [0, 1, 1, 1], [], []>, precision = #tpu.contract_precision<fp32>} : vector<8x4xf32>, vector<8x128xf32>, vector<4x128xf32> -> vector<4x128xf32>
    %83 = arith.addf %78, %82 : vector<4x128xf32>
    %c0_i32 = arith.constant 0 : i32
    %84 = arith.cmpi eq, %arg1, %c0_i32 : i32
    %85 = arith.extui %84 : i1 to i32
    %c0_i32_40 = arith.constant 0 : i32
    %86 = arith.cmpi ne, %85, %c0_i32_40 : i32
    scf.if %86 {
      %cst_59 = arith.constant 0.000000e+00 : f32
      %120 = vector.broadcast %cst_59 : f32 to vector<4x128xf32>
      %c0_60 = arith.constant 0 : index
      %c0_61 = arith.constant 0 : index
      %121 = vector.load %arg6[%c0_60, %c0_61] : memref<16x128xf32, #tpu.memory_space<vmem>>, vector<4x128xf32>
      tpu.vector_store %arg6[%c0_60, %c0_61], %120 {strides = array<i32>} : memref<16x128xf32, #tpu.memory_space<vmem>>, vector<4x128xf32>,
    } else {
    }
    %c0_41 = arith.constant 0 : index
    %c0_42 = arith.constant 0 : index
    %87 = vector.load %arg6[%c0_41, %c0_42] : memref<16x128xf32, #tpu.memory_space<vmem>>, vector<4x128xf32>
    %88 = arith.addf %87, %83 : vector<4x128xf32>
    %c0_43 = arith.constant 0 : index
    %c0_44 = arith.constant 0 : index
    %89 = vector.load %arg6[%c0_43, %c0_44] : memref<16x128xf32, #tpu.memory_space<vmem>>, vector<4x128xf32>
    tpu.vector_store %arg6[%c0_43, %c0_44], %88 {strides = array<i32>} : memref<16x128xf32, #tpu.memory_space<vmem>>, vector<4x128xf32>,
    %90 = arith.maximumf %2, %4 : vector<8x128xf32>
    %91 = arith.maximumf %6, %8 : vector<8x128xf32>
    %92 = arith.maximumf %90, %91 : vector<8x128xf32>
    %c8_i32_45 = arith.constant 8 : i32
    %93 = arith.addi %c8_i32_45, %0 : i32
    %c0_46 = arith.constant 0 : index
    %94 = arith.index_cast %93 : i32 to index
    %c0_47 = arith.constant 0 : index
    %95 = vector.load %arg4[%c0_46, %94, %c0_47] : memref<3x16x1xf32, #tpu.memory_space<vmem>>, vector<1x8x1xf32>
    %96 = vector.shape_cast %95 : vector<1x8x1xf32> to vector<8x1xf32>
    %c8_i32_48 = arith.constant 8 : i32
    %97 = arith.addi %c8_i32_48, %0 : i32
    %c1_49 = arith.constant 1 : index
    %98 = arith.index_cast %97 : i32 to index
    %c0_50 = arith.constant 0 : index
    %99 = vector.load %arg4[%c1_49, %98, %c0_50] : memref<3x16x1xf32, #tpu.memory_space<vmem>>, vector<1x8x1xf32>
    %100 = vector.shape_cast %99 : vector<1x8x1xf32> to vector<8x1xf32>
    %c8_i32_51 = arith.constant 8 : i32
    %101 = arith.addi %c8_i32_51, %0 : i32
    %c2_52 = arith.constant 2 : index
    %102 = arith.index_cast %101 : i32 to index
    %c0_53 = arith.constant 0 : index
    %103 = vector.load %arg4[%c2_52, %102, %c0_53] : memref<3x16x1xf32, #tpu.memory_space<vmem>>, vector<1x8x1xf32>
    %104 = vector.shape_cast %103 : vector<1x8x1xf32> to vector<8x1xf32>
    %105 = vector.broadcast %96 : vector<8x1xf32> to vector<8x128xf32>
    %106 = arith.mulf %92, %105 : vector<8x128xf32>
    %107 = vector.broadcast %100 : vector<8x1xf32> to vector<8x128xf32>
    %108 = arith.addf %106, %107 : vector<8x128xf32>
    %cst_54 = arith.constant 0.000000e+00 : f32
    %109 = vector.broadcast %cst_54 : f32 to vector<8x128xf32>
    %110 = arith.cmpf ogt, %108, %109 : vector<8x128xf32>
    %111 = vector.broadcast %104 : vector<8x1xf32> to vector<8x128xf32>
    %112 = arith.mulf %111, %108 : vector<8x128xf32>
    %113 = arith.select %110, %108, %112 : vector<8x128xi1>, vector<8x128xf32>
    %c8_i32_55 = arith.constant 8 : i32
    %114 = arith.addi %c8_i32_55, %0 : i32
    %115 = arith.index_cast %114 : i32 to index
    %c0_56 = arith.constant 0 : index
    %116 = vector.load %arg6[%115, %c0_56] : memref<16x128xf32, #tpu.memory_space<vmem>>, vector<8x128xf32>
    tpu.vector_store %arg6[%115, %c0_56], %113 {strides = array<i32>} : memref<16x128xf32, #tpu.memory_space<vmem>>, vector<8x128xf32>,
    %c0_i32_57 = arith.constant 0 : i32
    %117 = arith.cmpi eq, %arg1, %c0_i32_57 : i32
    %118 = arith.extui %117 : i1 to i32
    %c0_i32_58 = arith.constant 0 : i32
    %119 = arith.cmpi ne, %118, %c0_i32_58 : i32
    scf.if %119 {
      %c0_59 = arith.constant 0 : index
      %c0_60 = arith.constant 0 : index
      %c0_61 = arith.constant 0 : index
      %120 = vector.load %arg4[%c0_59, %c0_60, %c0_61] : memref<3x16x1xf32, #tpu.memory_space<vmem>>, vector<1x4x1xf32>
      %121 = vector.shape_cast %120 : vector<1x4x1xf32> to vector<4x1xf32>
      %c1_62 = arith.constant 1 : index
      %c0_63 = arith.constant 0 : index
      %c0_64 = arith.constant 0 : index
      %122 = vector.load %arg4[%c1_62, %c0_63, %c0_64] : memref<3x16x1xf32, #tpu.memory_space<vmem>>, vector<1x4x1xf32>
      %123 = vector.shape_cast %122 : vector<1x4x1xf32> to vector<4x1xf32>
      %c2_65 = arith.constant 2 : index
      %c0_66 = arith.constant 0 : index
      %c0_67 = arith.constant 0 : index
      %124 = vector.load %arg4[%c2_65, %c0_66, %c0_67] : memref<3x16x1xf32, #tpu.memory_space<vmem>>, vector<1x4x1xf32>
      %125 = vector.shape_cast %124 : vector<1x4x1xf32> to vector<4x1xf32>
      %c0_68 = arith.constant 0 : index
      %c0_69 = arith.constant 0 : index
      %126 = vector.load %arg6[%c0_68, %c0_69] : memref<16x128xf32, #tpu.memory_space<vmem>>, vector<4x128xf32>
      %127 = vector.broadcast %121 : vector<4x1xf32> to vector<4x128xf32>
      %128 = arith.mulf %126, %127 : vector<4x128xf32>
      %129 = vector.broadcast %123 : vector<4x1xf32> to vector<4x128xf32>
      %130 = arith.addf %128, %129 : vector<4x128xf32>
      %cst_70 = arith.constant 0.000000e+00 : f32
      %131 = vector.broadcast %cst_70 : f32 to vector<4x128xf32>
      %132 = arith.cmpf ogt, %130, %131 : vector<4x128xf32>
      %133 = vector.broadcast %125 : vector<4x1xf32> to vector<4x128xf32>
      %134 = arith.mulf %133, %130 : vector<4x128xf32>
      %135 = arith.select %132, %130, %134 : vector<4x128xi1>, vector<4x128xf32>
      %c0_71 = arith.constant 0 : index
      %c0_72 = arith.constant 0 : index
      %136 = vector.load %arg6[%c0_71, %c0_72] : memref<16x128xf32, #tpu.memory_space<vmem>>, vector<4x128xf32>
      tpu.vector_store %arg6[%c0_71, %c0_72], %135 {strides = array<i32>} : memref<16x128xf32, #tpu.memory_space<vmem>>, vector<4x128xf32>,
    } else {
    }
    return
  }
  func.func @transform_0(%arg0: i32, %arg1: i32) -> (i32, i32, i32) {
    %c0_i32 = arith.constant 0 : i32
    %c0_i32_0 = arith.constant 0 : i32
    return %c0_i32, %arg1, %arg0 : i32, i32, i32
  }
  func.func @transform_1(%arg0: i32, %arg1: i32) -> (i32, i32, i32) {
    %c0_i32 = arith.constant 0 : i32
    %c0_i32_0 = arith.constant 0 : i32
    %c0_i32_1 = arith.constant 0 : i32
    %c0_i32_2 = arith.constant 0 : i32
    return %c0_i32, %c0_i32_0, %c0_i32_1 : i32, i32, i32
  }
  func.func @transform_2(%arg0: i32, %arg1: i32) -> (i32, i32, i32) {
    %c0_i32 = arith.constant 0 : i32
    %c0_i32_0 = arith.constant 0 : i32
    %c0_i32_1 = arith.constant 0 : i32
    %c0_i32_2 = arith.constant 0 : i32
    return %c0_i32, %c0_i32_0, %c0_i32_1 : i32, i32, i32
  }
  func.func @transform_3(%arg0: i32, %arg1: i32) -> (i32, i32, i32) {
    %c0_i32 = arith.constant 0 : i32
    %c0_i32_0 = arith.constant 0 : i32
    %c0_i32_1 = arith.constant 0 : i32
    %c0_i32_2 = arith.constant 0 : i32
    return %c0_i32, %c0_i32_0, %c0_i32_1 : i32, i32, i32
  }
  func.func @transform_4(%arg0: i32, %arg1: i32) -> (i32, i32) {
    %c0_i32 = arith.constant 0 : i32
    %c0_i32_0 = arith.constant 0 : i32
    return %c0_i32, %arg0 : i32, i32
  }
}

</mosaic_0001>

<llo_original>
// kernel: tpu_custom_call.1
$region0: #{tpu_custom_call.1}
  #allocation0 [shape = 'u32[]', space=smem, size = 0x4, offset = 0x4, fixed_abs, tag = 'smem constant byte address 0x4 - core index']
  #allocation1 [shape = 'u32[144,128]{1,0:T(1,128)}', space=vmem, size = 0x12000, scoped, tag = 'internal scratch']
  %s0 = inlined_call_operand.vmem [shape: f32[4,8,128], index: 0, kind: input, shape index: {}]
  %s1 = inlined_call_operand.vmem [shape: f32[9,8,4], index: 1, kind: input, shape index: {}]
  %s2 = inlined_call_operand.vmem [shape: f32[3,16,1], index: 2, kind: input, shape index: {}]
  %s3 = inlined_call_operand.vmem [shape: f32[2,1,128], index: 3, kind: input, shape index: {}]
  %s4 = inlined_call_operand.hbm [shape: f32[16,128], index: 4, kind: output, shape index: {}]
  %s5 = sld [smem:[#allocation0]]
  $region34: #{tpu_custom_call.1} parent=0
    _
  %s7 = ssub.s32 1, %s5
  %s8 = scalar_select 0, %s7, %s5
  $region1: #{tpu_custom_call.1} parent=0
    #allocation2 [shape = 'u8[8192]{0}', space=vmem, size = 0x2000, scoped, tag = 'output window, operand 0, single buffered']
    #allocation3 [shape = 's32[1]{0}', space=sflag, size = 0x4, scoped, tag = 'scoped memory for tpu_custom_call.1']
    %9 = vsyncpa [#allocation3], 0
    // Predicated region
    $region2: #{tpu_custom_call.1} parent=1 // pred_check
      _
    $region3: #{tpu_custom_call.1} parent=1 // pred_check_branch
      %11 = sbr.rel (0) target = $region5
    $region4: #{tpu_custom_call.1} parent=1 // pred_region
      _
    $region5: #{tpu_custom_call.1} parent=1 // pred_fallthru
      _
    // Predicated region
    $region6: #{tpu_custom_call.1} parent=1 // pred_check
      _
    $region7: #{tpu_custom_call.1} parent=1 // pred_check_branch
      %13 = sbr.rel (0) target = $region9
    $region8: #{tpu_custom_call.1} parent=1 // pred_region
      _
    $region9: #{tpu_custom_call.1} parent=1 // pred_fallthru
      _
    // Predicated region
    $region10: #{tpu_custom_call.1} parent=1 // pred_check
      _
    $region11: #{tpu_custom_call.1} parent=1 // pred_check_branch
      %15 = sbr.rel (0) target = $region13
    $region12: #{tpu_custom_call.1} parent=1 // pred_region
      _
    $region13: #{tpu_custom_call.1} parent=1 // pred_fallthru
      _
    // Predicated region
    $region14: #{tpu_custom_call.1} parent=1 // pred_check
      _
    $region15: #{tpu_custom_call.1} parent=1 // pred_check_branch
      %17 = sbr.rel (0) target = $region17
    $region16: #{tpu_custom_call.1} parent=1 // pred_region
      _
    $region17: #{tpu_custom_call.1} parent=1 // pred_fallthru
      _
    %s18 = smul.u32 0, 8
    %v19 = vld [vmem:[%s0] sm:$0xff]
    %s20 = scalar_lea.vmem %s0, 8
    %v21 = vld [vmem:[%s20] sm:$0xff]
    %s22 = scalar_lea.vmem %s0, 16
    %v23 = vld [vmem:[%s22] sm:$0xff]
    %s24 = scalar_lea.vmem %s0, 24
    %v25 = vld [vmem:[%s24] sm:$0xff]
    %v26 = vld [vmem:[%s3] sm:$0x1]
    %s27 = scalar_lea.vmem %s3, 1
    %v28 = vld [vmem:[%s27] sm:$0x1]
    %30 = vrot.lane.b32.xlu0 %v25, 9
    %v31 = vpop.permute.xlu0 %30
    %vm33 = vcmask 72704
    %v34 = vsel %vm33, 0.0, %v31
    %v36 = vlaneseq
    %v37 = vshrl.u32 %v36, 7
    %v38 = vsub.s32 0, %v37
    %v39 = vrot.slane %v26, %v38
    %v41 = vmul.f32 %v34, %v39
    %v43 = vlaneseq
    %v44 = vshrl.u32 %v43, 7
    %v45 = vsub.s32 0, %v44
    %v46 = vrot.slane %v28, %v45
    %v48 = vmul.f32 %v41, %v46
    %50 = vrot.lane.b32.xlu0 %v23, 8
    %v51 = vpop.permute.xlu0 %50
    %vm53 = vcmask 64512
    %v54 = vsel %vm53, 0.0, %v51
    %v55 = vmul.f32 %v54, %v39
    %56 = vrot.lane.b32.xlu0 %v25, 8
    %v57 = vpop.permute.xlu0 %56
    %v59 = vsel %vm53, 0.0, %v57
    %v60 = vmul.f32 %v59, %v39
    %62 = vrot.lane.b32.xlu0 %v21, 1
    %v63 = vpop.permute.xlu0 %62
    %vm65 = vcmask 7168
    %v66 = vsel %vm65, 0.0, %v63
    %v67 = vmul.f32 %v66, %v46
    %68 = vrot.lane.b32.xlu0 %v25, 1
    %v69 = vpop.permute.xlu0 %68
    %v71 = vsel %vm65, 0.0, %v69
    %v72 = vmul.f32 %v71, %v46
    %s73 = scalar_lea.vmem %s1, %s18
    %v74 = vld [vmem:[%s73] sm:$0xff]
    %s75 = sadd.s32 %s18, 8
    %s76 = scalar_lea.vmem %s1, %s75
    %v77 = vld [vmem:[%s76] sm:$0xff]
    %78 = vxpose.xlu0.b32.start [1/16] %v77, 128
    %79 = vxpose.xlu0.b32.cont [2/16] 0.0, 128
    %80 = vxpose.xlu0.b32.cont [3/16] 0.0, 128
    %81 = vxpose.xlu0.b32.cont [4/16] 0.0, 128
    %82 = vxpose.xlu0.b32.cont [5/16] 0.0, 128
    %83 = vxpose.xlu0.b32.cont [6/16] 0.0, 128
    %84 = vxpose.xlu0.b32.cont [7/16] 0.0, 128
    %85 = vxpose.xlu0.b32.cont [8/16] 0.0, 128
    %86 = vxpose.xlu0.b32.cont [9/16] 0.0, 128
    %87 = vxpose.xlu0.b32.cont [10/16] 0.0, 128
    %88 = vxpose.xlu0.b32.cont [11/16] 0.0, 128
    %89 = vxpose.xlu0.b32.cont [12/16] 0.0, 128
    %90 = vxpose.xlu0.b32.cont [13/16] 0.0, 128
    %91 = vxpose.xlu0.b32.cont [14/16] 0.0, 128
    %92 = vxpose.xlu0.b32.cont [15/16] 0.0, 128
    %93 = vxpose.xlu0.b32.end [16/16] 0.0, 128
    %v94 = vpop.trf.xlu0
    %v95 = vpop.trf.xlu0
    %v96 = vpop.trf.xlu0
    %v97 = vpop.trf.xlu0
    %v98 = vpop.trf.xlu0
    %v99 = vpop.trf.xlu0
    %v100 = vpop.trf.xlu0
    %v101 = vpop.trf.xlu0
    %v102 = vpop.trf.xlu0
    %v103 = vpop.trf.xlu0
    %v104 = vpop.trf.xlu0
    %v105 = vpop.trf.xlu0
    %v106 = vpop.trf.xlu0
    %v107 = vpop.trf.xlu0
    %v108 = vpop.trf.xlu0
    %v109 = vpop.trf.xlu0
    %v111 = vsel %vm53, %v94, 0
    %113 = vmatprep.subr.mxu0 0.0
    %114 = vmatpush1.msra.mxu0 0.0
    %115 = vmatprep.subr.mxu0 0.0
    %116 = vmatpush1.msra.mxu0 0.0
    %117 = vmatprep.subr.mxu0 0.0
    %118 = vmatpush1.msra.mxu0 0.0
    %119 = vmatprep.subr.mxu0 0.0
    %120 = vmatpush1.msra.mxu0 0.0
    %121 = vmatprep.subr.mxu0 0.0
    %122 = vmatpush1.msra.mxu0 0.0
    %123 = vmatprep.subr.mxu0 0.0
    %124 = vmatpush1.msra.mxu0 0.0
    %125 = vmatprep.subr.mxu0 0.0
    %126 = vmatpush1.msra.mxu0 0.0
    %127 = vmatprep.subr.mxu0 0.0
    %128 = vmatpush1.msra.mxu0 0.0
    %129 = vmatprep.subr.mxu0 0.0
    %130 = vmatpush1.msra.mxu0 0.0
    %131 = vmatprep.subr.mxu0 0.0
    %132 = vmatpush1.msra.mxu0 0.0
    %133 = vmatprep.subr.mxu0 0.0
    %134 = vmatpush1.msra.mxu0 0.0
    %135 = vmatprep.subr.mxu0 0.0
    %136 = vmatpush1.msra.mxu0 0.0
    %137 = vmatprep.subr.mxu0 0.0
    %138 = vmatpush1.msra.mxu0 0.0
    %139 = vmatprep.subr.mxu0 0.0
    %140 = vmatpush1.msra.mxu0 0.0
    %141 = vmatprep.subr.mxu0 0.0
    %142 = vmatpush1.msra.mxu0 0.0
    %143 = vmatprep.subr.mxu0 0.0
    %v144 = vand.u32 %v55, 4294901760
    %145 = vmatpush1.msra.mxu0 %v144
    %146 = vmatprep.subr.mxu0 0.0
    %147 = vmatpush2.msra.mxu0 0.0
    %148 = vmatprep.subr.mxu0 0.0
    %149 = vmatpush2.msra.mxu0 0.0
    %150 = vmatprep.subr.mxu0 0.0
    %151 = vmatpush2.msra.mxu0 0.0
    %152 = vmatprep.subr.mxu0 0.0
    %153 = vmatpush2.msra.mxu0 0.0
    %154 = vmatprep.subr.mxu0 0.0
    %155 = vmatpush2.msra.mxu0 0.0
    %156 = vmatprep.subr.mxu0 0.0
    %157 = vmatpush2.msra.mxu0 0.0
    %158 = vmatprep.subr.mxu0 0.0
    %159 = vmatpush2.msra.mxu0 0.0
    %160 = vmatprep.subr.mxu0 0.0
    %161 = vmatpush2.msra.mxu0 0.0
    %162 = vmatprep.subr.mxu0 0.0
    %163 = vmatpush2.msra.mxu0 0.0
    %164 = vmatprep.subr.mxu0 0.0
    %165 = vmatpush2.msra.mxu0 0.0
    %166 = vmatprep.subr.mxu0 0.0
    %167 = vmatpush2.msra.mxu0 0.0
    %168 = vmatprep.subr.mxu0 0.0
    %169 = vmatpush2.msra.mxu0 0.0
    %170 = vmatprep.subr.mxu0 0.0
    %171 = vmatpush2.msra.mxu0 0.0
    %172 = vmatprep.subr.mxu0 0.0
    %173 = vmatpush2.msra.mxu0 0.0
    %174 = vmatprep.subr.mxu0 0.0
    %175 = vmatpush2.msra.mxu0 0.0
    %176 = vmatprep.subr.mxu0 0.0
    %177 = vmatpush2.msra.mxu0 0.0
    %178 = vmatprep.mubr.f32.mxu0 0.0
    %v179 = vand.u32 %v111, 4294901760
    %v180 = vsub.f32 %v111, %v179
    %v181 = vand.u32 %v180, 4294901760
    %v182 = vsub.f32 %v180, %v181
    %v183 = vand.u32 %v182, 4294901760
    %184 = vmatmul.mubr.f32.gmra.mxu0 %v183
    %v185 = vpop.f32.mrf.mxu0
    %v186 = vadd.f32 0.0, %v185
    %v187 = vpop.f32.mrf.mxu0
    %188 = vdwg.mxu0
    %189 = vmatprep.subr.mxu0 0.0
    %190 = vmatpush1.msra.mxu0 0.0
    %191 = vmatprep.subr.mxu0 0.0
    %192 = vmatpush1.msra.mxu0 0.0
    %193 = vmatprep.subr.mxu0 0.0
    %194 = vmatpush1.msra.mxu0 0.0
    %195 = vmatprep.subr.mxu0 0.0
    %196 = vmatpush1.msra.mxu0 0.0
    %197 = vmatprep.subr.mxu0 0.0
    %198 = vmatpush1.msra.mxu0 0.0
    %199 = vmatprep.subr.mxu0 0.0
    %200 = vmatpush1.msra.mxu0 0.0
    %201 = vmatprep.subr.mxu0 0.0
    %202 = vmatpush1.msra.mxu0 0.0
    %203 = vmatprep.subr.mxu0 0.0
    %204 = vmatpush1.msra.mxu0 0.0
    %205 = vmatprep.subr.mxu0 0.0
    %206 = vmatpush1.msra.mxu0 0.0
    %207 = vmatprep.subr.mxu0 0.0
    %208 = vmatpush1.msra.mxu0 0.0
    %209 = vmatprep.subr.mxu0 0.0
    %210 = vmatpush1.msra.mxu0 0.0
    %211 = vmatprep.subr.mxu0 0.0
    %212 = vmatpush1.msra.mxu0 0.0
    %213 = vmatprep.subr.mxu0 0.0
    %214 = vmatpush1.msra.mxu0 0.0
    %215 = vmatprep.subr.mxu0 0.0
    %216 = vmatpush1.msra.mxu0 0.0
    %217 = vmatprep.subr.mxu0 0.0
    %218 = vmatpush1.msra.mxu0 0.0
    %219 = vmatprep.subr.mxu0 0.0
    %v220 = vand.u32 %v55, 4294901760
    %v221 = vsub.f32 %v55, %v220
    %v222 = vand.u32 %v221, 4294901760
    %v223 = vsub.f32 %v221, %v222
    %v224 = vand.u32 %v223, 4294901760
    %225 = vmatpush1.msra.mxu0 %v224
    %226 = vmatprep.subr.mxu0 0.0
    %227 = vmatpush2.msra.mxu0 0.0
    %228 = vmatprep.subr.mxu0 0.0
    %229 = vmatpush2.msra.mxu0 0.0
    %230 = vmatprep.subr.mxu0 0.0
    %231 = vmatpush2.msra.mxu0 0.0
    %232 = vmatprep.subr.mxu0 0.0
    %233 = vmatpush2.msra.mxu0 0.0
    %234 = vmatprep.subr.mxu0 0.0
    %235 = vmatpush2.msra.mxu0 0.0
    %236 = vmatprep.subr.mxu0 0.0
    %237 = vmatpush2.msra.mxu0 0.0
    %238 = vmatprep.subr.mxu0 0.0
    %239 = vmatpush2.msra.mxu0 0.0
    %240 = vmatprep.subr.mxu0 0.0
    %241 = vmatpush2.msra.mxu0 0.0
    %242 = vmatprep.subr.mxu0 0.0
    %243 = vmatpush2.msra.mxu0 0.0
    %244 = vmatprep.subr.mxu0 0.0
    %245 = vmatpush2.msra.mxu0 0.0
    %246 = vmatprep.subr.mxu0 0.0
    %247 = vmatpush2.msra.mxu0 0.0
    %248 = vmatprep.subr.mxu0 0.0
    %249 = vmatpush2.msra.mxu0 0.0
    %250 = vmatprep.subr.mxu0 0.0
    %251 = vmatpush2.msra.mxu0 0.0
    %252 = vmatprep.subr.mxu0 0.0
    %253 = vmatpush2.msra.mxu0 0.0
    %254 = vmatprep.subr.mxu0 0.0
    %255 = vmatpush2.msra.mxu0 0.0
    %256 = vmatprep.subr.mxu0 0.0
    %257 = vmatpush2.msra.mxu0 0.0
    %258 = vmatprep.mubr.f32.mxu0 0.0
    %v259 = vand.u32 %v111, 4294901760
    %260 = vmatmul.mubr.f32.gmra.mxu0 %v259
    %v261 = vpop.f32.mrf.mxu0
    %v262 = vadd.f32 %v186, %v261
    %v263 = vpop.f32.mrf.mxu0
    %264 = vdwg.mxu0
    %265 = vmatprep.subr.mxu0 0.0
    %266 = vmatpush1.msra.mxu0 0.0
    %267 = vmatprep.subr.mxu0 0.0
    %268 = vmatpush1.msra.mxu0 0.0
    %269 = vmatprep.subr.mxu0 0.0
    %270 = vmatpush1.msra.mxu0 0.0
    %271 = vmatprep.subr.mxu0 0.0
    %272 = vmatpush1.msra.mxu0 0.0
    %273 = vmatprep.subr.mxu0 0.0
    %274 = vmatpush1.msra.mxu0 0.0
    %275 = vmatprep.subr.mxu0 0.0
    %276 = vmatpush1.msra.mxu0 0.0
    %277 = vmatprep.subr.mxu0 0.0
    %278 = vmatpush1.msra.mxu0 0.0
    %279 = vmatprep.subr.mxu0 0.0
    %280 = vmatpush1.msra.mxu0 0.0
    %281 = vmatprep.subr.mxu0 0.0
    %282 = vmatpush1.msra.mxu0 0.0
    %283 = vmatprep.subr.mxu0 0.0
    %284 = vmatpush1.msra.mxu0 0.0
    %285 = vmatprep.subr.mxu0 0.0
    %286 = vmatpush1.msra.mxu0 0.0
    %287 = vmatprep.subr.mxu0 0.0
    %288 = vmatpush1.msra.mxu0 0.0
    %289 = vmatprep.subr.mxu0 0.0
    %290 = vmatpush1.msra.mxu0 0.0
    %291 = vmatprep.subr.mxu0 0.0
    %292 = vmatpush1.msra.mxu0 0.0
    %293 = vmatprep.subr.mxu0 0.0
    %294 = vmatpush1.msra.mxu0 0.0
    %295 = vmatprep.subr.mxu0 0.0
    %v296 = vand.u32 %v55, 4294901760
    %v297 = vsub.f32 %v55, %v296
    %298 = vmatpush1.msra.mxu0 %v297
    %299 = vmatprep.subr.mxu0 0.0
    %300 = vmatpush2.msra.mxu0 0.0
    %301 = vmatprep.subr.mxu0 0.0
    %302 = vmatpush2.msra.mxu0 0.0
    %303 = vmatprep.subr.mxu0 0.0
    %304 = vmatpush2.msra.mxu0 0.0
    %305 = vmatprep.subr.mxu0 0.0
    %306 = vmatpush2.msra.mxu0 0.0
    %307 = vmatprep.subr.mxu0 0.0
    %308 = vmatpush2.msra.mxu0 0.0
    %309 = vmatprep.subr.mxu0 0.0
    %310 = vmatpush2.msra.mxu0 0.0
    %311 = vmatprep.subr.mxu0 0.0
    %312 = vmatpush2.msra.mxu0 0.0
    %313 = vmatprep.subr.mxu0 0.0
    %314 = vmatpush2.msra.mxu0 0.0
    %315 = vmatprep.subr.mxu0 0.0
    %316 = vmatpush2.msra.mxu0 0.0
    %317 = vmatprep.subr.mxu0 0.0
    %318 = vmatpush2.msra.mxu0 0.0
    %319 = vmatprep.subr.mxu0 0.0
    %320 = vmatpush2.msra.mxu0 0.0
    %321 = vmatprep.subr.mxu0 0.0
    %322 = vmatpush2.msra.mxu0 0.0
    %323 = vmatprep.subr.mxu0 0.0
    %324 = vmatpush2.msra.mxu0 0.0
    %325 = vmatprep.subr.mxu0 0.0
    %326 = vmatpush2.msra.mxu0 0.0
    %327 = vmatprep.subr.mxu0 0.0
    %328 = vmatpush2.msra.mxu0 0.0
    %329 = vmatprep.subr.mxu0 0.0
    %330 = vmatpush2.msra.mxu0 0.0
    %331 = vmatprep.mubr.f32.mxu0 0.0
    %v332 = vand.u32 %v111, 4294901760
    %v333 = vsub.f32 %v111, %v332
    %334 = vmatmul.mubr.f32.gmra.mxu0 %v333
    %v335 = vpop.f32.mrf.mxu0
    %v336 = vadd.f32 %v262, %v335
    %v337 = vpop.f32.mrf.mxu0
    %338 = vdwg.mxu0
    %339 = vmatprep.subr.mxu0 0.0
    %340 = vmatpush1.msra.mxu0 0.0
    %341 = vmatprep.subr.mxu0 0.0
    %342 = vmatpush1.msra.mxu0 0.0
    %343 = vmatprep.subr.mxu0 0.0
    %344 = vmatpush1.msra.mxu0 0.0
    %345 = vmatprep.subr.mxu0 0.0
    %346 = vmatpush1.msra.mxu0 0.0
    %347 = vmatprep.subr.mxu0 0.0
    %348 = vmatpush1.msra.mxu0 0.0
    %349 = vmatprep.subr.mxu0 0.0
    %350 = vmatpush1.msra.mxu0 0.0
    %351 = vmatprep.subr.mxu0 0.0
    %352 = vmatpush1.msra.mxu0 0.0
    %353 = vmatprep.subr.mxu0 0.0
    %354 = vmatpush1.msra.mxu0 0.0
    %355 = vmatprep.subr.mxu0 0.0
    %356 = vmatpush1.msra.mxu0 0.0
    %357 = vmatprep.subr.mxu0 0.0
    %358 = vmatpush1.msra.mxu0 0.0
    %359 = vmatprep.subr.mxu0 0.0
    %360 = vmatpush1.msra.mxu0 0.0
    %361 = vmatprep.subr.mxu0 0.0
    %362 = vmatpush1.msra.mxu0 0.0
    %363 = vmatprep.subr.mxu0 0.0
    %364 = vmatpush1.msra.mxu0 0.0
    %365 = vmatprep.subr.mxu0 0.0
    %366 = vmatpush1.msra.mxu0 0.0
    %367 = vmatprep.subr.mxu0 0.0
    %368 = vmatpush1.msra.mxu0 0.0
    %369 = vmatprep.subr.mxu0 0.0
    %v370 = vand.u32 %v55, 4294901760
    %371 = vmatpush1.msra.mxu0 %v370
    %372 = vmatprep.subr.mxu0 0.0
    %373 = vmatpush2.msra.mxu0 0.0
    %374 = vmatprep.subr.mxu0 0.0
    %375 = vmatpush2.msra.mxu0 0.0
    %376 = vmatprep.subr.mxu0 0.0
    %377 = vmatpush2.msra.mxu0 0.0
    %378 = vmatprep.subr.mxu0 0.0
    %379 = vmatpush2.msra.mxu0 0.0
    %380 = vmatprep.subr.mxu0 0.0
    %381 = vmatpush2.msra.mxu0 0.0
    %382 = vmatprep.subr.mxu0 0.0
    %383 = vmatpush2.msra.mxu0 0.0
    %384 = vmatprep.subr.mxu0 0.0
    %385 = vmatpush2.msra.mxu0 0.0
    %386 = vmatprep.subr.mxu0 0.0
    %387 = vmatpush2.msra.mxu0 0.0
    %388 = vmatprep.subr.mxu0 0.0
    %389 = vmatpush2.msra.mxu0 0.0
    %390 = vmatprep.subr.mxu0 0.0
    %391 = vmatpush2.msra.mxu0 0.0
    %392 = vmatprep.subr.mxu0 0.0
    %393 = vmatpush2.msra.mxu0 0.0
    %394 = vmatprep.subr.mxu0 0.0
    %395 = vmatpush2.msra.mxu0 0.0
    %396 = vmatprep.subr.mxu0 0.0
    %397 = vmatpush2.msra.mxu0 0.0
    %398 = vmatprep.subr.mxu0 0.0
    %399 = vmatpush2.msra.mxu0 0.0
    %400 = vmatprep.subr.mxu0 0.0
    %401 = vmatpush2.msra.mxu0 0.0
    %402 = vmatprep.subr.mxu0 0.0
    %403 = vmatpush2.msra.mxu0 0.0
    %404 = vmatprep.mubr.f32.mxu0 0.0
    %v405 = vand.u32 %v111, 4294901760
    %v406 = vsub.f32 %v111, %v405
    %v407 = vand.u32 %v406, 4294901760
    %408 = vmatmul.mubr.f32.gmra.mxu0 %v407
    %v409 = vpop.f32.mrf.mxu0
    %v410 = vadd.f32 %v336, %v409
    %v411 = vpop.f32.mrf.mxu0
    %412 = vdwg.mxu0
    %413 = vmatprep.subr.mxu0 0.0
    %414 = vmatpush1.msra.mxu0 0.0
    %415 = vmatprep.subr.mxu0 0.0
    %416 = vmatpush1.msra.mxu0 0.0
    %417 = vmatprep.subr.mxu0 0.0
    %418 = vmatpush1.msra.mxu0 0.0
    %419 = vmatprep.subr.mxu0 0.0
    %420 = vmatpush1.msra.mxu0 0.0
    %421 = vmatprep.subr.mxu0 0.0
    %422 = vmatpush1.msra.mxu0 0.0
    %423 = vmatprep.subr.mxu0 0.0
    %424 = vmatpush1.msra.mxu0 0.0
    %425 = vmatprep.subr.mxu0 0.0
    %426 = vmatpush1.msra.mxu0 0.0
    %427 = vmatprep.subr.mxu0 0.0
    %428 = vmatpush1.msra.mxu0 0.0
    %429 = vmatprep.subr.mxu0 0.0
    %430 = vmatpush1.msra.mxu0 0.0
    %431 = vmatprep.subr.mxu0 0.0
    %432 = vmatpush1.msra.mxu0 0.0
    %433 = vmatprep.subr.mxu0 0.0
    %434 = vmatpush1.msra.mxu0 0.0
    %435 = vmatprep.subr.mxu0 0.0
    %436 = vmatpush1.msra.mxu0 0.0
    %437 = vmatprep.subr.mxu0 0.0
    %438 = vmatpush1.msra.mxu0 0.0
    %439 = vmatprep.subr.mxu0 0.0
    %440 = vmatpush1.msra.mxu0 0.0
    %441 = vmatprep.subr.mxu0 0.0
    %442 = vmatpush1.msra.mxu0 0.0
    %443 = vmatprep.subr.mxu0 0.0
    %v444 = vand.u32 %v55, 4294901760
    %v445 = vsub.f32 %v55, %v444
    %v446 = vand.u32 %v445, 4294901760
    %447 = vmatpush1.msra.mxu0 %v446
    %448 = vmatprep.subr.mxu0 0.0
    %449 = vmatpush2.msra.mxu0 0.0
    %450 = vmatprep.subr.mxu0 0.0
    %451 = vmatpush2.msra.mxu0 0.0
    %452 = vmatprep.subr.mxu0 0.0
    %453 = vmatpush2.msra.mxu0 0.0
    %454 = vmatprep.subr.mxu0 0.0
    %455 = vmatpush2.msra.mxu0 0.0
    %456 = vmatprep.subr.mxu0 0.0
    %457 = vmatpush2.msra.mxu0 0.0
    %458 = vmatprep.subr.mxu0 0.0
    %459 = vmatpush2.msra.mxu0 0.0
    %460 = vmatprep.subr.mxu0 0.0
    %461 = vmatpush2.msra.mxu0 0.0
    %462 = vmatprep.subr.mxu0 0.0
    %463 = vmatpush2.msra.mxu0 0.0
    %464 = vmatprep.subr.mxu0 0.0
    %465 = vmatpush2.msra.mxu0 0.0
    %466 = vmatprep.subr.mxu0 0.0
    %467 = vmatpush2.msra.mxu0 0.0
    %468 = vmatprep.subr.mxu0 0.0
    %469 = vmatpush2.msra.mxu0 0.0
    %470 = vmatprep.subr.mxu0 0.0
    %471 = vmatpush2.msra.mxu0 0.0
    %472 = vmatprep.subr.mxu0 0.0
    %473 = vmatpush2.msra.mxu0 0.0
    %474 = vmatprep.subr.mxu0 0.0
    %475 = vmatpush2.msra.mxu0 0.0
    %476 = vmatprep.subr.mxu0 0.0
    %477 = vmatpush2.msra.mxu0 0.0
    %478 = vmatprep.subr.mxu0 0.0
    %479 = vmatpush2.msra.mxu0 0.0
    %480 = vmatprep.mubr.f32.mxu0 0.0
    %v481 = vand.u32 %v111, 4294901760
    %482 = vmatmul.mubr.f32.gmra.mxu0 %v481
    %v483 = vpop.f32.mrf.mxu0
    %v484 = vadd.f32 %v410, %v483
    %v485 = vpop.f32.mrf.mxu0
    %486 = vdwg.mxu0
    %487 = vmatprep.subr.mxu0 0.0
    %488 = vmatpush1.msra.mxu0 0.0
    %489 = vmatprep.subr.mxu0 0.0
    %490 = vmatpush1.msra.mxu0 0.0
    %491 = vmatprep.subr.mxu0 0.0
    %492 = vmatpush1.msra.mxu0 0.0
    %493 = vmatprep.subr.mxu0 0.0
    %494 = vmatpush1.msra.mxu0 0.0
    %495 = vmatprep.subr.mxu0 0.0
    %496 = vmatpush1.msra.mxu0 0.0
    %497 = vmatprep.subr.mxu0 0.0
    %498 = vmatpush1.msra.mxu0 0.0
    %499 = vmatprep.subr.mxu0 0.0
    %500 = vmatpush1.msra.mxu0 0.0
    %501 = vmatprep.subr.mxu0 0.0
    %502 = vmatpush1.msra.mxu0 0.0
    %503 = vmatprep.subr.mxu0 0.0
    %504 = vmatpush1.msra.mxu0 0.0
    %505 = vmatprep.subr.mxu0 0.0
    %506 = vmatpush1.msra.mxu0 0.0
    %507 = vmatprep.subr.mxu0 0.0
    %508 = vmatpush1.msra.mxu0 0.0
    %509 = vmatprep.subr.mxu0 0.0
    %510 = vmatpush1.msra.mxu0 0.0
    %511 = vmatprep.subr.mxu0 0.0
    %512 = vmatpush1.msra.mxu0 0.0
    %513 = vmatprep.subr.mxu0 0.0
    %514 = vmatpush1.msra.mxu0 0.0
    %515 = vmatprep.subr.mxu0 0.0
    %516 = vmatpush1.msra.mxu0 0.0
    %517 = vmatprep.subr.mxu0 0.0
    %v518 = vand.u32 %v55, 4294901760
    %519 = vmatpush1.msra.mxu0 %v518
    %520 = vmatprep.subr.mxu0 0.0
    %521 = vmatpush2.msra.mxu0 0.0
    %522 = vmatprep.subr.mxu0 0.0
    %523 = vmatpush2.msra.mxu0 0.0
    %524 = vmatprep.subr.mxu0 0.0
    %525 = vmatpush2.msra.mxu0 0.0
    %526 = vmatprep.subr.mxu0 0.0
    %527 = vmatpush2.msra.mxu0 0.0
    %528 = vmatprep.subr.mxu0 0.0
    %529 = vmatpush2.msra.mxu0 0.0
    %530 = vmatprep.subr.mxu0 0.0
    %531 = vmatpush2.msra.mxu0 0.0
    %532 = vmatprep.subr.mxu0 0.0
    %533 = vmatpush2.msra.mxu0 0.0
    %534 = vmatprep.subr.mxu0 0.0
    %535 = vmatpush2.msra.mxu0 0.0
    %536 = vmatprep.subr.mxu0 0.0
    %537 = vmatpush2.msra.mxu0 0.0
    %538 = vmatprep.subr.mxu0 0.0
    %539 = vmatpush2.msra.mxu0 0.0
    %540 = vmatprep.subr.mxu0 0.0
    %541 = vmatpush2.msra.mxu0 0.0
    %542 = vmatprep.subr.mxu0 0.0
    %543 = vmatpush2.msra.mxu0 0.0
    %544 = vmatprep.subr.mxu0 0.0
    %545 = vmatpush2.msra.mxu0 0.0
    %546 = vmatprep.subr.mxu0 0.0
    %547 = vmatpush2.msra.mxu0 0.0
    %548 = vmatprep.subr.mxu0 0.0
    %549 = vmatpush2.msra.mxu0 0.0
    %550 = vmatprep.subr.mxu0 0.0
    %551 = vmatpush2.msra.mxu0 0.0
    %552 = vmatprep.mubr.f32.mxu0 0.0
    %v553 = vand.u32 %v111, 4294901760
    %554 = vmatmul.mubr.f32.gmra.mxu0 %v553
    %v555 = vpop.f32.mrf.mxu0
    %v556 = vadd.f32 %v484, %v555
    %v557 = vpop.f32.mrf.mxu0
    %558 = vdwg.mxu0
    %559 = vxpose.xlu0.b32.start [1/16] %v74, 128
    %560 = vxpose.xlu0.b32.cont [2/16] 0.0, 128
    %561 = vxpose.xlu0.b32.cont [3/16] 0.0, 128
    %562 = vxpose.xlu0.b32.cont [4/16] 0.0, 128
    %563 = vxpose.xlu0.b32.cont [5/16] 0.0, 128
    %564 = vxpose.xlu0.b32.cont [6/16] 0.0, 128
    %565 = vxpose.xlu0.b32.cont [7/16] 0.0, 128
    %566 = vxpose.xlu0.b32.cont [8/16] 0.0, 128
    %567 = vxpose.xlu0.b32.cont [9/16] 0.0, 128
    %568 = vxpose.xlu0.b32.cont [10/16] 0.0, 128
    %569 = vxpose.xlu0.b32.cont [11/16] 0.0, 128
    %570 = vxpose.xlu0.b32.cont [12/16] 0.0, 128
    %571 = vxpose.xlu0.b32.cont [13/16] 0.0, 128
    %572 = vxpose.xlu0.b32.cont [14/16] 0.0, 128
    %573 = vxpose.xlu0.b32.cont [15/16] 0.0, 128
    %574 = vxpose.xlu0.b32.end [16/16] 0.0, 128
    %v575 = vpop.trf.xlu0
    %v576 = vpop.trf.xlu0
    %v577 = vpop.trf.xlu0
    %v578 = vpop.trf.xlu0
    %v579 = vpop.trf.xlu0
    %v580 = vpop.trf.xlu0
    %v581 = vpop.trf.xlu0
    %v582 = vpop.trf.xlu0
    %v583 = vpop.trf.xlu0
    %v584 = vpop.trf.xlu0
    %v585 = vpop.trf.xlu0
    %v586 = vpop.trf.xlu0
    %v587 = vpop.trf.xlu0
    %v588 = vpop.trf.xlu0
    %v589 = vpop.trf.xlu0
    %v590 = vpop.trf.xlu0
    %v592 = vsel %vm53, %v575, 0
    %594 = vmatprep.subr.mxu0 0.0
    %595 = vmatpush1.msra.mxu0 0.0
    %596 = vmatprep.subr.mxu0 0.0
    %597 = vmatpush1.msra.mxu0 0.0
    %598 = vmatprep.subr.mxu0 0.0
    %599 = vmatpush1.msra.mxu0 0.0
    %600 = vmatprep.subr.mxu0 0.0
    %601 = vmatpush1.msra.mxu0 0.0
    %602 = vmatprep.subr.mxu0 0.0
    %603 = vmatpush1.msra.mxu0 0.0
    %604 = vmatprep.subr.mxu0 0.0
    %605 = vmatpush1.msra.mxu0 0.0
    %606 = vmatprep.subr.mxu0 0.0
    %607 = vmatpush1.msra.mxu0 0.0
    %608 = vmatprep.subr.mxu0 0.0
    %609 = vmatpush1.msra.mxu0 0.0
    %610 = vmatprep.subr.mxu0 0.0
    %611 = vmatpush1.msra.mxu0 0.0
    %612 = vmatprep.subr.mxu0 0.0
    %613 = vmatpush1.msra.mxu0 0.0
    %614 = vmatprep.subr.mxu0 0.0
    %615 = vmatpush1.msra.mxu0 0.0
    %616 = vmatprep.subr.mxu0 0.0
    %617 = vmatpush1.msra.mxu0 0.0
    %618 = vmatprep.subr.mxu0 0.0
    %619 = vmatpush1.msra.mxu0 0.0
    %620 = vmatprep.subr.mxu0 0.0
    %621 = vmatpush1.msra.mxu0 0.0
    %622 = vmatprep.subr.mxu0 0.0
    %623 = vmatpush1.msra.mxu0 0.0
    %624 = vmatprep.subr.mxu0 0.0
    %v625 = vand.u32 %v48, 4294901760
    %626 = vmatpush1.msra.mxu0 %v625
    %627 = vmatprep.subr.mxu0 0.0
    %628 = vmatpush2.msra.mxu0 0.0
    %629 = vmatprep.subr.mxu0 0.0
    %630 = vmatpush2.msra.mxu0 0.0
    %631 = vmatprep.subr.mxu0 0.0
    %632 = vmatpush2.msra.mxu0 0.0
    %633 = vmatprep.subr.mxu0 0.0
    %634 = vmatpush2.msra.mxu0 0.0
    %635 = vmatprep.subr.mxu0 0.0
    %636 = vmatpush2.msra.mxu0 0.0
    %637 = vmatprep.subr.mxu0 0.0
    %638 = vmatpush2.msra.mxu0 0.0
    %639 = vmatprep.subr.mxu0 0.0
    %640 = vmatpush2.msra.mxu0 0.0
    %641 = vmatprep.subr.mxu0 0.0
    %642 = vmatpush2.msra.mxu0 0.0
    %643 = vmatprep.subr.mxu0 0.0
    %644 = vmatpush2.msra.mxu0 0.0
    %645 = vmatprep.subr.mxu0 0.0
    %646 = vmatpush2.msra.mxu0 0.0
    %647 = vmatprep.subr.mxu0 0.0
    %648 = vmatpush2.msra.mxu0 0.0
    %649 = vmatprep.subr.mxu0 0.0
    %650 = vmatpush2.msra.mxu0 0.0
    %651 = vmatprep.subr.mxu0 0.0
    %652 = vmatpush2.msra.mxu0 0.0
    %653 = vmatprep.subr.mxu0 0.0
    %654 = vmatpush2.msra.mxu0 0.0
    %655 = vmatprep.subr.mxu0 0.0
    %656 = vmatpush2.msra.mxu0 0.0
    %657 = vmatprep.subr.mxu0 0.0
    %658 = vmatpush2.msra.mxu0 0.0
    %659 = vmatprep.mubr.f32.mxu0 0.0
    %v660 = vand.u32 %v592, 4294901760
    %v661 = vsub.f32 %v592, %v660
    %v662 = vand.u32 %v661, 4294901760
    %v663 = vsub.f32 %v661, %v662
    %v664 = vand.u32 %v663, 4294901760
    %665 = vmatmul.mubr.f32.gmra.mxu0 %v664
    %v666 = vpop.f32.mrf.mxu0
    %v667 = vadd.f32 %v556, %v666
    %v668 = vpop.f32.mrf.mxu0
    %669 = vdwg.mxu0
    %670 = vmatprep.subr.mxu0 0.0
    %671 = vmatpush1.msra.mxu0 0.0
    %672 = vmatprep.subr.mxu0 0.0
    %673 = vmatpush1.msra.mxu0 0.0
    %674 = vmatprep.subr.mxu0 0.0
    %675 = vmatpush1.msra.mxu0 0.0
    %676 = vmatprep.subr.mxu0 0.0
    %677 = vmatpush1.msra.mxu0 0.0
    %678 = vmatprep.subr.mxu0 0.0
    %679 = vmatpush1.msra.mxu0 0.0
    %680 = vmatprep.subr.mxu0 0.0
    %681 = vmatpush1.msra.mxu0 0.0
    %682 = vmatprep.subr.mxu0 0.0
    %683 = vmatpush1.msra.mxu0 0.0
    %684 = vmatprep.subr.mxu0 0.0
    %685 = vmatpush1.msra.mxu0 0.0
    %686 = vmatprep.subr.mxu0 0.0
    %687 = vmatpush1.msra.mxu0 0.0
    %688 = vmatprep.subr.mxu0 0.0
    %689 = vmatpush1.msra.mxu0 0.0
    %690 = vmatprep.subr.mxu0 0.0
    %691 = vmatpush1.msra.mxu0 0.0
    %692 = vmatprep.subr.mxu0 0.0
    %693 = vmatpush1.msra.mxu0 0.0
    %694 = vmatprep.subr.mxu0 0.0
    %695 = vmatpush1.msra.mxu0 0.0
    %696 = vmatprep.subr.mxu0 0.0
    %697 = vmatpush1.msra.mxu0 0.0
    %698 = vmatprep.subr.mxu0 0.0
    %699 = vmatpush1.msra.mxu0 0.0
    %700 = vmatprep.subr.mxu0 0.0
    %v701 = vand.u32 %v48, 4294901760
    %v702 = vsub.f32 %v48, %v701
    %v703 = vand.u32 %v702, 4294901760
    %v704 = vsub.f32 %v702, %v703
    %v705 = vand.u32 %v704, 4294901760
    %706 = vmatpush1.msra.mxu0 %v705
    %707 = vmatprep.subr.mxu0 0.0
    %708 = vmatpush2.msra.mxu0 0.0
    %709 = vmatprep.subr.mxu0 0.0
    %710 = vmatpush2.msra.mxu0 0.0
    %711 = vmatprep.subr.mxu0 0.0
    %712 = vmatpush2.msra.mxu0 0.0
    %713 = vmatprep.subr.mxu0 0.0
    %714 = vmatpush2.msra.mxu0 0.0
    %715 = vmatprep.subr.mxu0 0.0
    %716 = vmatpush2.msra.mxu0 0.0
    %717 = vmatprep.subr.mxu0 0.0
    %718 = vmatpush2.msra.mxu0 0.0
    %719 = vmatprep.subr.mxu0 0.0
    %720 = vmatpush2.msra.mxu0 0.0
    %721 = vmatprep.subr.mxu0 0.0
    %722 = vmatpush2.msra.mxu0 0.0
    %723 = vmatprep.subr.mxu0 0.0
    %724 = vmatpush2.msra.mxu0 0.0
    %725 = vmatprep.subr.mxu0 0.0
    %726 = vmatpush2.msra.mxu0 0.0
    %727 = vmatprep.subr.mxu0 0.0
    %728 = vmatpush2.msra.mxu0 0.0
    %729 = vmatprep.subr.mxu0 0.0
    %730 = vmatpush2.msra.mxu0 0.0
    %731 = vmatprep.subr.mxu0 0.0
    %732 = vmatpush2.msra.mxu0 0.0
    %733 = vmatprep.subr.mxu0 0.0
    %734 = vmatpush2.msra.mxu0 0.0
    %735 = vmatprep.subr.mxu0 0.0
    %736 = vmatpush2.msra.mxu0 0.0
    %737 = vmatprep.subr.mxu0 0.0
    %738 = vmatpush2.msra.mxu0 0.0
    %739 = vmatprep.mubr.f32.mxu0 0.0
    %v740 = vand.u32 %v592, 4294901760
    %741 = vmatmul.mubr.f32.gmra.mxu0 %v740
    %v742 = vpop.f32.mrf.mxu0
    %v743 = vadd.f32 %v667, %v742
    %v744 = vpop.f32.mrf.mxu0
    %745 = vdwg.mxu0
    %746 = vmatprep.subr.mxu0 0.0
    %747 = vmatpush1.msra.mxu0 0.0
    %748 = vmatprep.subr.mxu0 0.0
    %749 = vmatpush1.msra.mxu0 0.0
    %750 = vmatprep.subr.mxu0 0.0
    %751 = vmatpush1.msra.mxu0 0.0
    %752 = vmatprep.subr.mxu0 0.0
    %753 = vmatpush1.msra.mxu0 0.0
    %754 = vmatprep.subr.mxu0 0.0
    %755 = vmatpush1.msra.mxu0 0.0
    %756 = vmatprep.subr.mxu0 0.0
    %757 = vmatpush1.msra.mxu0 0.0
    %758 = vmatprep.subr.mxu0 0.0
    %759 = vmatpush1.msra.mxu0 0.0
    %760 = vmatprep.subr.mxu0 0.0
    %761 = vmatpush1.msra.mxu0 0.0
    %762 = vmatprep.subr.mxu0 0.0
    %763 = vmatpush1.msra.mxu0 0.0
    %764 = vmatprep.subr.mxu0 0.0
    %765 = vmatpush1.msra.mxu0 0.0
    %766 = vmatprep.subr.mxu0 0.0
    %767 = vmatpush1.msra.mxu0 0.0
    %768 = vmatprep.subr.mxu0 0.0
    %769 = vmatpush1.msra.mxu0 0.0
    %770 = vmatprep.subr.mxu0 0.0
    %771 = vmatpush1.msra.mxu0 0.0
    %772 = vmatprep.subr.mxu0 0.0
    %773 = vmatpush1.msra.mxu0 0.0
    %774 = vmatprep.subr.mxu0 0.0
    %775 = vmatpush1.msra.mxu0 0.0
    %776 = vmatprep.subr.mxu0 0.0
    %v777 = vand.u32 %v48, 4294901760
    %v778 = vsub.f32 %v48, %v777
    %779 = vmatpush1.msra.mxu0 %v778
    %780 = vmatprep.subr.mxu0 0.0
    %781 = vmatpush2.msra.mxu0 0.0
    %782 = vmatprep.subr.mxu0 0.0
    %783 = vmatpush2.msra.mxu0 0.0
    %784 = vmatprep.subr.mxu0 0.0
    %785 = vmatpush2.msra.mxu0 0.0
    %786 = vmatprep.subr.mxu0 0.0
    %787 = vmatpush2.msra.mxu0 0.0
    %788 = vmatprep.subr.mxu0 0.0
    %789 = vmatpush2.msra.mxu0 0.0
    %790 = vmatprep.subr.mxu0 0.0
    %791 = vmatpush2.msra.mxu0 0.0
    %792 = vmatprep.subr.mxu0 0.0
    %793 = vmatpush2.msra.mxu0 0.0
    %794 = vmatprep.subr.mxu0 0.0
    %795 = vmatpush2.msra.mxu0 0.0
    %796 = vmatprep.subr.mxu0 0.0
    %797 = vmatpush2.msra.mxu0 0.0
    %798 = vmatprep.subr.mxu0 0.0
    %799 = vmatpush2.msra.mxu0 0.0
    %800 = vmatprep.subr.mxu0 0.0
    %801 = vmatpush2.msra.mxu0 0.0
    %802 = vmatprep.subr.mxu0 0.0
    %803 = vmatpush2.msra.mxu0 0.0
    %804 = vmatprep.subr.mxu0 0.0
    %805 = vmatpush2.msra.mxu0 0.0
    %806 = vmatprep.subr.mxu0 0.0
    %807 = vmatpush2.msra.mxu0 0.0
    %808 = vmatprep.subr.mxu0 0.0
    %809 = vmatpush2.msra.mxu0 0.0
    %810 = vmatprep.subr.mxu0 0.0
    %811 = vmatpush2.msra.mxu0 0.0
    %812 = vmatprep.mubr.f32.mxu0 0.0
    %v813 = vand.u32 %v592, 4294901760
    %v814 = vsub.f32 %v592, %v813
    %815 = vmatmul.mubr.f32.gmra.mxu0 %v814
    %v816 = vpop.f32.mrf.mxu0
    %v817 = vadd.f32 %v743, %v816
    %v818 = vpop.f32.mrf.mxu0
    %819 = vdwg.mxu0
    %820 = vmatprep.subr.mxu0 0.0
    %821 = vmatpush1.msra.mxu0 0.0
    %822 = vmatprep.subr.mxu0 0.0
    %823 = vmatpush1.msra.mxu0 0.0
    %824 = vmatprep.subr.mxu0 0.0
    %825 = vmatpush1.msra.mxu0 0.0
    %826 = vmatprep.subr.mxu0 0.0
    %827 = vmatpush1.msra.mxu0 0.0
    %828 = vmatprep.subr.mxu0 0.0
    %829 = vmatpush1.msra.mxu0 0.0
    %830 = vmatprep.subr.mxu0 0.0
    %831 = vmatpush1.msra.mxu0 0.0
    %832 = vmatprep.subr.mxu0 0.0
    %833 = vmatpush1.msra.mxu0 0.0
    %834 = vmatprep.subr.mxu0 0.0
    %835 = vmatpush1.msra.mxu0 0.0
    %836 = vmatprep.subr.mxu0 0.0
    %837 = vmatpush1.msra.mxu0 0.0
    %838 = vmatprep.subr.mxu0 0.0
    %839 = vmatpush1.msra.mxu0 0.0
    %840 = vmatprep.subr.mxu0 0.0
    %841 = vmatpush1.msra.mxu0 0.0
    %842 = vmatprep.subr.mxu0 0.0
    %843 = vmatpush1.msra.mxu0 0.0
    %844 = vmatprep.subr.mxu0 0.0
    %845 = vmatpush1.msra.mxu0 0.0
    %846 = vmatprep.subr.mxu0 0.0
    %847 = vmatpush1.msra.mxu0 0.0
    %848 = vmatprep.subr.mxu0 0.0
    %849 = vmatpush1.msra.mxu0 0.0
    %850 = vmatprep.subr.mxu0 0.0
    %v851 = vand.u32 %v48, 4294901760
    %852 = vmatpush1.msra.mxu0 %v851
    %853 = vmatprep.subr.mxu0 0.0
    %854 = vmatpush2.msra.mxu0 0.0
    %855 = vmatprep.subr.mxu0 0.0
    %856 = vmatpush2.msra.mxu0 0.0
    %857 = vmatprep.subr.mxu0 0.0
    %858 = vmatpush2.msra.mxu0 0.0
    %859 = vmatprep.subr.mxu0 0.0
    %860 = vmatpush2.msra.mxu0 0.0
    %861 = vmatprep.subr.mxu0 0.0
    %862 = vmatpush2.msra.mxu0 0.0
    %863 = vmatprep.subr.mxu0 0.0
    %864 = vmatpush2.msra.mxu0 0.0
    %865 = vmatprep.subr.mxu0 0.0
    %866 = vmatpush2.msra.mxu0 0.0
    %867 = vmatprep.subr.mxu0 0.0
    %868 = vmatpush2.msra.mxu0 0.0
    %869 = vmatprep.subr.mxu0 0.0
    %870 = vmatpush2.msra.mxu0 0.0
    %871 = vmatprep.subr.mxu0 0.0
    %872 = vmatpush2.msra.mxu0 0.0
    %873 = vmatprep.subr.mxu0 0.0
    %874 = vmatpush2.msra.mxu0 0.0
    %875 = vmatprep.subr.mxu0 0.0
    %876 = vmatpush2.msra.mxu0 0.0
    %877 = vmatprep.subr.mxu0 0.0
    %878 = vmatpush2.msra.mxu0 0.0
    %879 = vmatprep.subr.mxu0 0.0
    %880 = vmatpush2.msra.mxu0 0.0
    %881 = vmatprep.subr.mxu0 0.0
    %882 = vmatpush2.msra.mxu0 0.0
    %883 = vmatprep.subr.mxu0 0.0
    %884 = vmatpush2.msra.mxu0 0.0
    %885 = vmatprep.mubr.f32.mxu0 0.0
    %v886 = vand.u32 %v592, 4294901760
    %v887 = vsub.f32 %v592, %v886
    %v888 = vand.u32 %v887, 4294901760
    %889 = vmatmul.mubr.f32.gmra.mxu0 %v888
    %v890 = vpop.f32.mrf.mxu0
    %v891 = vadd.f32 %v817, %v890
    %v892 = vpop.f32.mrf.mxu0
    %893 = vdwg.mxu0
    %894 = vmatprep.subr.mxu0 0.0
    %895 = vmatpush1.msra.mxu0 0.0
    %896 = vmatprep.subr.mxu0 0.0
    %897 = vmatpush1.msra.mxu0 0.0
    %898 = vmatprep.subr.mxu0 0.0
    %899 = vmatpush1.msra.mxu0 0.0
    %900 = vmatprep.subr.mxu0 0.0
    %901 = vmatpush1.msra.mxu0 0.0
    %902 = vmatprep.subr.mxu0 0.0
    %903 = vmatpush1.msra.mxu0 0.0
    %904 = vmatprep.subr.mxu0 0.0
    %905 = vmatpush1.msra.mxu0 0.0
    %906 = vmatprep.subr.mxu0 0.0
    %907 = vmatpush1.msra.mxu0 0.0
    %908 = vmatprep.subr.mxu0 0.0
    %909 = vmatpush1.msra.mxu0 0.0
    %910 = vmatprep.subr.mxu0 0.0
    %911 = vmatpush1.msra.mxu0 0.0
    %912 = vmatprep.subr.mxu0 0.0
    %913 = vmatpush1.msra.mxu0 0.0
    %914 = vmatprep.subr.mxu0 0.0
    %915 = vmatpush1.msra.mxu0 0.0
    %916 = vmatprep.subr.mxu0 0.0
    %917 = vmatpush1.msra.mxu0 0.0
    %918 = vmatprep.subr.mxu0 0.0
    %919 = vmatpush1.msra.mxu0 0.0
    %920 = vmatprep.subr.mxu0 0.0
    %921 = vmatpush1.msra.mxu0 0.0
    %922 = vmatprep.subr.mxu0 0.0
    %923 = vmatpush1.msra.mxu0 0.0
    %924 = vmatprep.subr.mxu0 0.0
    %v925 = vand.u32 %v48, 4294901760
    %v926 = vsub.f32 %v48, %v925
    %v927 = vand.u32 %v926, 4294901760
    %928 = vmatpush1.msra.mxu0 %v927
    %929 = vmatprep.subr.mxu0 0.0
    %930 = vmatpush2.msra.mxu0 0.0
    %931 = vmatprep.subr.mxu0 0.0
    %932 = vmatpush2.msra.mxu0 0.0
    %933 = vmatprep.subr.mxu0 0.0
    %934 = vmatpush2.msra.mxu0 0.0
    %935 = vmatprep.subr.mxu0 0.0
    %936 = vmatpush2.msra.mxu0 0.0
    %937 = vmatprep.subr.mxu0 0.0
    %938 = vmatpush2.msra.mxu0 0.0
    %939 = vmatprep.subr.mxu0 0.0
    %940 = vmatpush2.msra.mxu0 0.0
    %941 = vmatprep.subr.mxu0 0.0
    %942 = vmatpush2.msra.mxu0 0.0
    %943 = vmatprep.subr.mxu0 0.0
    %944 = vmatpush2.msra.mxu0 0.0
    %945 = vmatprep.subr.mxu0 0.0
    %946 = vmatpush2.msra.mxu0 0.0
    %947 = vmatprep.subr.mxu0 0.0
    %948 = vmatpush2.msra.mxu0 0.0
    %949 = vmatprep.subr.mxu0 0.0
    %950 = vmatpush2.msra.mxu0 0.0
    %951 = vmatprep.subr.mxu0 0.0
    %952 = vmatpush2.msra.mxu0 0.0
    %953 = vmatprep.subr.mxu0 0.0
    %954 = vmatpush2.msra.mxu0 0.0
    %955 = vmatprep.subr.mxu0 0.0
    %956 = vmatpush2.msra.mxu0 0.0
    %957 = vmatprep.subr.mxu0 0.0
    %958 = vmatpush2.msra.mxu0 0.0
    %959 = vmatprep.subr.mxu0 0.0
    %960 = vmatpush2.msra.mxu0 0.0
    %961 = vmatprep.mubr.f32.mxu0 0.0
    %v962 = vand.u32 %v592, 4294901760
    %963 = vmatmul.mubr.f32.gmra.mxu0 %v962
    %v964 = vpop.f32.mrf.mxu0
    %v965 = vadd.f32 %v891, %v964
    %v966 = vpop.f32.mrf.mxu0
    %967 = vdwg.mxu0
    %968 = vmatprep.subr.mxu0 0.0
    %969 = vmatpush1.msra.mxu0 0.0
    %970 = vmatprep.subr.mxu0 0.0
    %971 = vmatpush1.msra.mxu0 0.0
    %972 = vmatprep.subr.mxu0 0.0
    %973 = vmatpush1.msra.mxu0 0.0
    %974 = vmatprep.subr.mxu0 0.0
    %975 = vmatpush1.msra.mxu0 0.0
    %976 = vmatprep.subr.mxu0 0.0
    %977 = vmatpush1.msra.mxu0 0.0
    %978 = vmatprep.subr.mxu0 0.0
    %979 = vmatpush1.msra.mxu0 0.0
    %980 = vmatprep.subr.mxu0 0.0
    %981 = vmatpush1.msra.mxu0 0.0
    %982 = vmatprep.subr.mxu0 0.0
    %983 = vmatpush1.msra.mxu0 0.0
    %984 = vmatprep.subr.mxu0 0.0
    %985 = vmatpush1.msra.mxu0 0.0
    %986 = vmatprep.subr.mxu0 0.0
    %987 = vmatpush1.msra.mxu0 0.0
    %988 = vmatprep.subr.mxu0 0.0
    %989 = vmatpush1.msra.mxu0 0.0
    %990 = vmatprep.subr.mxu0 0.0
    %991 = vmatpush1.msra.mxu0 0.0
    %992 = vmatprep.subr.mxu0 0.0
    %993 = vmatpush1.msra.mxu0 0.0
    %994 = vmatprep.subr.mxu0 0.0
    %995 = vmatpush1.msra.mxu0 0.0
    %996 = vmatprep.subr.mxu0 0.0
    %997 = vmatpush1.msra.mxu0 0.0
    %998 = vmatprep.subr.mxu0 0.0
    %v999 = vand.u32 %v48, 4294901760
    %1000 = vmatpush1.msra.mxu0 %v999
    %1001 = vmatprep.subr.mxu0 0.0
    %1002 = vmatpush2.msra.mxu0 0.0
    %1003 = vmatprep.subr.mxu0 0.0
    %1004 = vmatpush2.msra.mxu0 0.0
    %1005 = vmatprep.subr.mxu0 0.0
    %1006 = vmatpush2.msra.mxu0 0.0
    %1007 = vmatprep.subr.mxu0 0.0
    %1008 = vmatpush2.msra.mxu0 0.0
    %1009 = vmatprep.subr.mxu0 0.0
    %1010 = vmatpush2.msra.mxu0 0.0
    %1011 = vmatprep.subr.mxu0 0.0
    %1012 = vmatpush2.msra.mxu0 0.0
    %1013 = vmatprep.subr.mxu0 0.0
    %1014 = vmatpush2.msra.mxu0 0.0
    %1015 = vmatprep.subr.mxu0 0.0
    %1016 = vmatpush2.msra.mxu0 0.0
    %1017 = vmatprep.subr.mxu0 0.0
    %1018 = vmatpush2.msra.mxu0 0.0
    %1019 = vmatprep.subr.mxu0 0.0
    %1020 = vmatpush2.msra.mxu0 0.0
    %1021 = vmatprep.subr.mxu0 0.0
    %1022 = vmatpush2.msra.mxu0 0.0
    %1023 = vmatprep.subr.mxu0 0.0
    %1024 = vmatpush2.msra.mxu0 0.0
    %1025 = vmatprep.subr.mxu0 0.0
    %1026 = vmatpush2.msra.mxu0 0.0
    %1027 = vmatprep.subr.mxu0 0.0
    %1028 = vmatpush2.msra.mxu0 0.0
    %1029 = vmatprep.subr.mxu0 0.0
    %1030 = vmatpush2.msra.mxu0 0.0
    %1031 = vmatprep.subr.mxu0 0.0
    %1032 = vmatpush2.msra.mxu0 0.0
    %1033 = vmatprep.mubr.f32.mxu0 0.0
    %v1034 = vand.u32 %v592, 4294901760
    %1035 = vmatmul.mubr.f32.gmra.mxu0 %v1034
    %v1036 = vpop.f32.mrf.mxu0
    %v1037 = vadd.f32 %v965, %v1036
    %v1038 = vpop.f32.mrf.mxu0
    %1039 = vdwg.mxu0
    %s1040 = sadd.s32 %s18, 16
    %s1041 = scalar_lea.vmem %s1, %s1040
    %v1042 = vld [vmem:[%s1041] sm:$0xff]
    %1043 = vxpose.xlu0.b32.start [1/16] %v1042, 128
    %1044 = vxpose.xlu0.b32.cont [2/16] 0.0, 128
    %1045 = vxpose.xlu0.b32.cont [3/16] 0.0, 128
    %1046 = vxpose.xlu0.b32.cont [4/16] 0.0, 128
    %1047 = vxpose.xlu0.b32.cont [5/16] 0.0, 128
    %1048 = vxpose.xlu0.b32.cont [6/16] 0.0, 128
    %1049 = vxpose.xlu0.b32.cont [7/16] 0.0, 128
    %1050 = vxpose.xlu0.b32.cont [8/16] 0.0, 128
    %1051 = vxpose.xlu0.b32.cont [9/16] 0.0, 128
    %1052 = vxpose.xlu0.b32.cont [10/16] 0.0, 128
    %1053 = vxpose.xlu0.b32.cont [11/16] 0.0, 128
    %1054 = vxpose.xlu0.b32.cont [12/16] 0.0, 128
    %1055 = vxpose.xlu0.b32.cont [13/16] 0.0, 128
    %1056 = vxpose.xlu0.b32.cont [14/16] 0.0, 128
    %1057 = vxpose.xlu0.b32.cont [15/16] 0.0, 128
    %1058 = vxpose.xlu0.b32.end [16/16] 0.0, 128
    %v1059 = vpop.trf.xlu0
    %v1060 = vpop.trf.xlu0
    %v1061 = vpop.trf.xlu0
    %v1062 = vpop.trf.xlu0
    %v1063 = vpop.trf.xlu0
    %v1064 = vpop.trf.xlu0
    %v1065 = vpop.trf.xlu0
    %v1066 = vpop.trf.xlu0
    %v1067 = vpop.trf.xlu0
    %v1068 = vpop.trf.xlu0
    %v1069 = vpop.trf.xlu0
    %v1070 = vpop.trf.xlu0
    %v1071 = vpop.trf.xlu0
    %v1072 = vpop.trf.xlu0
    %v1073 = vpop.trf.xlu0
    %v1074 = vpop.trf.xlu0
    %v1076 = vsel %vm53, %v1059, 0
    %1078 = vmatprep.subr.mxu0 0.0
    %1079 = vmatpush1.msra.mxu0 0.0
    %1080 = vmatprep.subr.mxu0 0.0
    %1081 = vmatpush1.msra.mxu0 0.0
    %1082 = vmatprep.subr.mxu0 0.0
    %1083 = vmatpush1.msra.mxu0 0.0
    %1084 = vmatprep.subr.mxu0 0.0
    %1085 = vmatpush1.msra.mxu0 0.0
    %1086 = vmatprep.subr.mxu0 0.0
    %1087 = vmatpush1.msra.mxu0 0.0
    %1088 = vmatprep.subr.mxu0 0.0
    %1089 = vmatpush1.msra.mxu0 0.0
    %1090 = vmatprep.subr.mxu0 0.0
    %1091 = vmatpush1.msra.mxu0 0.0
    %1092 = vmatprep.subr.mxu0 0.0
    %1093 = vmatpush1.msra.mxu0 0.0
    %1094 = vmatprep.subr.mxu0 0.0
    %1095 = vmatpush1.msra.mxu0 0.0
    %1096 = vmatprep.subr.mxu0 0.0
    %1097 = vmatpush1.msra.mxu0 0.0
    %1098 = vmatprep.subr.mxu0 0.0
    %1099 = vmatpush1.msra.mxu0 0.0
    %1100 = vmatprep.subr.mxu0 0.0
    %1101 = vmatpush1.msra.mxu0 0.0
    %1102 = vmatprep.subr.mxu0 0.0
    %1103 = vmatpush1.msra.mxu0 0.0
    %1104 = vmatprep.subr.mxu0 0.0
    %1105 = vmatpush1.msra.mxu0 0.0
    %1106 = vmatprep.subr.mxu0 0.0
    %1107 = vmatpush1.msra.mxu0 0.0
    %1108 = vmatprep.subr.mxu0 0.0
    %v1109 = vand.u32 %v60, 4294901760
    %1110 = vmatpush1.msra.mxu0 %v1109
    %1111 = vmatprep.subr.mxu0 0.0
    %1112 = vmatpush2.msra.mxu0 0.0
    %1113 = vmatprep.subr.mxu0 0.0
    %1114 = vmatpush2.msra.mxu0 0.0
    %1115 = vmatprep.subr.mxu0 0.0
    %1116 = vmatpush2.msra.mxu0 0.0
    %1117 = vmatprep.subr.mxu0 0.0
    %1118 = vmatpush2.msra.mxu0 0.0
    %1119 = vmatprep.subr.mxu0 0.0
    %1120 = vmatpush2.msra.mxu0 0.0
    %1121 = vmatprep.subr.mxu0 0.0
    %1122 = vmatpush2.msra.mxu0 0.0
    %1123 = vmatprep.subr.mxu0 0.0
    %1124 = vmatpush2.msra.mxu0 0.0
    %1125 = vmatprep.subr.mxu0 0.0
    %1126 = vmatpush2.msra.mxu0 0.0
    %1127 = vmatprep.subr.mxu0 0.0
    %1128 = vmatpush2.msra.mxu0 0.0
    %1129 = vmatprep.subr.mxu0 0.0
    %1130 = vmatpush2.msra.mxu0 0.0
    %1131 = vmatprep.subr.mxu0 0.0
    %1132 = vmatpush2.msra.mxu0 0.0
    %1133 = vmatprep.subr.mxu0 0.0
    %1134 = vmatpush2.msra.mxu0 0.0
    %1135 = vmatprep.subr.mxu0 0.0
    %1136 = vmatpush2.msra.mxu0 0.0
    %1137 = vmatprep.subr.mxu0 0.0
    %1138 = vmatpush2.msra.mxu0 0.0
    %1139 = vmatprep.subr.mxu0 0.0
    %1140 = vmatpush2.msra.mxu0 0.0
    %1141 = vmatprep.subr.mxu0 0.0
    %1142 = vmatpush2.msra.mxu0 0.0
    %1143 = vmatprep.mubr.f32.mxu0 0.0
    %v1144 = vand.u32 %v1076, 4294901760
    %v1145 = vsub.f32 %v1076, %v1144
    %v1146 = vand.u32 %v1145, 4294901760
    %v1147 = vsub.f32 %v1145, %v1146
    %v1148 = vand.u32 %v1147, 4294901760
    %1149 = vmatmul.mubr.f32.gmra.mxu0 %v1148
    %v1150 = vpop.f32.mrf.mxu0
    %v1151 = vadd.f32 0.0, %v1150
    %v1152 = vpop.f32.mrf.mxu0
    %1153 = vdwg.mxu0
    %1154 = vmatprep.subr.mxu0 0.0
    %1155 = vmatpush1.msra.mxu0 0.0
    %1156 = vmatprep.subr.mxu0 0.0
    %1157 = vmatpush1.msra.mxu0 0.0
    %1158 = vmatprep.subr.mxu0 0.0
    %1159 = vmatpush1.msra.mxu0 0.0
    %1160 = vmatprep.subr.mxu0 0.0
    %1161 = vmatpush1.msra.mxu0 0.0
    %1162 = vmatprep.subr.mxu0 0.0
    %1163 = vmatpush1.msra.mxu0 0.0
    %1164 = vmatprep.subr.mxu0 0.0
    %1165 = vmatpush1.msra.mxu0 0.0
    %1166 = vmatprep.subr.mxu0 0.0
    %1167 = vmatpush1.msra.mxu0 0.0
    %1168 = vmatprep.subr.mxu0 0.0
    %1169 = vmatpush1.msra.mxu0 0.0
    %1170 = vmatprep.subr.mxu0 0.0
    %1171 = vmatpush1.msra.mxu0 0.0
    %1172 = vmatprep.subr.mxu0 0.0
    %1173 = vmatpush1.msra.mxu0 0.0
    %1174 = vmatprep.subr.mxu0 0.0
    %1175 = vmatpush1.msra.mxu0 0.0
    %1176 = vmatprep.subr.mxu0 0.0
    %1177 = vmatpush1.msra.mxu0 0.0
    %1178 = vmatprep.subr.mxu0 0.0
    %1179 = vmatpush1.msra.mxu0 0.0
    %1180 = vmatprep.subr.mxu0 0.0
    %1181 = vmatpush1.msra.mxu0 0.0
    %1182 = vmatprep.subr.mxu0 0.0
    %1183 = vmatpush1.msra.mxu0 0.0
    %1184 = vmatprep.subr.mxu0 0.0
    %v1185 = vand.u32 %v60, 4294901760
    %v1186 = vsub.f32 %v60, %v1185
    %v1187 = vand.u32 %v1186, 4294901760
    %v1188 = vsub.f32 %v1186, %v1187
    %v1189 = vand.u32 %v1188, 4294901760
    %1190 = vmatpush1.msra.mxu0 %v1189
    %1191 = vmatprep.subr.mxu0 0.0
    %1192 = vmatpush2.msra.mxu0 0.0
    %1193 = vmatprep.subr.mxu0 0.0
    %1194 = vmatpush2.msra.mxu0 0.0
    %1195 = vmatprep.subr.mxu0 0.0
    %1196 = vmatpush2.msra.mxu0 0.0
    %1197 = vmatprep.subr.mxu0 0.0
    %1198 = vmatpush2.msra.mxu0 0.0
    %1199 = vmatprep.subr.mxu0 0.0
    %1200 = vmatpush2.msra.mxu0 0.0
    %1201 = vmatprep.subr.mxu0 0.0
    %1202 = vmatpush2.msra.mxu0 0.0
    %1203 = vmatprep.subr.mxu0 0.0
    %1204 = vmatpush2.msra.mxu0 0.0
    %1205 = vmatprep.subr.mxu0 0.0
    %1206 = vmatpush2.msra.mxu0 0.0
    %1207 = vmatprep.subr.mxu0 0.0
    %1208 = vmatpush2.msra.mxu0 0.0
    %1209 = vmatprep.subr.mxu0 0.0
    %1210 = vmatpush2.msra.mxu0 0.0
    %1211 = vmatprep.subr.mxu0 0.0
    %1212 = vmatpush2.msra.mxu0 0.0
    %1213 = vmatprep.subr.mxu0 0.0
    %1214 = vmatpush2.msra.mxu0 0.0
    %1215 = vmatprep.subr.mxu0 0.0
    %1216 = vmatpush2.msra.mxu0 0.0
    %1217 = vmatprep.subr.mxu0 0.0
    %1218 = vmatpush2.msra.mxu0 0.0
    %1219 = vmatprep.subr.mxu0 0.0
    %1220 = vmatpush2.msra.mxu0 0.0
    %1221 = vmatprep.subr.mxu0 0.0
    %1222 = vmatpush2.msra.mxu0 0.0
    %1223 = vmatprep.mubr.f32.mxu0 0.0
    %v1224 = vand.u32 %v1076, 4294901760
    %1225 = vmatmul.mubr.f32.gmra.mxu0 %v1224
    %v1226 = vpop.f32.mrf.mxu0
    %v1227 = vadd.f32 %v1151, %v1226
    %v1228 = vpop.f32.mrf.mxu0
    %1229 = vdwg.mxu0
    %1230 = vmatprep.subr.mxu0 0.0
    %1231 = vmatpush1.msra.mxu0 0.0
    %1232 = vmatprep.subr.mxu0 0.0
    %1233 = vmatpush1.msra.mxu0 0.0
    %1234 = vmatprep.subr.mxu0 0.0
    %1235 = vmatpush1.msra.mxu0 0.0
    %1236 = vmatprep.subr.mxu0 0.0
    %1237 = vmatpush1.msra.mxu0 0.0
    %1238 = vmatprep.subr.mxu0 0.0
    %1239 = vmatpush1.msra.mxu0 0.0
    %1240 = vmatprep.subr.mxu0 0.0
    %1241 = vmatpush1.msra.mxu0 0.0
    %1242 = vmatprep.subr.mxu0 0.0
    %1243 = vmatpush1.msra.mxu0 0.0
    %1244 = vmatprep.subr.mxu0 0.0
    %1245 = vmatpush1.msra.mxu0 0.0
    %1246 = vmatprep.subr.mxu0 0.0
    %1247 = vmatpush1.msra.mxu0 0.0
    %1248 = vmatprep.subr.mxu0 0.0
    %1249 = vmatpush1.msra.mxu0 0.0
    %1250 = vmatprep.subr.mxu0 0.0
    %1251 = vmatpush1.msra.mxu0 0.0
    %1252 = vmatprep.subr.mxu0 0.0
    %1253 = vmatpush1.msra.mxu0 0.0
    %1254 = vmatprep.subr.mxu0 0.0
    %1255 = vmatpush1.msra.mxu0 0.0
    %1256 = vmatprep.subr.mxu0 0.0
    %1257 = vmatpush1.msra.mxu0 0.0
    %1258 = vmatprep.subr.mxu0 0.0
    %1259 = vmatpush1.msra.mxu0 0.0
    %1260 = vmatprep.subr.mxu0 0.0
    %v1261 = vand.u32 %v60, 4294901760
    %v1262 = vsub.f32 %v60, %v1261
    %1263 = vmatpush1.msra.mxu0 %v1262
    %1264 = vmatprep.subr.mxu0 0.0
    %1265 = vmatpush2.msra.mxu0 0.0
    %1266 = vmatprep.subr.mxu0 0.0
    %1267 = vmatpush2.msra.mxu0 0.0
    %1268 = vmatprep.subr.mxu0 0.0
    %1269 = vmatpush2.msra.mxu0 0.0
    %1270 = vmatprep.subr.mxu0 0.0
    %1271 = vmatpush2.msra.mxu0 0.0
    %1272 = vmatprep.subr.mxu0 0.0
    %1273 = vmatpush2.msra.mxu0 0.0
    %1274 = vmatprep.subr.mxu0 0.0
    %1275 = vmatpush2.msra.mxu0 0.0
    %1276 = vmatprep.subr.mxu0 0.0
    %1277 = vmatpush2.msra.mxu0 0.0
    %1278 = vmatprep.subr.mxu0 0.0
    %1279 = vmatpush2.msra.mxu0 0.0
    %1280 = vmatprep.subr.mxu0 0.0
    %1281 = vmatpush2.msra.mxu0 0.0
    %1282 = vmatprep.subr.mxu0 0.0
    %1283 = vmatpush2.msra.mxu0 0.0
    %1284 = vmatprep.subr.mxu0 0.0
    %1285 = vmatpush2.msra.mxu0 0.0
    %1286 = vmatprep.subr.mxu0 0.0
    %1287 = vmatpush2.msra.mxu0 0.0
    %1288 = vmatprep.subr.mxu0 0.0
    %1289 = vmatpush2.msra.mxu0 0.0
    %1290 = vmatprep.subr.mxu0 0.0
    %1291 = vmatpush2.msra.mxu0 0.0
    %1292 = vmatprep.subr.mxu0 0.0
    %1293 = vmatpush2.msra.mxu0 0.0
    %1294 = vmatprep.subr.mxu0 0.0
    %1295 = vmatpush2.msra.mxu0 0.0
    %1296 = vmatprep.mubr.f32.mxu0 0.0
    %v1297 = vand.u32 %v1076, 4294901760
    %v1298 = vsub.f32 %v1076, %v1297
    %1299 = vmatmul.mubr.f32.gmra.mxu0 %v1298
    %v1300 = vpop.f32.mrf.mxu0
    %v1301 = vadd.f32 %v1227, %v1300
    %v1302 = vpop.f32.mrf.mxu0
    %1303 = vdwg.mxu0
    %1304 = vmatprep.subr.mxu0 0.0
    %1305 = vmatpush1.msra.mxu0 0.0
    %1306 = vmatprep.subr.mxu0 0.0
    %1307 = vmatpush1.msra.mxu0 0.0
    %1308 = vmatprep.subr.mxu0 0.0
    %1309 = vmatpush1.msra.mxu0 0.0
    %1310 = vmatprep.subr.mxu0 0.0
    %1311 = vmatpush1.msra.mxu0 0.0
    %1312 = vmatprep.subr.mxu0 0.0
    %1313 = vmatpush1.msra.mxu0 0.0
    %1314 = vmatprep.subr.mxu0 0.0
    %1315 = vmatpush1.msra.mxu0 0.0
    %1316 = vmatprep.subr.mxu0 0.0
    %1317 = vmatpush1.msra.mxu0 0.0
    %1318 = vmatprep.subr.mxu0 0.0
    %1319 = vmatpush1.msra.mxu0 0.0
    %1320 = vmatprep.subr.mxu0 0.0
    %1321 = vmatpush1.msra.mxu0 0.0
    %1322 = vmatprep.subr.mxu0 0.0
    %1323 = vmatpush1.msra.mxu0 0.0
    %1324 = vmatprep.subr.mxu0 0.0
    %1325 = vmatpush1.msra.mxu0 0.0
    %1326 = vmatprep.subr.mxu0 0.0
    %1327 = vmatpush1.msra.mxu0 0.0
    %1328 = vmatprep.subr.mxu0 0.0
    %1329 = vmatpush1.msra.mxu0 0.0
    %1330 = vmatprep.subr.mxu0 0.0
    %1331 = vmatpush1.msra.mxu0 0.0
    %1332 = vmatprep.subr.mxu0 0.0
    %1333 = vmatpush1.msra.mxu0 0.0
    %1334 = vmatprep.subr.mxu0 0.0
    %v1335 = vand.u32 %v60, 4294901760
    %1336 = vmatpush1.msra.mxu0 %v1335
    %1337 = vmatprep.subr.mxu0 0.0
    %1338 = vmatpush2.msra.mxu0 0.0
    %1339 = vmatprep.subr.mxu0 0.0
    %1340 = vmatpush2.msra.mxu0 0.0
    %1341 = vmatprep.subr.mxu0 0.0
    %1342 = vmatpush2.msra.mxu0 0.0
    %1343 = vmatprep.subr.mxu0 0.0
    %1344 = vmatpush2.msra.mxu0 0.0
    %1345 = vmatprep.subr.mxu0 0.0
    %1346 = vmatpush2.msra.mxu0 0.0
    %1347 = vmatprep.subr.mxu0 0.0
    %1348 = vmatpush2.msra.mxu0 0.0
    %1349 = vmatprep.subr.mxu0 0.0
    %1350 = vmatpush2.msra.mxu0 0.0
    %1351 = vmatprep.subr.mxu0 0.0
    %1352 = vmatpush2.msra.mxu0 0.0
    %1353 = vmatprep.subr.mxu0 0.0
    %1354 = vmatpush2.msra.mxu0 0.0
    %1355 = vmatprep.subr.mxu0 0.0
    %1356 = vmatpush2.msra.mxu0 0.0
    %1357 = vmatprep.subr.mxu0 0.0
    %1358 = vmatpush2.msra.mxu0 0.0
    %1359 = vmatprep.subr.mxu0 0.0
    %1360 = vmatpush2.msra.mxu0 0.0
    %1361 = vmatprep.subr.mxu0 0.0
    %1362 = vmatpush2.msra.mxu0 0.0
    %1363 = vmatprep.subr.mxu0 0.0
    %1364 = vmatpush2.msra.mxu0 0.0
    %1365 = vmatprep.subr.mxu0 0.0
    %1366 = vmatpush2.msra.mxu0 0.0
    %1367 = vmatprep.subr.mxu0 0.0
    %1368 = vmatpush2.msra.mxu0 0.0
    %1369 = vmatprep.mubr.f32.mxu0 0.0
    %v1370 = vand.u32 %v1076, 4294901760
    %v1371 = vsub.f32 %v1076, %v1370
    %v1372 = vand.u32 %v1371, 4294901760
    %1373 = vmatmul.mubr.f32.gmra.mxu0 %v1372
    %v1374 = vpop.f32.mrf.mxu0
    %v1375 = vadd.f32 %v1301, %v1374
    %v1376 = vpop.f32.mrf.mxu0
    %1377 = vdwg.mxu0
    %1378 = vmatprep.subr.mxu0 0.0
    %1379 = vmatpush1.msra.mxu0 0.0
    %1380 = vmatprep.subr.mxu0 0.0
    %1381 = vmatpush1.msra.mxu0 0.0
    %1382 = vmatprep.subr.mxu0 0.0
    %1383 = vmatpush1.msra.mxu0 0.0
    %1384 = vmatprep.subr.mxu0 0.0
    %1385 = vmatpush1.msra.mxu0 0.0
    %1386 = vmatprep.subr.mxu0 0.0
    %1387 = vmatpush1.msra.mxu0 0.0
    %1388 = vmatprep.subr.mxu0 0.0
    %1389 = vmatpush1.msra.mxu0 0.0
    %1390 = vmatprep.subr.mxu0 0.0
    %1391 = vmatpush1.msra.mxu0 0.0
    %1392 = vmatprep.subr.mxu0 0.0
    %1393 = vmatpush1.msra.mxu0 0.0
    %1394 = vmatprep.subr.mxu0 0.0
    %1395 = vmatpush1.msra.mxu0 0.0
    %1396 = vmatprep.subr.mxu0 0.0
    %1397 = vmatpush1.msra.mxu0 0.0
    %1398 = vmatprep.subr.mxu0 0.0
    %1399 = vmatpush1.msra.mxu0 0.0
    %1400 = vmatprep.subr.mxu0 0.0
    %1401 = vmatpush1.msra.mxu0 0.0
    %1402 = vmatprep.subr.mxu0 0.0
    %1403 = vmatpush1.msra.mxu0 0.0
    %1404 = vmatprep.subr.mxu0 0.0
    %1405 = vmatpush1.msra.mxu0 0.0
    %1406 = vmatprep.subr.mxu0 0.0
    %1407 = vmatpush1.msra.mxu0 0.0
    %1408 = vmatprep.subr.mxu0 0.0
    %v1409 = vand.u32 %v60, 4294901760
    %v1410 = vsub.f32 %v60, %v1409
    %v1411 = vand.u32 %v1410, 4294901760
    %1412 = vmatpush1.msra.mxu0 %v1411
    %1413 = vmatprep.subr.mxu0 0.0
    %1414 = vmatpush2.msra.mxu0 0.0
    %1415 = vmatprep.subr.mxu0 0.0
    %1416 = vmatpush2.msra.mxu0 0.0
    %1417 = vmatprep.subr.mxu0 0.0
    %1418 = vmatpush2.msra.mxu0 0.0
    %1419 = vmatprep.subr.mxu0 0.0
    %1420 = vmatpush2.msra.mxu0 0.0
    %1421 = vmatprep.subr.mxu0 0.0
    %1422 = vmatpush2.msra.mxu0 0.0
    %1423 = vmatprep.subr.mxu0 0.0
    %1424 = vmatpush2.msra.mxu0 0.0
    %1425 = vmatprep.subr.mxu0 0.0
    %1426 = vmatpush2.msra.mxu0 0.0
    %1427 = vmatprep.subr.mxu0 0.0
    %1428 = vmatpush2.msra.mxu0 0.0
    %1429 = vmatprep.subr.mxu0 0.0
    %1430 = vmatpush2.msra.mxu0 0.0
    %1431 = vmatprep.subr.mxu0 0.0
    %1432 = vmatpush2.msra.mxu0 0.0
    %1433 = vmatprep.subr.mxu0 0.0
    %1434 = vmatpush2.msra.mxu0 0.0
    %1435 = vmatprep.subr.mxu0 0.0
    %1436 = vmatpush2.msra.mxu0 0.0
    %1437 = vmatprep.subr.mxu0 0.0
    %1438 = vmatpush2.msra.mxu0 0.0
    %1439 = vmatprep.subr.mxu0 0.0
    %1440 = vmatpush2.msra.mxu0 0.0
    %1441 = vmatprep.subr.mxu0 0.0
    %1442 = vmatpush2.msra.mxu0 0.0
    %1443 = vmatprep.subr.mxu0 0.0
    %1444 = vmatpush2.msra.mxu0 0.0
    %1445 = vmatprep.mubr.f32.mxu0 0.0
    %v1446 = vand.u32 %v1076, 4294901760
    %1447 = vmatmul.mubr.f32.gmra.mxu0 %v1446
    %v1448 = vpop.f32.mrf.mxu0
    %v1449 = vadd.f32 %v1375, %v1448
    %v1450 = vpop.f32.mrf.mxu0
    %1451 = vdwg.mxu0
    %1452 = vmatprep.subr.mxu0 0.0
    %1453 = vmatpush1.msra.mxu0 0.0
    %1454 = vmatprep.subr.mxu0 0.0
    %1455 = vmatpush1.msra.mxu0 0.0
    %1456 = vmatprep.subr.mxu0 0.0
    %1457 = vmatpush1.msra.mxu0 0.0
    %1458 = vmatprep.subr.mxu0 0.0
    %1459 = vmatpush1.msra.mxu0 0.0
    %1460 = vmatprep.subr.mxu0 0.0
    %1461 = vmatpush1.msra.mxu0 0.0
    %1462 = vmatprep.subr.mxu0 0.0
    %1463 = vmatpush1.msra.mxu0 0.0
    %1464 = vmatprep.subr.mxu0 0.0
    %1465 = vmatpush1.msra.mxu0 0.0
    %1466 = vmatprep.subr.mxu0 0.0
    %1467 = vmatpush1.msra.mxu0 0.0
    %1468 = vmatprep.subr.mxu0 0.0
    %1469 = vmatpush1.msra.mxu0 0.0
    %1470 = vmatprep.subr.mxu0 0.0
    %1471 = vmatpush1.msra.mxu0 0.0
    %1472 = vmatprep.subr.mxu0 0.0
    %1473 = vmatpush1.msra.mxu0 0.0
    %1474 = vmatprep.subr.mxu0 0.0
    %1475 = vmatpush1.msra.mxu0 0.0
    %1476 = vmatprep.subr.mxu0 0.0
    %1477 = vmatpush1.msra.mxu0 0.0
    %1478 = vmatprep.subr.mxu0 0.0
    %1479 = vmatpush1.msra.mxu0 0.0
    %1480 = vmatprep.subr.mxu0 0.0
    %1481 = vmatpush1.msra.mxu0 0.0
    %1482 = vmatprep.subr.mxu0 0.0
    %v1483 = vand.u32 %v60, 4294901760
    %1484 = vmatpush1.msra.mxu0 %v1483
    %1485 = vmatprep.subr.mxu0 0.0
    %1486 = vmatpush2.msra.mxu0 0.0
    %1487 = vmatprep.subr.mxu0 0.0
    %1488 = vmatpush2.msra.mxu0 0.0
    %1489 = vmatprep.subr.mxu0 0.0
    %1490 = vmatpush2.msra.mxu0 0.0
    %1491 = vmatprep.subr.mxu0 0.0
    %1492 = vmatpush2.msra.mxu0 0.0
    %1493 = vmatprep.subr.mxu0 0.0
    %1494 = vmatpush2.msra.mxu0 0.0
    %1495 = vmatprep.subr.mxu0 0.0
    %1496 = vmatpush2.msra.mxu0 0.0
    %1497 = vmatprep.subr.mxu0 0.0
    %1498 = vmatpush2.msra.mxu0 0.0
    %1499 = vmatprep.subr.mxu0 0.0
    %1500 = vmatpush2.msra.mxu0 0.0
    %1501 = vmatprep.subr.mxu0 0.0
    %1502 = vmatpush2.msra.mxu0 0.0
    %1503 = vmatprep.subr.mxu0 0.0
    %1504 = vmatpush2.msra.mxu0 0.0
    %1505 = vmatprep.subr.mxu0 0.0
    %1506 = vmatpush2.msra.mxu0 0.0
    %1507 = vmatprep.subr.mxu0 0.0
    %1508 = vmatpush2.msra.mxu0 0.0
    %1509 = vmatprep.subr.mxu0 0.0
    %1510 = vmatpush2.msra.mxu0 0.0
    %1511 = vmatprep.subr.mxu0 0.0
    %1512 = vmatpush2.msra.mxu0 0.0
    %1513 = vmatprep.subr.mxu0 0.0
    %1514 = vmatpush2.msra.mxu0 0.0
    %1515 = vmatprep.subr.mxu0 0.0
    %1516 = vmatpush2.msra.mxu0 0.0
    %1517 = vmatprep.mubr.f32.mxu0 0.0
    %v1518 = vand.u32 %v1076, 4294901760
    %1519 = vmatmul.mubr.f32.gmra.mxu0 %v1518
    %v1520 = vpop.f32.mrf.mxu0
    %v1521 = vadd.f32 %v1449, %v1520
    %v1522 = vpop.f32.mrf.mxu0
    %1523 = vdwg.mxu0
    %v1524 = vadd.f32 %v1037, %v1521
    %s1525 = sadd.s32 %s18, 24
    %s1526 = scalar_lea.vmem %s1, %s1525
    %v1527 = vld [vmem:[%s1526] sm:$0xff]
    %1528 = vxpose.xlu0.b32.start [1/16] %v1527, 128
    %1529 = vxpose.xlu0.b32.cont [2/16] 0.0, 128
    %1530 = vxpose.xlu0.b32.cont [3/16] 0.0, 128
    %1531 = vxpose.xlu0.b32.cont [4/16] 0.0, 128
    %1532 = vxpose.xlu0.b32.cont [5/16] 0.0, 128
    %1533 = vxpose.xlu0.b32.cont [6/16] 0.0, 128
    %1534 = vxpose.xlu0.b32.cont [7/16] 0.0, 128
    %1535 = vxpose.xlu0.b32.cont [8/16] 0.0, 128
    %1536 = vxpose.xlu0.b32.cont [9/16] 0.0, 128
    %1537 = vxpose.xlu0.b32.cont [10/16] 0.0, 128
    %1538 = vxpose.xlu0.b32.cont [11/16] 0.0, 128
    %1539 = vxpose.xlu0.b32.cont [12/16] 0.0, 128
    %1540 = vxpose.xlu0.b32.cont [13/16] 0.0, 128
    %1541 = vxpose.xlu0.b32.cont [14/16] 0.0, 128
    %1542 = vxpose.xlu0.b32.cont [15/16] 0.0, 128
    %1543 = vxpose.xlu0.b32.end [16/16] 0.0, 128
    %v1544 = vpop.trf.xlu0
    %v1545 = vpop.trf.xlu0
    %v1546 = vpop.trf.xlu0
    %v1547 = vpop.trf.xlu0
    %v1548 = vpop.trf.xlu0
    %v1549 = vpop.trf.xlu0
    %v1550 = vpop.trf.xlu0
    %v1551 = vpop.trf.xlu0
    %v1552 = vpop.trf.xlu0
    %v1553 = vpop.trf.xlu0
    %v1554 = vpop.trf.xlu0
    %v1555 = vpop.trf.xlu0
    %v1556 = vpop.trf.xlu0
    %v1557 = vpop.trf.xlu0
    %v1558 = vpop.trf.xlu0
    %v1559 = vpop.trf.xlu0
    %v1561 = vsel %vm53, %v1544, 0
    %1563 = vmatprep.subr.mxu0 0.0
    %1564 = vmatpush1.msra.mxu0 0.0
    %1565 = vmatprep.subr.mxu0 0.0
    %1566 = vmatpush1.msra.mxu0 0.0
    %1567 = vmatprep.subr.mxu0 0.0
    %1568 = vmatpush1.msra.mxu0 0.0
    %1569 = vmatprep.subr.mxu0 0.0
    %1570 = vmatpush1.msra.mxu0 0.0
    %1571 = vmatprep.subr.mxu0 0.0
    %1572 = vmatpush1.msra.mxu0 0.0
    %1573 = vmatprep.subr.mxu0 0.0
    %1574 = vmatpush1.msra.mxu0 0.0
    %1575 = vmatprep.subr.mxu0 0.0
    %1576 = vmatpush1.msra.mxu0 0.0
    %1577 = vmatprep.subr.mxu0 0.0
    %1578 = vmatpush1.msra.mxu0 0.0
    %1579 = vmatprep.subr.mxu0 0.0
    %1580 = vmatpush1.msra.mxu0 0.0
    %1581 = vmatprep.subr.mxu0 0.0
    %1582 = vmatpush1.msra.mxu0 0.0
    %1583 = vmatprep.subr.mxu0 0.0
    %1584 = vmatpush1.msra.mxu0 0.0
    %1585 = vmatprep.subr.mxu0 0.0
    %1586 = vmatpush1.msra.mxu0 0.0
    %1587 = vmatprep.subr.mxu0 0.0
    %1588 = vmatpush1.msra.mxu0 0.0
    %1589 = vmatprep.subr.mxu0 0.0
    %1590 = vmatpush1.msra.mxu0 0.0
    %1591 = vmatprep.subr.mxu0 0.0
    %1592 = vmatpush1.msra.mxu0 0.0
    %1593 = vmatprep.subr.mxu0 0.0
    %v1594 = vand.u32 %v67, 4294901760
    %1595 = vmatpush1.msra.mxu0 %v1594
    %1596 = vmatprep.subr.mxu0 0.0
    %1597 = vmatpush2.msra.mxu0 0.0
    %1598 = vmatprep.subr.mxu0 0.0
    %1599 = vmatpush2.msra.mxu0 0.0
    %1600 = vmatprep.subr.mxu0 0.0
    %1601 = vmatpush2.msra.mxu0 0.0
    %1602 = vmatprep.subr.mxu0 0.0
    %1603 = vmatpush2.msra.mxu0 0.0
    %1604 = vmatprep.subr.mxu0 0.0
    %1605 = vmatpush2.msra.mxu0 0.0
    %1606 = vmatprep.subr.mxu0 0.0
    %1607 = vmatpush2.msra.mxu0 0.0
    %1608 = vmatprep.subr.mxu0 0.0
    %1609 = vmatpush2.msra.mxu0 0.0
    %1610 = vmatprep.subr.mxu0 0.0
    %1611 = vmatpush2.msra.mxu0 0.0
    %1612 = vmatprep.subr.mxu0 0.0
    %1613 = vmatpush2.msra.mxu0 0.0
    %1614 = vmatprep.subr.mxu0 0.0
    %1615 = vmatpush2.msra.mxu0 0.0
    %1616 = vmatprep.subr.mxu0 0.0
    %1617 = vmatpush2.msra.mxu0 0.0
    %1618 = vmatprep.subr.mxu0 0.0
    %1619 = vmatpush2.msra.mxu0 0.0
    %1620 = vmatprep.subr.mxu0 0.0
    %1621 = vmatpush2.msra.mxu0 0.0
    %1622 = vmatprep.subr.mxu0 0.0
    %1623 = vmatpush2.msra.mxu0 0.0
    %1624 = vmatprep.subr.mxu0 0.0
    %1625 = vmatpush2.msra.mxu0 0.0
    %1626 = vmatprep.subr.mxu0 0.0
    %1627 = vmatpush2.msra.mxu0 0.0
    %1628 = vmatprep.mubr.f32.mxu0 0.0
    %v1629 = vand.u32 %v1561, 4294901760
    %v1630 = vsub.f32 %v1561, %v1629
    %v1631 = vand.u32 %v1630, 4294901760
    %v1632 = vsub.f32 %v1630, %v1631
    %v1633 = vand.u32 %v1632, 4294901760
    %1634 = vmatmul.mubr.f32.gmra.mxu0 %v1633
    %v1635 = vpop.f32.mrf.mxu0
    %v1636 = vadd.f32 0.0, %v1635
    %v1637 = vpop.f32.mrf.mxu0
    %1638 = vdwg.mxu0
    %1639 = vmatprep.subr.mxu0 0.0
    %1640 = vmatpush1.msra.mxu0 0.0
    %1641 = vmatprep.subr.mxu0 0.0
    %1642 = vmatpush1.msra.mxu0 0.0
    %1643 = vmatprep.subr.mxu0 0.0
    %1644 = vmatpush1.msra.mxu0 0.0
    %1645 = vmatprep.subr.mxu0 0.0
    %1646 = vmatpush1.msra.mxu0 0.0
    %1647 = vmatprep.subr.mxu0 0.0
    %1648 = vmatpush1.msra.mxu0 0.0
    %1649 = vmatprep.subr.mxu0 0.0
    %1650 = vmatpush1.msra.mxu0 0.0
    %1651 = vmatprep.subr.mxu0 0.0
    %1652 = vmatpush1.msra.mxu0 0.0
    %1653 = vmatprep.subr.mxu0 0.0
    %1654 = vmatpush1.msra.mxu0 0.0
    %1655 = vmatprep.subr.mxu0 0.0
    %1656 = vmatpush1.msra.mxu0 0.0
    %1657 = vmatprep.subr.mxu0 0.0
    %1658 = vmatpush1.msra.mxu0 0.0
    %1659 = vmatprep.subr.mxu0 0.0
    %1660 = vmatpush1.msra.mxu0 0.0
    %1661 = vmatprep.subr.mxu0 0.0
    %1662 = vmatpush1.msra.mxu0 0.0
    %1663 = vmatprep.subr.mxu0 0.0
    %1664 = vmatpush1.msra.mxu0 0.0
    %1665 = vmatprep.subr.mxu0 0.0
    %1666 = vmatpush1.msra.mxu0 0.0
    %1667 = vmatprep.subr.mxu0 0.0
    %1668 = vmatpush1.msra.mxu0 0.0
    %1669 = vmatprep.subr.mxu0 0.0
    %v1670 = vand.u32 %v67, 4294901760
    %v1671 = vsub.f32 %v67, %v1670
    %v1672 = vand.u32 %v1671, 4294901760
    %v1673 = vsub.f32 %v1671, %v1672
    %v1674 = vand.u32 %v1673, 4294901760
    %1675 = vmatpush1.msra.mxu0 %v1674
    %1676 = vmatprep.subr.mxu0 0.0
    %1677 = vmatpush2.msra.mxu0 0.0
    %1678 = vmatprep.subr.mxu0 0.0
    %1679 = vmatpush2.msra.mxu0 0.0
    %1680 = vmatprep.subr.mxu0 0.0
    %1681 = vmatpush2.msra.mxu0 0.0
    %1682 = vmatprep.subr.mxu0 0.0
    %1683 = vmatpush2.msra.mxu0 0.0
    %1684 = vmatprep.subr.mxu0 0.0
    %1685 = vmatpush2.msra.mxu0 0.0
    %1686 = vmatprep.subr.mxu0 0.0
    %1687 = vmatpush2.msra.mxu0 0.0
    %1688 = vmatprep.subr.mxu0 0.0
    %1689 = vmatpush2.msra.mxu0 0.0
    %1690 = vmatprep.subr.mxu0 0.0
    %1691 = vmatpush2.msra.mxu0 0.0
    %1692 = vmatprep.subr.mxu0 0.0
    %1693 = vmatpush2.msra.mxu0 0.0
    %1694 = vmatprep.subr.mxu0 0.0
    %1695 = vmatpush2.msra.mxu0 0.0
    %1696 = vmatprep.subr.mxu0 0.0
    %1697 = vmatpush2.msra.mxu0 0.0
    %1698 = vmatprep.subr.mxu0 0.0
    %1699 = vmatpush2.msra.mxu0 0.0
    %1700 = vmatprep.subr.mxu0 0.0
    %1701 = vmatpush2.msra.mxu0 0.0
    %1702 = vmatprep.subr.mxu0 0.0
    %1703 = vmatpush2.msra.mxu0 0.0
    %1704 = vmatprep.subr.mxu0 0.0
    %1705 = vmatpush2.msra.mxu0 0.0
    %1706 = vmatprep.subr.mxu0 0.0
    %1707 = vmatpush2.msra.mxu0 0.0
    %1708 = vmatprep.mubr.f32.mxu0 0.0
    %v1709 = vand.u32 %v1561, 4294901760
    %1710 = vmatmul.mubr.f32.gmra.mxu0 %v1709
    %v1711 = vpop.f32.mrf.mxu0
    %v1712 = vadd.f32 %v1636, %v1711
    %v1713 = vpop.f32.mrf.mxu0
    %1714 = vdwg.mxu0
    %1715 = vmatprep.subr.mxu0 0.0
    %1716 = vmatpush1.msra.mxu0 0.0
    %1717 = vmatprep.subr.mxu0 0.0
    %1718 = vmatpush1.msra.mxu0 0.0
    %1719 = vmatprep.subr.mxu0 0.0
    %1720 = vmatpush1.msra.mxu0 0.0
    %1721 = vmatprep.subr.mxu0 0.0
    %1722 = vmatpush1.msra.mxu0 0.0
    %1723 = vmatprep.subr.mxu0 0.0
    %1724 = vmatpush1.msra.mxu0 0.0
    %1725 = vmatprep.subr.mxu0 0.0
    %1726 = vmatpush1.msra.mxu0 0.0
    %1727 = vmatprep.subr.mxu0 0.0
    %1728 = vmatpush1.msra.mxu0 0.0
    %1729 = vmatprep.subr.mxu0 0.0
    %1730 = vmatpush1.msra.mxu0 0.0
    %1731 = vmatprep.subr.mxu0 0.0
    %1732 = vmatpush1.msra.mxu0 0.0
    %1733 = vmatprep.subr.mxu0 0.0
    %1734 = vmatpush1.msra.mxu0 0.0
    %1735 = vmatprep.subr.mxu0 0.0
    %1736 = vmatpush1.msra.mxu0 0.0
    %1737 = vmatprep.subr.mxu0 0.0
    %1738 = vmatpush1.msra.mxu0 0.0
    %1739 = vmatprep.subr.mxu0 0.0
    %1740 = vmatpush1.msra.mxu0 0.0
    %1741 = vmatprep.subr.mxu0 0.0
    %1742 = vmatpush1.msra.mxu0 0.0
    %1743 = vmatprep.subr.mxu0 0.0
    %1744 = vmatpush1.msra.mxu0 0.0
    %1745 = vmatprep.subr.mxu0 0.0
    %v1746 = vand.u32 %v67, 4294901760
    %v1747 = vsub.f32 %v67, %v1746
    %1748 = vmatpush1.msra.mxu0 %v1747
    %1749 = vmatprep.subr.mxu0 0.0
    %1750 = vmatpush2.msra.mxu0 0.0
    %1751 = vmatprep.subr.mxu0 0.0
    %1752 = vmatpush2.msra.mxu0 0.0
    %1753 = vmatprep.subr.mxu0 0.0
    %1754 = vmatpush2.msra.mxu0 0.0
    %1755 = vmatprep.subr.mxu0 0.0
    %1756 = vmatpush2.msra.mxu0 0.0
    %1757 = vmatprep.subr.mxu0 0.0
    %1758 = vmatpush2.msra.mxu0 0.0
    %1759 = vmatprep.subr.mxu0 0.0
    %1760 = vmatpush2.msra.mxu0 0.0
    %1761 = vmatprep.subr.mxu0 0.0
    %1762 = vmatpush2.msra.mxu0 0.0
    %1763 = vmatprep.subr.mxu0 0.0
    %1764 = vmatpush2.msra.mxu0 0.0
    %1765 = vmatprep.subr.mxu0 0.0
    %1766 = vmatpush2.msra.mxu0 0.0
    %1767 = vmatprep.subr.mxu0 0.0
    %1768 = vmatpush2.msra.mxu0 0.0
    %1769 = vmatprep.subr.mxu0 0.0
    %1770 = vmatpush2.msra.mxu0 0.0
    %1771 = vmatprep.subr.mxu0 0.0
    %1772 = vmatpush2.msra.mxu0 0.0
    %1773 = vmatprep.subr.mxu0 0.0
    %1774 = vmatpush2.msra.mxu0 0.0
    %1775 = vmatprep.subr.mxu0 0.0
    %1776 = vmatpush2.msra.mxu0 0.0
    %1777 = vmatprep.subr.mxu0 0.0
    %1778 = vmatpush2.msra.mxu0 0.0
    %1779 = vmatprep.subr.mxu0 0.0
    %1780 = vmatpush2.msra.mxu0 0.0
    %1781 = vmatprep.mubr.f32.mxu0 0.0
    %v1782 = vand.u32 %v1561, 4294901760
    %v1783 = vsub.f32 %v1561, %v1782
    %1784 = vmatmul.mubr.f32.gmra.mxu0 %v1783
    %v1785 = vpop.f32.mrf.mxu0
    %v1786 = vadd.f32 %v1712, %v1785
    %v1787 = vpop.f32.mrf.mxu0
    %1788 = vdwg.mxu0
    %1789 = vmatprep.subr.mxu0 0.0
    %1790 = vmatpush1.msra.mxu0 0.0
    %1791 = vmatprep.subr.mxu0 0.0
    %1792 = vmatpush1.msra.mxu0 0.0
    %1793 = vmatprep.subr.mxu0 0.0
    %1794 = vmatpush1.msra.mxu0 0.0
    %1795 = vmatprep.subr.mxu0 0.0
    %1796 = vmatpush1.msra.mxu0 0.0
    %1797 = vmatprep.subr.mxu0 0.0
    %1798 = vmatpush1.msra.mxu0 0.0
    %1799 = vmatprep.subr.mxu0 0.0
    %1800 = vmatpush1.msra.mxu0 0.0
    %1801 = vmatprep.subr.mxu0 0.0
    %1802 = vmatpush1.msra.mxu0 0.0
    %1803 = vmatprep.subr.mxu0 0.0
    %1804 = vmatpush1.msra.mxu0 0.0
    %1805 = vmatprep.subr.mxu0 0.0
    %1806 = vmatpush1.msra.mxu0 0.0
    %1807 = vmatprep.subr.mxu0 0.0
    %1808 = vmatpush1.msra.mxu0 0.0
    %1809 = vmatprep.subr.mxu0 0.0
    %1810 = vmatpush1.msra.mxu0 0.0
    %1811 = vmatprep.subr.mxu0 0.0
    %1812 = vmatpush1.msra.mxu0 0.0
    %1813 = vmatprep.subr.mxu0 0.0
    %1814 = vmatpush1.msra.mxu0 0.0
    %1815 = vmatprep.subr.mxu0 0.0
    %1816 = vmatpush1.msra.mxu0 0.0
    %1817 = vmatprep.subr.mxu0 0.0
    %1818 = vmatpush1.msra.mxu0 0.0
    %1819 = vmatprep.subr.mxu0 0.0
    %v1820 = vand.u32 %v67, 4294901760
    %1821 = vmatpush1.msra.mxu0 %v1820
    %1822 = vmatprep.subr.mxu0 0.0
    %1823 = vmatpush2.msra.mxu0 0.0
    %1824 = vmatprep.subr.mxu0 0.0
    %1825 = vmatpush2.msra.mxu0 0.0
    %1826 = vmatprep.subr.mxu0 0.0
    %1827 = vmatpush2.msra.mxu0 0.0
    %1828 = vmatprep.subr.mxu0 0.0
    %1829 = vmatpush2.msra.mxu0 0.0
    %1830 = vmatprep.subr.mxu0 0.0
    %1831 = vmatpush2.msra.mxu0 0.0
    %1832 = vmatprep.subr.mxu0 0.0
    %1833 = vmatpush2.msra.mxu0 0.0
    %1834 = vmatprep.subr.mxu0 0.0
    %1835 = vmatpush2.msra.mxu0 0.0
    %1836 = vmatprep.subr.mxu0 0.0
    %1837 = vmatpush2.msra.mxu0 0.0
    %1838 = vmatprep.subr.mxu0 0.0
    %1839 = vmatpush2.msra.mxu0 0.0
    %1840 = vmatprep.subr.mxu0 0.0
    %1841 = vmatpush2.msra.mxu0 0.0
    %1842 = vmatprep.subr.mxu0 0.0
    %1843 = vmatpush2.msra.mxu0 0.0
    %1844 = vmatprep.subr.mxu0 0.0
    %1845 = vmatpush2.msra.mxu0 0.0
    %1846 = vmatprep.subr.mxu0 0.0
    %1847 = vmatpush2.msra.mxu0 0.0
    %1848 = vmatprep.subr.mxu0 0.0
    %1849 = vmatpush2.msra.mxu0 0.0
    %1850 = vmatprep.subr.mxu0 0.0
    %1851 = vmatpush2.msra.mxu0 0.0
    %1852 = vmatprep.subr.mxu0 0.0
    %1853 = vmatpush2.msra.mxu0 0.0
    %1854 = vmatprep.mubr.f32.mxu0 0.0
    %v1855 = vand.u32 %v1561, 4294901760
    %v1856 = vsub.f32 %v1561, %v1855
    %v1857 = vand.u32 %v1856, 4294901760
    %1858 = vmatmul.mubr.f32.gmra.mxu0 %v1857
    %v1859 = vpop.f32.mrf.mxu0
    %v1860 = vadd.f32 %v1786, %v1859
    %v1861 = vpop.f32.mrf.mxu0
    %1862 = vdwg.mxu0
    %1863 = vmatprep.subr.mxu0 0.0
    %1864 = vmatpush1.msra.mxu0 0.0
    %1865 = vmatprep.subr.mxu0 0.0
    %1866 = vmatpush1.msra.mxu0 0.0
    %1867 = vmatprep.subr.mxu0 0.0
    %1868 = vmatpush1.msra.mxu0 0.0
    %1869 = vmatprep.subr.mxu0 0.0
    %1870 = vmatpush1.msra.mxu0 0.0
    %1871 = vmatprep.subr.mxu0 0.0
    %1872 = vmatpush1.msra.mxu0 0.0
    %1873 = vmatprep.subr.mxu0 0.0
    %1874 = vmatpush1.msra.mxu0 0.0
    %1875 = vmatprep.subr.mxu0 0.0
    %1876 = vmatpush1.msra.mxu0 0.0
    %1877 = vmatprep.subr.mxu0 0.0
    %1878 = vmatpush1.msra.mxu0 0.0
    %1879 = vmatprep.subr.mxu0 0.0
    %1880 = vmatpush1.msra.mxu0 0.0
    %1881 = vmatprep.subr.mxu0 0.0
    %1882 = vmatpush1.msra.mxu0 0.0
    %1883 = vmatprep.subr.mxu0 0.0
    %1884 = vmatpush1.msra.mxu0 0.0
    %1885 = vmatprep.subr.mxu0 0.0
    %1886 = vmatpush1.msra.mxu0 0.0
    %1887 = vmatprep.subr.mxu0 0.0
    %1888 = vmatpush1.msra.mxu0 0.0
    %1889 = vmatprep.subr.mxu0 0.0
    %1890 = vmatpush1.msra.mxu0 0.0
    %1891 = vmatprep.subr.mxu0 0.0
    %1892 = vmatpush1.msra.mxu0 0.0
    %1893 = vmatprep.subr.mxu0 0.0
    %v1894 = vand.u32 %v67, 4294901760
    %v1895 = vsub.f32 %v67, %v1894
    %v1896 = vand.u32 %v1895, 4294901760
    %1897 = vmatpush1.msra.mxu0 %v1896
    %1898 = vmatprep.subr.mxu0 0.0
    %1899 = vmatpush2.msra.mxu0 0.0
    %1900 = vmatprep.subr.mxu0 0.0
    %1901 = vmatpush2.msra.mxu0 0.0
    %1902 = vmatprep.subr.mxu0 0.0
    %1903 = vmatpush2.msra.mxu0 0.0
    %1904 = vmatprep.subr.mxu0 0.0
    %1905 = vmatpush2.msra.mxu0 0.0
    %1906 = vmatprep.subr.mxu0 0.0
    %1907 = vmatpush2.msra.mxu0 0.0
    %1908 = vmatprep.subr.mxu0 0.0
    %1909 = vmatpush2.msra.mxu0 0.0
    %1910 = vmatprep.subr.mxu0 0.0
    %1911 = vmatpush2.msra.mxu0 0.0
    %1912 = vmatprep.subr.mxu0 0.0
    %1913 = vmatpush2.msra.mxu0 0.0
    %1914 = vmatprep.subr.mxu0 0.0
    %1915 = vmatpush2.msra.mxu0 0.0
    %1916 = vmatprep.subr.mxu0 0.0
    %1917 = vmatpush2.msra.mxu0 0.0
    %1918 = vmatprep.subr.mxu0 0.0
    %1919 = vmatpush2.msra.mxu0 0.0
    %1920 = vmatprep.subr.mxu0 0.0
    %1921 = vmatpush2.msra.mxu0 0.0
    %1922 = vmatprep.subr.mxu0 0.0
    %1923 = vmatpush2.msra.mxu0 0.0
    %1924 = vmatprep.subr.mxu0 0.0
    %1925 = vmatpush2.msra.mxu0 0.0
    %1926 = vmatprep.subr.mxu0 0.0
    %1927 = vmatpush2.msra.mxu0 0.0
    %1928 = vmatprep.subr.mxu0 0.0
    %1929 = vmatpush2.msra.mxu0 0.0
    %1930 = vmatprep.mubr.f32.mxu0 0.0
    %v1931 = vand.u32 %v1561, 4294901760
    %1932 = vmatmul.mubr.f32.gmra.mxu0 %v1931
    %v1933 = vpop.f32.mrf.mxu0
    %v1934 = vadd.f32 %v1860, %v1933
    %v1935 = vpop.f32.mrf.mxu0
    %1936 = vdwg.mxu0
    %1937 = vmatprep.subr.mxu0 0.0
    %1938 = vmatpush1.msra.mxu0 0.0
    %1939 = vmatprep.subr.mxu0 0.0
    %1940 = vmatpush1.msra.mxu0 0.0
    %1941 = vmatprep.subr.mxu0 0.0
    %1942 = vmatpush1.msra.mxu0 0.0
    %1943 = vmatprep.subr.mxu0 0.0
    %1944 = vmatpush1.msra.mxu0 0.0
    %1945 = vmatprep.subr.mxu0 0.0
    %1946 = vmatpush1.msra.mxu0 0.0
    %1947 = vmatprep.subr.mxu0 0.0
    %1948 = vmatpush1.msra.mxu0 0.0
    %1949 = vmatprep.subr.mxu0 0.0
    %1950 = vmatpush1.msra.mxu0 0.0
    %1951 = vmatprep.subr.mxu0 0.0
    %1952 = vmatpush1.msra.mxu0 0.0
    %1953 = vmatprep.subr.mxu0 0.0
    %1954 = vmatpush1.msra.mxu0 0.0
    %1955 = vmatprep.subr.mxu0 0.0
    %1956 = vmatpush1.msra.mxu0 0.0
    %1957 = vmatprep.subr.mxu0 0.0
    %1958 = vmatpush1.msra.mxu0 0.0
    %1959 = vmatprep.subr.mxu0 0.0
    %1960 = vmatpush1.msra.mxu0 0.0
    %1961 = vmatprep.subr.mxu0 0.0
    %1962 = vmatpush1.msra.mxu0 0.0
    %1963 = vmatprep.subr.mxu0 0.0
    %1964 = vmatpush1.msra.mxu0 0.0
    %1965 = vmatprep.subr.mxu0 0.0
    %1966 = vmatpush1.msra.mxu0 0.0
    %1967 = vmatprep.subr.mxu0 0.0
    %v1968 = vand.u32 %v67, 4294901760
    %1969 = vmatpush1.msra.mxu0 %v1968
    %1970 = vmatprep.subr.mxu0 0.0
    %1971 = vmatpush2.msra.mxu0 0.0
    %1972 = vmatprep.subr.mxu0 0.0
    %1973 = vmatpush2.msra.mxu0 0.0
    %1974 = vmatprep.subr.mxu0 0.0
    %1975 = vmatpush2.msra.mxu0 0.0
    %1976 = vmatprep.subr.mxu0 0.0
    %1977 = vmatpush2.msra.mxu0 0.0
    %1978 = vmatprep.subr.mxu0 0.0
    %1979 = vmatpush2.msra.mxu0 0.0
    %1980 = vmatprep.subr.mxu0 0.0
    %1981 = vmatpush2.msra.mxu0 0.0
    %1982 = vmatprep.subr.mxu0 0.0
    %1983 = vmatpush2.msra.mxu0 0.0
    %1984 = vmatprep.subr.mxu0 0.0
    %1985 = vmatpush2.msra.mxu0 0.0
    %1986 = vmatprep.subr.mxu0 0.0
    %1987 = vmatpush2.msra.mxu0 0.0
    %1988 = vmatprep.subr.mxu0 0.0
    %1989 = vmatpush2.msra.mxu0 0.0
    %1990 = vmatprep.subr.mxu0 0.0
    %1991 = vmatpush2.msra.mxu0 0.0
    %1992 = vmatprep.subr.mxu0 0.0
    %1993 = vmatpush2.msra.mxu0 0.0
    %1994 = vmatprep.subr.mxu0 0.0
    %1995 = vmatpush2.msra.mxu0 0.0
    %1996 = vmatprep.subr.mxu0 0.0
    %1997 = vmatpush2.msra.mxu0 0.0
    %1998 = vmatprep.subr.mxu0 0.0
    %1999 = vmatpush2.msra.mxu0 0.0
    %2000 = vmatprep.subr.mxu0 0.0
    %2001 = vmatpush2.msra.mxu0 0.0
    %2002 = vmatprep.mubr.f32.mxu0 0.0
    %v2003 = vand.u32 %v1561, 4294901760
    %2004 = vmatmul.mubr.f32.gmra.mxu0 %v2003
    %v2005 = vpop.f32.mrf.mxu0
    %v2006 = vadd.f32 %v1934, %v2005
    %v2007 = vpop.f32.mrf.mxu0
    %2008 = vdwg.mxu0
    %v2009 = vadd.f32 %v1524, %v2006
    %s2010 = sadd.s32 %s18, 32
    %s2011 = scalar_lea.vmem %s1, %s2010
    %v2012 = vld [vmem:[%s2011] sm:$0xff]
    %2013 = vxpose.xlu0.b32.start [1/16] %v2012, 128
    %2014 = vxpose.xlu0.b32.cont [2/16] 0.0, 128
    %2015 = vxpose.xlu0.b32.cont [3/16] 0.0, 128
    %2016 = vxpose.xlu0.b32.cont [4/16] 0.0, 128
    %2017 = vxpose.xlu0.b32.cont [5/16] 0.0, 128
    %2018 = vxpose.xlu0.b32.cont [6/16] 0.0, 128
    %2019 = vxpose.xlu0.b32.cont [7/16] 0.0, 128
    %2020 = vxpose.xlu0.b32.cont [8/16] 0.0, 128
    %2021 = vxpose.xlu0.b32.cont [9/16] 0.0, 128
    %2022 = vxpose.xlu0.b32.cont [10/16] 0.0, 128
    %2023 = vxpose.xlu0.b32.cont [11/16] 0.0, 128
    %2024 = vxpose.xlu0.b32.cont [12/16] 0.0, 128
    %2025 = vxpose.xlu0.b32.cont [13/16] 0.0, 128
    %2026 = vxpose.xlu0.b32.cont [14/16] 0.0, 128
    %2027 = vxpose.xlu0.b32.cont [15/16] 0.0, 128
    %2028 = vxpose.xlu0.b32.end [16/16] 0.0, 128
    %v2029 = vpop.trf.xlu0
    %v2030 = vpop.trf.xlu0
    %v2031 = vpop.trf.xlu0
    %v2032 = vpop.trf.xlu0
    %v2033 = vpop.trf.xlu0
    %v2034 = vpop.trf.xlu0
    %v2035 = vpop.trf.xlu0
    %v2036 = vpop.trf.xlu0
    %v2037 = vpop.trf.xlu0
    %v2038 = vpop.trf.xlu0
    %v2039 = vpop.trf.xlu0
    %v2040 = vpop.trf.xlu0
    %v2041 = vpop.trf.xlu0
    %v2042 = vpop.trf.xlu0
    %v2043 = vpop.trf.xlu0
    %v2044 = vpop.trf.xlu0
    %v2046 = vsel %vm53, %v2029, 0
    %2048 = vmatprep.subr.mxu0 0.0
    %2049 = vmatpush1.msra.mxu0 0.0
    %2050 = vmatprep.subr.mxu0 0.0
    %2051 = vmatpush1.msra.mxu0 0.0
    %2052 = vmatprep.subr.mxu0 0.0
    %2053 = vmatpush1.msra.mxu0 0.0
    %2054 = vmatprep.subr.mxu0 0.0
    %2055 = vmatpush1.msra.mxu0 0.0
    %2056 = vmatprep.subr.mxu0 0.0
    %2057 = vmatpush1.msra.mxu0 0.0
    %2058 = vmatprep.subr.mxu0 0.0
    %2059 = vmatpush1.msra.mxu0 0.0
    %2060 = vmatprep.subr.mxu0 0.0
    %2061 = vmatpush1.msra.mxu0 0.0
    %2062 = vmatprep.subr.mxu0 0.0
    %2063 = vmatpush1.msra.mxu0 0.0
    %2064 = vmatprep.subr.mxu0 0.0
    %2065 = vmatpush1.msra.mxu0 0.0
    %2066 = vmatprep.subr.mxu0 0.0
    %2067 = vmatpush1.msra.mxu0 0.0
    %2068 = vmatprep.subr.mxu0 0.0
    %2069 = vmatpush1.msra.mxu0 0.0
    %2070 = vmatprep.subr.mxu0 0.0
    %2071 = vmatpush1.msra.mxu0 0.0
    %2072 = vmatprep.subr.mxu0 0.0
    %2073 = vmatpush1.msra.mxu0 0.0
    %2074 = vmatprep.subr.mxu0 0.0
    %2075 = vmatpush1.msra.mxu0 0.0
    %2076 = vmatprep.subr.mxu0 0.0
    %2077 = vmatpush1.msra.mxu0 0.0
    %2078 = vmatprep.subr.mxu0 0.0
    %v2079 = vand.u32 %v19, 4294901760
    %2080 = vmatpush1.msra.mxu0 %v2079
    %2081 = vmatprep.subr.mxu0 0.0
    %2082 = vmatpush2.msra.mxu0 0.0
    %2083 = vmatprep.subr.mxu0 0.0
    %2084 = vmatpush2.msra.mxu0 0.0
    %2085 = vmatprep.subr.mxu0 0.0
    %2086 = vmatpush2.msra.mxu0 0.0
    %2087 = vmatprep.subr.mxu0 0.0
    %2088 = vmatpush2.msra.mxu0 0.0
    %2089 = vmatprep.subr.mxu0 0.0
    %2090 = vmatpush2.msra.mxu0 0.0
    %2091 = vmatprep.subr.mxu0 0.0
    %2092 = vmatpush2.msra.mxu0 0.0
    %2093 = vmatprep.subr.mxu0 0.0
    %2094 = vmatpush2.msra.mxu0 0.0
    %2095 = vmatprep.subr.mxu0 0.0
    %2096 = vmatpush2.msra.mxu0 0.0
    %2097 = vmatprep.subr.mxu0 0.0
    %2098 = vmatpush2.msra.mxu0 0.0
    %2099 = vmatprep.subr.mxu0 0.0
    %2100 = vmatpush2.msra.mxu0 0.0
    %2101 = vmatprep.subr.mxu0 0.0
    %2102 = vmatpush2.msra.mxu0 0.0
    %2103 = vmatprep.subr.mxu0 0.0
    %2104 = vmatpush2.msra.mxu0 0.0
    %2105 = vmatprep.subr.mxu0 0.0
    %2106 = vmatpush2.msra.mxu0 0.0
    %2107 = vmatprep.subr.mxu0 0.0
    %2108 = vmatpush2.msra.mxu0 0.0
    %2109 = vmatprep.subr.mxu0 0.0
    %2110 = vmatpush2.msra.mxu0 0.0
    %2111 = vmatprep.subr.mxu0 0.0
    %2112 = vmatpush2.msra.mxu0 0.0
    %2113 = vmatprep.mubr.f32.mxu0 0.0
    %v2114 = vand.u32 %v2046, 4294901760
    %v2115 = vsub.f32 %v2046, %v2114
    %v2116 = vand.u32 %v2115, 4294901760
    %v2117 = vsub.f32 %v2115, %v2116
    %v2118 = vand.u32 %v2117, 4294901760
    %2119 = vmatmul.mubr.f32.gmra.mxu0 %v2118
    %v2120 = vpop.f32.mrf.mxu0
    %v2121 = vadd.f32 0.0, %v2120
    %v2122 = vpop.f32.mrf.mxu0
    %2123 = vdwg.mxu0
    %2124 = vmatprep.subr.mxu0 0.0
    %2125 = vmatpush1.msra.mxu0 0.0
    %2126 = vmatprep.subr.mxu0 0.0
    %2127 = vmatpush1.msra.mxu0 0.0
    %2128 = vmatprep.subr.mxu0 0.0
    %2129 = vmatpush1.msra.mxu0 0.0
    %2130 = vmatprep.subr.mxu0 0.0
    %2131 = vmatpush1.msra.mxu0 0.0
    %2132 = vmatprep.subr.mxu0 0.0
    %2133 = vmatpush1.msra.mxu0 0.0
    %2134 = vmatprep.subr.mxu0 0.0
    %2135 = vmatpush1.msra.mxu0 0.0
    %2136 = vmatprep.subr.mxu0 0.0
    %2137 = vmatpush1.msra.mxu0 0.0
    %2138 = vmatprep.subr.mxu0 0.0
    %2139 = vmatpush1.msra.mxu0 0.0
    %2140 = vmatprep.subr.mxu0 0.0
    %2141 = vmatpush1.msra.mxu0 0.0
    %2142 = vmatprep.subr.mxu0 0.0
    %2143 = vmatpush1.msra.mxu0 0.0
    %2144 = vmatprep.subr.mxu0 0.0
    %2145 = vmatpush1.msra.mxu0 0.0
    %2146 = vmatprep.subr.mxu0 0.0
    %2147 = vmatpush1.msra.mxu0 0.0
    %2148 = vmatprep.subr.mxu0 0.0
    %2149 = vmatpush1.msra.mxu0 0.0
    %2150 = vmatprep.subr.mxu0 0.0
    %2151 = vmatpush1.msra.mxu0 0.0
    %2152 = vmatprep.subr.mxu0 0.0
    %2153 = vmatpush1.msra.mxu0 0.0
    %2154 = vmatprep.subr.mxu0 0.0
    %v2155 = vand.u32 %v19, 4294901760
    %v2156 = vsub.f32 %v19, %v2155
    %v2157 = vand.u32 %v2156, 4294901760
    %v2158 = vsub.f32 %v2156, %v2157
    %v2159 = vand.u32 %v2158, 4294901760
    %2160 = vmatpush1.msra.mxu0 %v2159
    %2161 = vmatprep.subr.mxu0 0.0
    %2162 = vmatpush2.msra.mxu0 0.0
    %2163 = vmatprep.subr.mxu0 0.0
    %2164 = vmatpush2.msra.mxu0 0.0
    %2165 = vmatprep.subr.mxu0 0.0
    %2166 = vmatpush2.msra.mxu0 0.0
    %2167 = vmatprep.subr.mxu0 0.0
    %2168 = vmatpush2.msra.mxu0 0.0
    %2169 = vmatprep.subr.mxu0 0.0
    %2170 = vmatpush2.msra.mxu0 0.0
    %2171 = vmatprep.subr.mxu0 0.0
    %2172 = vmatpush2.msra.mxu0 0.0
    %2173 = vmatprep.subr.mxu0 0.0
    %2174 = vmatpush2.msra.mxu0 0.0
    %2175 = vmatprep.subr.mxu0 0.0
    %2176 = vmatpush2.msra.mxu0 0.0
    %2177 = vmatprep.subr.mxu0 0.0
    %2178 = vmatpush2.msra.mxu0 0.0
    %2179 = vmatprep.subr.mxu0 0.0
    %2180 = vmatpush2.msra.mxu0 0.0
    %2181 = vmatprep.subr.mxu0 0.0
    %2182 = vmatpush2.msra.mxu0 0.0
    %2183 = vmatprep.subr.mxu0 0.0
    %2184 = vmatpush2.msra.mxu0 0.0
    %2185 = vmatprep.subr.mxu0 0.0
    %2186 = vmatpush2.msra.mxu0 0.0
    %2187 = vmatprep.subr.mxu0 0.0
    %2188 = vmatpush2.msra.mxu0 0.0
    %2189 = vmatprep.subr.mxu0 0.0
    %2190 = vmatpush2.msra.mxu0 0.0
    %2191 = vmatprep.subr.mxu0 0.0
    %2192 = vmatpush2.msra.mxu0 0.0
    %2193 = vmatprep.mubr.f32.mxu0 0.0
    %v2194 = vand.u32 %v2046, 4294901760
    %2195 = vmatmul.mubr.f32.gmra.mxu0 %v2194
    %v2196 = vpop.f32.mrf.mxu0
    %v2197 = vadd.f32 %v2121, %v2196
    %v2198 = vpop.f32.mrf.mxu0
    %2199 = vdwg.mxu0
    %2200 = vmatprep.subr.mxu0 0.0
    %2201 = vmatpush1.msra.mxu0 0.0
    %2202 = vmatprep.subr.mxu0 0.0
    %2203 = vmatpush1.msra.mxu0 0.0
    %2204 = vmatprep.subr.mxu0 0.0
    %2205 = vmatpush1.msra.mxu0 0.0
    %2206 = vmatprep.subr.mxu0 0.0
    %2207 = vmatpush1.msra.mxu0 0.0
    %2208 = vmatprep.subr.mxu0 0.0
    %2209 = vmatpush1.msra.mxu0 0.0
    %2210 = vmatprep.subr.mxu0 0.0
    %2211 = vmatpush1.msra.mxu0 0.0
    %2212 = vmatprep.subr.mxu0 0.0
    %2213 = vmatpush1.msra.mxu0 0.0
    %2214 = vmatprep.subr.mxu0 0.0
    %2215 = vmatpush1.msra.mxu0 0.0
    %2216 = vmatprep.subr.mxu0 0.0
    %2217 = vmatpush1.msra.mxu0 0.0
    %2218 = vmatprep.subr.mxu0 0.0
    %2219 = vmatpush1.msra.mxu0 0.0
    %2220 = vmatprep.subr.mxu0 0.0
    %2221 = vmatpush1.msra.mxu0 0.0
    %2222 = vmatprep.subr.mxu0 0.0
    %2223 = vmatpush1.msra.mxu0 0.0
    %2224 = vmatprep.subr.mxu0 0.0
    %2225 = vmatpush1.msra.mxu0 0.0
    %2226 = vmatprep.subr.mxu0 0.0
    %2227 = vmatpush1.msra.mxu0 0.0
    %2228 = vmatprep.subr.mxu0 0.0
    %2229 = vmatpush1.msra.mxu0 0.0
    %2230 = vmatprep.subr.mxu0 0.0
    %v2231 = vand.u32 %v19, 4294901760
    %v2232 = vsub.f32 %v19, %v2231
    %2233 = vmatpush1.msra.mxu0 %v2232
    %2234 = vmatprep.subr.mxu0 0.0
    %2235 = vmatpush2.msra.mxu0 0.0
    %2236 = vmatprep.subr.mxu0 0.0
    %2237 = vmatpush2.msra.mxu0 0.0
    %2238 = vmatprep.subr.mxu0 0.0
    %2239 = vmatpush2.msra.mxu0 0.0
    %2240 = vmatprep.subr.mxu0 0.0
    %2241 = vmatpush2.msra.mxu0 0.0
    %2242 = vmatprep.subr.mxu0 0.0
    %2243 = vmatpush2.msra.mxu0 0.0
    %2244 = vmatprep.subr.mxu0 0.0
    %2245 = vmatpush2.msra.mxu0 0.0
    %2246 = vmatprep.subr.mxu0 0.0
    %2247 = vmatpush2.msra.mxu0 0.0
    %2248 = vmatprep.subr.mxu0 0.0
    %2249 = vmatpush2.msra.mxu0 0.0
    %2250 = vmatprep.subr.mxu0 0.0
    %2251 = vmatpush2.msra.mxu0 0.0
    %2252 = vmatprep.subr.mxu0 0.0
    %2253 = vmatpush2.msra.mxu0 0.0
    %2254 = vmatprep.subr.mxu0 0.0
    %2255 = vmatpush2.msra.mxu0 0.0
    %2256 = vmatprep.subr.mxu0 0.0
    %2257 = vmatpush2.msra.mxu0 0.0
    %2258 = vmatprep.subr.mxu0 0.0
    %2259 = vmatpush2.msra.mxu0 0.0
    %2260 = vmatprep.subr.mxu0 0.0
    %2261 = vmatpush2.msra.mxu0 0.0
    %2262 = vmatprep.subr.mxu0 0.0
    %2263 = vmatpush2.msra.mxu0 0.0
    %2264 = vmatprep.subr.mxu0 0.0
    %2265 = vmatpush2.msra.mxu0 0.0
    %2266 = vmatprep.mubr.f32.mxu0 0.0
    %v2267 = vand.u32 %v2046, 4294901760
    %v2268 = vsub.f32 %v2046, %v2267
    %2269 = vmatmul.mubr.f32.gmra.mxu0 %v2268
    %v2270 = vpop.f32.mrf.mxu0
    %v2271 = vadd.f32 %v2197, %v2270
    %v2272 = vpop.f32.mrf.mxu0
    %2273 = vdwg.mxu0
    %2274 = vmatprep.subr.mxu0 0.0
    %2275 = vmatpush1.msra.mxu0 0.0
    %2276 = vmatprep.subr.mxu0 0.0
    %2277 = vmatpush1.msra.mxu0 0.0
    %2278 = vmatprep.subr.mxu0 0.0
    %2279 = vmatpush1.msra.mxu0 0.0
    %2280 = vmatprep.subr.mxu0 0.0
    %2281 = vmatpush1.msra.mxu0 0.0
    %2282 = vmatprep.subr.mxu0 0.0
    %2283 = vmatpush1.msra.mxu0 0.0
    %2284 = vmatprep.subr.mxu0 0.0
    %2285 = vmatpush1.msra.mxu0 0.0
    %2286 = vmatprep.subr.mxu0 0.0
    %2287 = vmatpush1.msra.mxu0 0.0
    %2288 = vmatprep.subr.mxu0 0.0
    %2289 = vmatpush1.msra.mxu0 0.0
    %2290 = vmatprep.subr.mxu0 0.0
    %2291 = vmatpush1.msra.mxu0 0.0
    %2292 = vmatprep.subr.mxu0 0.0
    %2293 = vmatpush1.msra.mxu0 0.0
    %2294 = vmatprep.subr.mxu0 0.0
    %2295 = vmatpush1.msra.mxu0 0.0
    %2296 = vmatprep.subr.mxu0 0.0
    %2297 = vmatpush1.msra.mxu0 0.0
    %2298 = vmatprep.subr.mxu0 0.0
    %2299 = vmatpush1.msra.mxu0 0.0
    %2300 = vmatprep.subr.mxu0 0.0
    %2301 = vmatpush1.msra.mxu0 0.0
    %2302 = vmatprep.subr.mxu0 0.0
    %2303 = vmatpush1.msra.mxu0 0.0
    %2304 = vmatprep.subr.mxu0 0.0
    %v2305 = vand.u32 %v19, 4294901760
    %2306 = vmatpush1.msra.mxu0 %v2305
    %2307 = vmatprep.subr.mxu0 0.0
    %2308 = vmatpush2.msra.mxu0 0.0
    %2309 = vmatprep.subr.mxu0 0.0
    %2310 = vmatpush2.msra.mxu0 0.0
    %2311 = vmatprep.subr.mxu0 0.0
    %2312 = vmatpush2.msra.mxu0 0.0
    %2313 = vmatprep.subr.mxu0 0.0
    %2314 = vmatpush2.msra.mxu0 0.0
    %2315 = vmatprep.subr.mxu0 0.0
    %2316 = vmatpush2.msra.mxu0 0.0
    %2317 = vmatprep.subr.mxu0 0.0
    %2318 = vmatpush2.msra.mxu0 0.0
    %2319 = vmatprep.subr.mxu0 0.0
    %2320 = vmatpush2.msra.mxu0 0.0
    %2321 = vmatprep.subr.mxu0 0.0
    %2322 = vmatpush2.msra.mxu0 0.0
    %2323 = vmatprep.subr.mxu0 0.0
    %2324 = vmatpush2.msra.mxu0 0.0
    %2325 = vmatprep.subr.mxu0 0.0
    %2326 = vmatpush2.msra.mxu0 0.0
    %2327 = vmatprep.subr.mxu0 0.0
    %2328 = vmatpush2.msra.mxu0 0.0
    %2329 = vmatprep.subr.mxu0 0.0
    %2330 = vmatpush2.msra.mxu0 0.0
    %2331 = vmatprep.subr.mxu0 0.0
    %2332 = vmatpush2.msra.mxu0 0.0
    %2333 = vmatprep.subr.mxu0 0.0
    %2334 = vmatpush2.msra.mxu0 0.0
    %2335 = vmatprep.subr.mxu0 0.0
    %2336 = vmatpush2.msra.mxu0 0.0
    %2337 = vmatprep.subr.mxu0 0.0
    %2338 = vmatpush2.msra.mxu0 0.0
    %2339 = vmatprep.mubr.f32.mxu0 0.0
    %v2340 = vand.u32 %v2046, 4294901760
    %v2341 = vsub.f32 %v2046, %v2340
    %v2342 = vand.u32 %v2341, 4294901760
    %2343 = vmatmul.mubr.f32.gmra.mxu0 %v2342
    %v2344 = vpop.f32.mrf.mxu0
    %v2345 = vadd.f32 %v2271, %v2344
    %v2346 = vpop.f32.mrf.mxu0
    %2347 = vdwg.mxu0
    %2348 = vmatprep.subr.mxu0 0.0
    %2349 = vmatpush1.msra.mxu0 0.0
    %2350 = vmatprep.subr.mxu0 0.0
    %2351 = vmatpush1.msra.mxu0 0.0
    %2352 = vmatprep.subr.mxu0 0.0
    %2353 = vmatpush1.msra.mxu0 0.0
    %2354 = vmatprep.subr.mxu0 0.0
    %2355 = vmatpush1.msra.mxu0 0.0
    %2356 = vmatprep.subr.mxu0 0.0
    %2357 = vmatpush1.msra.mxu0 0.0
    %2358 = vmatprep.subr.mxu0 0.0
    %2359 = vmatpush1.msra.mxu0 0.0
    %2360 = vmatprep.subr.mxu0 0.0
    %2361 = vmatpush1.msra.mxu0 0.0
    %2362 = vmatprep.subr.mxu0 0.0
    %2363 = vmatpush1.msra.mxu0 0.0
    %2364 = vmatprep.subr.mxu0 0.0
    %2365 = vmatpush1.msra.mxu0 0.0
    %2366 = vmatprep.subr.mxu0 0.0
    %2367 = vmatpush1.msra.mxu0 0.0
    %2368 = vmatprep.subr.mxu0 0.0
    %2369 = vmatpush1.msra.mxu0 0.0
    %2370 = vmatprep.subr.mxu0 0.0
    %2371 = vmatpush1.msra.mxu0 0.0
    %2372 = vmatprep.subr.mxu0 0.0
    %2373 = vmatpush1.msra.mxu0 0.0
    %2374 = vmatprep.subr.mxu0 0.0
    %2375 = vmatpush1.msra.mxu0 0.0
    %2376 = vmatprep.subr.mxu0 0.0
    %2377 = vmatpush1.msra.mxu0 0.0
    %2378 = vmatprep.subr.mxu0 0.0
    %v2379 = vand.u32 %v19, 4294901760
    %v2380 = vsub.f32 %v19, %v2379
    %v2381 = vand.u32 %v2380, 4294901760
    %2382 = vmatpush1.msra.mxu0 %v2381
    %2383 = vmatprep.subr.mxu0 0.0
    %2384 = vmatpush2.msra.mxu0 0.0
    %2385 = vmatprep.subr.mxu0 0.0
    %2386 = vmatpush2.msra.mxu0 0.0
    %2387 = vmatprep.subr.mxu0 0.0
    %2388 = vmatpush2.msra.mxu0 0.0
    %2389 = vmatprep.subr.mxu0 0.0
    %2390 = vmatpush2.msra.mxu0 0.0
    %2391 = vmatprep.subr.mxu0 0.0
    %2392 = vmatpush2.msra.mxu0 0.0
    %2393 = vmatprep.subr.mxu0 0.0
    %2394 = vmatpush2.msra.mxu0 0.0
    %2395 = vmatprep.subr.mxu0 0.0
    %2396 = vmatpush2.msra.mxu0 0.0
    %2397 = vmatprep.subr.mxu0 0.0
    %2398 = vmatpush2.msra.mxu0 0.0
    %2399 = vmatprep.subr.mxu0 0.0
    %2400 = vmatpush2.msra.mxu0 0.0
    %2401 = vmatprep.subr.mxu0 0.0
    %2402 = vmatpush2.msra.mxu0 0.0
    %2403 = vmatprep.subr.mxu0 0.0
    %2404 = vmatpush2.msra.mxu0 0.0
    %2405 = vmatprep.subr.mxu0 0.0
    %2406 = vmatpush2.msra.mxu0 0.0
    %2407 = vmatprep.subr.mxu0 0.0
    %2408 = vmatpush2.msra.mxu0 0.0
    %2409 = vmatprep.subr.mxu0 0.0
    %2410 = vmatpush2.msra.mxu0 0.0
    %2411 = vmatprep.subr.mxu0 0.0
    %2412 = vmatpush2.msra.mxu0 0.0
    %2413 = vmatprep.subr.mxu0 0.0
    %2414 = vmatpush2.msra.mxu0 0.0
    %2415 = vmatprep.mubr.f32.mxu0 0.0
    %v2416 = vand.u32 %v2046, 4294901760
    %2417 = vmatmul.mubr.f32.gmra.mxu0 %v2416
    %v2418 = vpop.f32.mrf.mxu0
    %v2419 = vadd.f32 %v2345, %v2418
    %v2420 = vpop.f32.mrf.mxu0
    %2421 = vdwg.mxu0
    %2422 = vmatprep.subr.mxu0 0.0
    %2423 = vmatpush1.msra.mxu0 0.0
    %2424 = vmatprep.subr.mxu0 0.0
    %2425 = vmatpush1.msra.mxu0 0.0
    %2426 = vmatprep.subr.mxu0 0.0
    %2427 = vmatpush1.msra.mxu0 0.0
    %2428 = vmatprep.subr.mxu0 0.0
    %2429 = vmatpush1.msra.mxu0 0.0
    %2430 = vmatprep.subr.mxu0 0.0
    %2431 = vmatpush1.msra.mxu0 0.0
    %2432 = vmatprep.subr.mxu0 0.0
    %2433 = vmatpush1.msra.mxu0 0.0
    %2434 = vmatprep.subr.mxu0 0.0
    %2435 = vmatpush1.msra.mxu0 0.0
    %2436 = vmatprep.subr.mxu0 0.0
    %2437 = vmatpush1.msra.mxu0 0.0
    %2438 = vmatprep.subr.mxu0 0.0
    %2439 = vmatpush1.msra.mxu0 0.0
    %2440 = vmatprep.subr.mxu0 0.0
    %2441 = vmatpush1.msra.mxu0 0.0
    %2442 = vmatprep.subr.mxu0 0.0
    %2443 = vmatpush1.msra.mxu0 0.0
    %2444 = vmatprep.subr.mxu0 0.0
    %2445 = vmatpush1.msra.mxu0 0.0
    %2446 = vmatprep.subr.mxu0 0.0
    %2447 = vmatpush1.msra.mxu0 0.0
    %2448 = vmatprep.subr.mxu0 0.0
    %2449 = vmatpush1.msra.mxu0 0.0
    %2450 = vmatprep.subr.mxu0 0.0
    %2451 = vmatpush1.msra.mxu0 0.0
    %2452 = vmatprep.subr.mxu0 0.0
    %v2453 = vand.u32 %v19, 4294901760
    %2454 = vmatpush1.msra.mxu0 %v2453
    %2455 = vmatprep.subr.mxu0 0.0
    %2456 = vmatpush2.msra.mxu0 0.0
    %2457 = vmatprep.subr.mxu0 0.0
    %2458 = vmatpush2.msra.mxu0 0.0
    %2459 = vmatprep.subr.mxu0 0.0
    %2460 = vmatpush2.msra.mxu0 0.0
    %2461 = vmatprep.subr.mxu0 0.0
    %2462 = vmatpush2.msra.mxu0 0.0
    %2463 = vmatprep.subr.mxu0 0.0
    %2464 = vmatpush2.msra.mxu0 0.0
    %2465 = vmatprep.subr.mxu0 0.0
    %2466 = vmatpush2.msra.mxu0 0.0
    %2467 = vmatprep.subr.mxu0 0.0
    %2468 = vmatpush2.msra.mxu0 0.0
    %2469 = vmatprep.subr.mxu0 0.0
    %2470 = vmatpush2.msra.mxu0 0.0
    %2471 = vmatprep.subr.mxu0 0.0
    %2472 = vmatpush2.msra.mxu0 0.0
    %2473 = vmatprep.subr.mxu0 0.0
    %2474 = vmatpush2.msra.mxu0 0.0
    %2475 = vmatprep.subr.mxu0 0.0
    %2476 = vmatpush2.msra.mxu0 0.0
    %2477 = vmatprep.subr.mxu0 0.0
    %2478 = vmatpush2.msra.mxu0 0.0
    %2479 = vmatprep.subr.mxu0 0.0
    %2480 = vmatpush2.msra.mxu0 0.0
    %2481 = vmatprep.subr.mxu0 0.0
    %2482 = vmatpush2.msra.mxu0 0.0
    %2483 = vmatprep.subr.mxu0 0.0
    %2484 = vmatpush2.msra.mxu0 0.0
    %2485 = vmatprep.subr.mxu0 0.0
    %2486 = vmatpush2.msra.mxu0 0.0
    %2487 = vmatprep.mubr.f32.mxu0 0.0
    %v2488 = vand.u32 %v2046, 4294901760
    %2489 = vmatmul.mubr.f32.gmra.mxu0 %v2488
    %v2490 = vpop.f32.mrf.mxu0
    %v2491 = vadd.f32 %v2419, %v2490
    %v2492 = vpop.f32.mrf.mxu0
    %2493 = vdwg.mxu0
    %v2494 = vadd.f32 %v2009, %v2491
    %s2495 = sadd.s32 %s18, 40
    %s2496 = scalar_lea.vmem %s1, %s2495
    %v2497 = vld [vmem:[%s2496] sm:$0xff]
    %2498 = vxpose.xlu0.b32.start [1/16] %v2497, 128
    %2499 = vxpose.xlu0.b32.cont [2/16] 0.0, 128
    %2500 = vxpose.xlu0.b32.cont [3/16] 0.0, 128
    %2501 = vxpose.xlu0.b32.cont [4/16] 0.0, 128
    %2502 = vxpose.xlu0.b32.cont [5/16] 0.0, 128
    %2503 = vxpose.xlu0.b32.cont [6/16] 0.0, 128
    %2504 = vxpose.xlu0.b32.cont [7/16] 0.0, 128
    %2505 = vxpose.xlu0.b32.cont [8/16] 0.0, 128
    %2506 = vxpose.xlu0.b32.cont [9/16] 0.0, 128
    %2507 = vxpose.xlu0.b32.cont [10/16] 0.0, 128
    %2508 = vxpose.xlu0.b32.cont [11/16] 0.0, 128
    %2509 = vxpose.xlu0.b32.cont [12/16] 0.0, 128
    %2510 = vxpose.xlu0.b32.cont [13/16] 0.0, 128
    %2511 = vxpose.xlu0.b32.cont [14/16] 0.0, 128
    %2512 = vxpose.xlu0.b32.cont [15/16] 0.0, 128
    %2513 = vxpose.xlu0.b32.end [16/16] 0.0, 128
    %v2514 = vpop.trf.xlu0
    %v2515 = vpop.trf.xlu0
    %v2516 = vpop.trf.xlu0
    %v2517 = vpop.trf.xlu0
    %v2518 = vpop.trf.xlu0
    %v2519 = vpop.trf.xlu0
    %v2520 = vpop.trf.xlu0
    %v2521 = vpop.trf.xlu0
    %v2522 = vpop.trf.xlu0
    %v2523 = vpop.trf.xlu0
    %v2524 = vpop.trf.xlu0
    %v2525 = vpop.trf.xlu0
    %v2526 = vpop.trf.xlu0
    %v2527 = vpop.trf.xlu0
    %v2528 = vpop.trf.xlu0
    %v2529 = vpop.trf.xlu0
    %v2531 = vsel %vm53, %v2514, 0
    %2533 = vmatprep.subr.mxu0 0.0
    %2534 = vmatpush1.msra.mxu0 0.0
    %2535 = vmatprep.subr.mxu0 0.0
    %2536 = vmatpush1.msra.mxu0 0.0
    %2537 = vmatprep.subr.mxu0 0.0
    %2538 = vmatpush1.msra.mxu0 0.0
    %2539 = vmatprep.subr.mxu0 0.0
    %2540 = vmatpush1.msra.mxu0 0.0
    %2541 = vmatprep.subr.mxu0 0.0
    %2542 = vmatpush1.msra.mxu0 0.0
    %2543 = vmatprep.subr.mxu0 0.0
    %2544 = vmatpush1.msra.mxu0 0.0
    %2545 = vmatprep.subr.mxu0 0.0
    %2546 = vmatpush1.msra.mxu0 0.0
    %2547 = vmatprep.subr.mxu0 0.0
    %2548 = vmatpush1.msra.mxu0 0.0
    %2549 = vmatprep.subr.mxu0 0.0
    %2550 = vmatpush1.msra.mxu0 0.0
    %2551 = vmatprep.subr.mxu0 0.0
    %2552 = vmatpush1.msra.mxu0 0.0
    %2553 = vmatprep.subr.mxu0 0.0
    %2554 = vmatpush1.msra.mxu0 0.0
    %2555 = vmatprep.subr.mxu0 0.0
    %2556 = vmatpush1.msra.mxu0 0.0
    %2557 = vmatprep.subr.mxu0 0.0
    %2558 = vmatpush1.msra.mxu0 0.0
    %2559 = vmatprep.subr.mxu0 0.0
    %2560 = vmatpush1.msra.mxu0 0.0
    %2561 = vmatprep.subr.mxu0 0.0
    %2562 = vmatpush1.msra.mxu0 0.0
    %2563 = vmatprep.subr.mxu0 0.0
    %v2564 = vand.u32 %v21, 4294901760
    %2565 = vmatpush1.msra.mxu0 %v2564
    %2566 = vmatprep.subr.mxu0 0.0
    %2567 = vmatpush2.msra.mxu0 0.0
    %2568 = vmatprep.subr.mxu0 0.0
    %2569 = vmatpush2.msra.mxu0 0.0
    %2570 = vmatprep.subr.mxu0 0.0
    %2571 = vmatpush2.msra.mxu0 0.0
    %2572 = vmatprep.subr.mxu0 0.0
    %2573 = vmatpush2.msra.mxu0 0.0
    %2574 = vmatprep.subr.mxu0 0.0
    %2575 = vmatpush2.msra.mxu0 0.0
    %2576 = vmatprep.subr.mxu0 0.0
    %2577 = vmatpush2.msra.mxu0 0.0
    %2578 = vmatprep.subr.mxu0 0.0
    %2579 = vmatpush2.msra.mxu0 0.0
    %2580 = vmatprep.subr.mxu0 0.0
    %2581 = vmatpush2.msra.mxu0 0.0
    %2582 = vmatprep.subr.mxu0 0.0
    %2583 = vmatpush2.msra.mxu0 0.0
    %2584 = vmatprep.subr.mxu0 0.0
    %2585 = vmatpush2.msra.mxu0 0.0
    %2586 = vmatprep.subr.mxu0 0.0
    %2587 = vmatpush2.msra.mxu0 0.0
    %2588 = vmatprep.subr.mxu0 0.0
    %2589 = vmatpush2.msra.mxu0 0.0
    %2590 = vmatprep.subr.mxu0 0.0
    %2591 = vmatpush2.msra.mxu0 0.0
    %2592 = vmatprep.subr.mxu0 0.0
    %2593 = vmatpush2.msra.mxu0 0.0
    %2594 = vmatprep.subr.mxu0 0.0
    %2595 = vmatpush2.msra.mxu0 0.0
    %2596 = vmatprep.subr.mxu0 0.0
    %2597 = vmatpush2.msra.mxu0 0.0
    %2598 = vmatprep.mubr.f32.mxu0 0.0
    %v2599 = vand.u32 %v2531, 4294901760
    %v2600 = vsub.f32 %v2531, %v2599
    %v2601 = vand.u32 %v2600, 4294901760
    %v2602 = vsub.f32 %v2600, %v2601
    %v2603 = vand.u32 %v2602, 4294901760
    %2604 = vmatmul.mubr.f32.gmra.mxu0 %v2603
    %v2605 = vpop.f32.mrf.mxu0
    %v2606 = vadd.f32 0.0, %v2605
    %v2607 = vpop.f32.mrf.mxu0
    %2608 = vdwg.mxu0
    %2609 = vmatprep.subr.mxu0 0.0
    %2610 = vmatpush1.msra.mxu0 0.0
    %2611 = vmatprep.subr.mxu0 0.0
    %2612 = vmatpush1.msra.mxu0 0.0
    %2613 = vmatprep.subr.mxu0 0.0
    %2614 = vmatpush1.msra.mxu0 0.0
    %2615 = vmatprep.subr.mxu0 0.0
    %2616 = vmatpush1.msra.mxu0 0.0
    %2617 = vmatprep.subr.mxu0 0.0
    %2618 = vmatpush1.msra.mxu0 0.0
    %2619 = vmatprep.subr.mxu0 0.0
    %2620 = vmatpush1.msra.mxu0 0.0
    %2621 = vmatprep.subr.mxu0 0.0
    %2622 = vmatpush1.msra.mxu0 0.0
    %2623 = vmatprep.subr.mxu0 0.0
    %2624 = vmatpush1.msra.mxu0 0.0
    %2625 = vmatprep.subr.mxu0 0.0
    %2626 = vmatpush1.msra.mxu0 0.0
    %2627 = vmatprep.subr.mxu0 0.0
    %2628 = vmatpush1.msra.mxu0 0.0
    %2629 = vmatprep.subr.mxu0 0.0
    %2630 = vmatpush1.msra.mxu0 0.0
    %2631 = vmatprep.subr.mxu0 0.0
    %2632 = vmatpush1.msra.mxu0 0.0
    %2633 = vmatprep.subr.mxu0 0.0
    %2634 = vmatpush1.msra.mxu0 0.0
    %2635 = vmatprep.subr.mxu0 0.0
    %2636 = vmatpush1.msra.mxu0 0.0
    %2637 = vmatprep.subr.mxu0 0.0
    %2638 = vmatpush1.msra.mxu0 0.0
    %2639 = vmatprep.subr.mxu0 0.0
    %v2640 = vand.u32 %v21, 4294901760
    %v2641 = vsub.f32 %v21, %v2640
    %v2642 = vand.u32 %v2641, 4294901760
    %v2643 = vsub.f32 %v2641, %v2642
    %v2644 = vand.u32 %v2643, 4294901760
    %2645 = vmatpush1.msra.mxu0 %v2644
    %2646 = vmatprep.subr.mxu0 0.0
    %2647 = vmatpush2.msra.mxu0 0.0
    %2648 = vmatprep.subr.mxu0 0.0
    %2649 = vmatpush2.msra.mxu0 0.0
    %2650 = vmatprep.subr.mxu0 0.0
    %2651 = vmatpush2.msra.mxu0 0.0
    %2652 = vmatprep.subr.mxu0 0.0
    %2653 = vmatpush2.msra.mxu0 0.0
    %2654 = vmatprep.subr.mxu0 0.0
    %2655 = vmatpush2.msra.mxu0 0.0
    %2656 = vmatprep.subr.mxu0 0.0
    %2657 = vmatpush2.msra.mxu0 0.0
    %2658 = vmatprep.subr.mxu0 0.0
    %2659 = vmatpush2.msra.mxu0 0.0
    %2660 = vmatprep.subr.mxu0 0.0
    %2661 = vmatpush2.msra.mxu0 0.0
    %2662 = vmatprep.subr.mxu0 0.0
    %2663 = vmatpush2.msra.mxu0 0.0
    %2664 = vmatprep.subr.mxu0 0.0
    %2665 = vmatpush2.msra.mxu0 0.0
    %2666 = vmatprep.subr.mxu0 0.0
    %2667 = vmatpush2.msra.mxu0 0.0
    %2668 = vmatprep.subr.mxu0 0.0
    %2669 = vmatpush2.msra.mxu0 0.0
    %2670 = vmatprep.subr.mxu0 0.0
    %2671 = vmatpush2.msra.mxu0 0.0
    %2672 = vmatprep.subr.mxu0 0.0
    %2673 = vmatpush2.msra.mxu0 0.0
    %2674 = vmatprep.subr.mxu0 0.0
    %2675 = vmatpush2.msra.mxu0 0.0
    %2676 = vmatprep.subr.mxu0 0.0
    %2677 = vmatpush2.msra.mxu0 0.0
    %2678 = vmatprep.mubr.f32.mxu0 0.0
    %v2679 = vand.u32 %v2531, 4294901760
    %2680 = vmatmul.mubr.f32.gmra.mxu0 %v2679
    %v2681 = vpop.f32.mrf.mxu0
    %v2682 = vadd.f32 %v2606, %v2681
    %v2683 = vpop.f32.mrf.mxu0
    %2684 = vdwg.mxu0
    %2685 = vmatprep.subr.mxu0 0.0
    %2686 = vmatpush1.msra.mxu0 0.0
    %2687 = vmatprep.subr.mxu0 0.0
    %2688 = vmatpush1.msra.mxu0 0.0
    %2689 = vmatprep.subr.mxu0 0.0
    %2690 = vmatpush1.msra.mxu0 0.0
    %2691 = vmatprep.subr.mxu0 0.0
    %2692 = vmatpush1.msra.mxu0 0.0
    %2693 = vmatprep.subr.mxu0 0.0
    %2694 = vmatpush1.msra.mxu0 0.0
    %2695 = vmatprep.subr.mxu0 0.0
    %2696 = vmatpush1.msra.mxu0 0.0
    %2697 = vmatprep.subr.mxu0 0.0
    %2698 = vmatpush1.msra.mxu0 0.0
    %2699 = vmatprep.subr.mxu0 0.0
    %2700 = vmatpush1.msra.mxu0 0.0
    %2701 = vmatprep.subr.mxu0 0.0
    %2702 = vmatpush1.msra.mxu0 0.0
    %2703 = vmatprep.subr.mxu0 0.0
    %2704 = vmatpush1.msra.mxu0 0.0
    %2705 = vmatprep.subr.mxu0 0.0
    %2706 = vmatpush1.msra.mxu0 0.0
    %2707 = vmatprep.subr.mxu0 0.0
    %2708 = vmatpush1.msra.mxu0 0.0
    %2709 = vmatprep.subr.mxu0 0.0
    %2710 = vmatpush1.msra.mxu0 0.0
    %2711 = vmatprep.subr.mxu0 0.0
    %2712 = vmatpush1.msra.mxu0 0.0
    %2713 = vmatprep.subr.mxu0 0.0
    %2714 = vmatpush1.msra.mxu0 0.0
    %2715 = vmatprep.subr.mxu0 0.0
    %v2716 = vand.u32 %v21, 4294901760
    %v2717 = vsub.f32 %v21, %v2716
    %2718 = vmatpush1.msra.mxu0 %v2717
    %2719 = vmatprep.subr.mxu0 0.0
    %2720 = vmatpush2.msra.mxu0 0.0
    %2721 = vmatprep.subr.mxu0 0.0
    %2722 = vmatpush2.msra.mxu0 0.0
    %2723 = vmatprep.subr.mxu0 0.0
    %2724 = vmatpush2.msra.mxu0 0.0
    %2725 = vmatprep.subr.mxu0 0.0
    %2726 = vmatpush2.msra.mxu0 0.0
    %2727 = vmatprep.subr.mxu0 0.0
    %2728 = vmatpush2.msra.mxu0 0.0
    %2729 = vmatprep.subr.mxu0 0.0
    %2730 = vmatpush2.msra.mxu0 0.0
    %2731 = vmatprep.subr.mxu0 0.0
    %2732 = vmatpush2.msra.mxu0 0.0
    %2733 = vmatprep.subr.mxu0 0.0
    %2734 = vmatpush2.msra.mxu0 0.0
    %2735 = vmatprep.subr.mxu0 0.0
    %2736 = vmatpush2.msra.mxu0 0.0
    %2737 = vmatprep.subr.mxu0 0.0
    %2738 = vmatpush2.msra.mxu0 0.0
    %2739 = vmatprep.subr.mxu0 0.0
    %2740 = vmatpush2.msra.mxu0 0.0
    %2741 = vmatprep.subr.mxu0 0.0
    %2742 = vmatpush2.msra.mxu0 0.0
    %2743 = vmatprep.subr.mxu0 0.0
    %2744 = vmatpush2.msra.mxu0 0.0
    %2745 = vmatprep.subr.mxu0 0.0
    %2746 = vmatpush2.msra.mxu0 0.0
    %2747 = vmatprep.subr.mxu0 0.0
    %2748 = vmatpush2.msra.mxu0 0.0
    %2749 = vmatprep.subr.mxu0 0.0
    %2750 = vmatpush2.msra.mxu0 0.0
    %2751 = vmatprep.mubr.f32.mxu0 0.0
    %v2752 = vand.u32 %v2531, 4294901760
    %v2753 = vsub.f32 %v2531, %v2752
    %2754 = vmatmul.mubr.f32.gmra.mxu0 %v2753
    %v2755 = vpop.f32.mrf.mxu0
    %v2756 = vadd.f32 %v2682, %v2755
    %v2757 = vpop.f32.mrf.mxu0
    %2758 = vdwg.mxu0
    %2759 = vmatprep.subr.mxu0 0.0
    %2760 = vmatpush1.msra.mxu0 0.0
    %2761 = vmatprep.subr.mxu0 0.0
    %2762 = vmatpush1.msra.mxu0 0.0
    %2763 = vmatprep.subr.mxu0 0.0
    %2764 = vmatpush1.msra.mxu0 0.0
    %2765 = vmatprep.subr.mxu0 0.0
    %2766 = vmatpush1.msra.mxu0 0.0
    %2767 = vmatprep.subr.mxu0 0.0
    %2768 = vmatpush1.msra.mxu0 0.0
    %2769 = vmatprep.subr.mxu0 0.0
    %2770 = vmatpush1.msra.mxu0 0.0
    %2771 = vmatprep.subr.mxu0 0.0
    %2772 = vmatpush1.msra.mxu0 0.0
    %2773 = vmatprep.subr.mxu0 0.0
    %2774 = vmatpush1.msra.mxu0 0.0
    %2775 = vmatprep.subr.mxu0 0.0
    %2776 = vmatpush1.msra.mxu0 0.0
    %2777 = vmatprep.subr.mxu0 0.0
    %2778 = vmatpush1.msra.mxu0 0.0
    %2779 = vmatprep.subr.mxu0 0.0
    %2780 = vmatpush1.msra.mxu0 0.0
    %2781 = vmatprep.subr.mxu0 0.0
    %2782 = vmatpush1.msra.mxu0 0.0
    %2783 = vmatprep.subr.mxu0 0.0
    %2784 = vmatpush1.msra.mxu0 0.0
    %2785 = vmatprep.subr.mxu0 0.0
    %2786 = vmatpush1.msra.mxu0 0.0
    %2787 = vmatprep.subr.mxu0 0.0
    %2788 = vmatpush1.msra.mxu0 0.0
    %2789 = vmatprep.subr.mxu0 0.0
    %v2790 = vand.u32 %v21, 4294901760
    %2791 = vmatpush1.msra.mxu0 %v2790
    %2792 = vmatprep.subr.mxu0 0.0
    %2793 = vmatpush2.msra.mxu0 0.0
    %2794 = vmatprep.subr.mxu0 0.0
    %2795 = vmatpush2.msra.mxu0 0.0
    %2796 = vmatprep.subr.mxu0 0.0
    %2797 = vmatpush2.msra.mxu0 0.0
    %2798 = vmatprep.subr.mxu0 0.0
    %2799 = vmatpush2.msra.mxu0 0.0
    %2800 = vmatprep.subr.mxu0 0.0
    %2801 = vmatpush2.msra.mxu0 0.0
    %2802 = vmatprep.subr.mxu0 0.0
    %2803 = vmatpush2.msra.mxu0 0.0
    %2804 = vmatprep.subr.mxu0 0.0
    %2805 = vmatpush2.msra.mxu0 0.0
    %2806 = vmatprep.subr.mxu0 0.0
    %2807 = vmatpush2.msra.mxu0 0.0
    %2808 = vmatprep.subr.mxu0 0.0
    %2809 = vmatpush2.msra.mxu0 0.0
    %2810 = vmatprep.subr.mxu0 0.0
    %2811 = vmatpush2.msra.mxu0 0.0
    %2812 = vmatprep.subr.mxu0 0.0
    %2813 = vmatpush2.msra.mxu0 0.0
    %2814 = vmatprep.subr.mxu0 0.0
    %2815 = vmatpush2.msra.mxu0 0.0
    %2816 = vmatprep.subr.mxu0 0.0
    %2817 = vmatpush2.msra.mxu0 0.0
    %2818 = vmatprep.subr.mxu0 0.0
    %2819 = vmatpush2.msra.mxu0 0.0
    %2820 = vmatprep.subr.mxu0 0.0
    %2821 = vmatpush2.msra.mxu0 0.0
    %2822 = vmatprep.subr.mxu0 0.0
    %2823 = vmatpush2.msra.mxu0 0.0
    %2824 = vmatprep.mubr.f32.mxu0 0.0
    %v2825 = vand.u32 %v2531, 4294901760
    %v2826 = vsub.f32 %v2531, %v2825
    %v2827 = vand.u32 %v2826, 4294901760
    %2828 = vmatmul.mubr.f32.gmra.mxu0 %v2827
    %v2829 = vpop.f32.mrf.mxu0
    %v2830 = vadd.f32 %v2756, %v2829
    %v2831 = vpop.f32.mrf.mxu0
    %2832 = vdwg.mxu0
    %2833 = vmatprep.subr.mxu0 0.0
    %2834 = vmatpush1.msra.mxu0 0.0
    %2835 = vmatprep.subr.mxu0 0.0
    %2836 = vmatpush1.msra.mxu0 0.0
    %2837 = vmatprep.subr.mxu0 0.0
    %2838 = vmatpush1.msra.mxu0 0.0
    %2839 = vmatprep.subr.mxu0 0.0
    %2840 = vmatpush1.msra.mxu0 0.0
    %2841 = vmatprep.subr.mxu0 0.0
    %2842 = vmatpush1.msra.mxu0 0.0
    %2843 = vmatprep.subr.mxu0 0.0
    %2844 = vmatpush1.msra.mxu0 0.0
    %2845 = vmatprep.subr.mxu0 0.0
    %2846 = vmatpush1.msra.mxu0 0.0
    %2847 = vmatprep.subr.mxu0 0.0
    %2848 = vmatpush1.msra.mxu0 0.0
    %2849 = vmatprep.subr.mxu0 0.0
    %2850 = vmatpush1.msra.mxu0 0.0
    %2851 = vmatprep.subr.mxu0 0.0
    %2852 = vmatpush1.msra.mxu0 0.0
    %2853 = vmatprep.subr.mxu0 0.0
    %2854 = vmatpush1.msra.mxu0 0.0
    %2855 = vmatprep.subr.mxu0 0.0
    %2856 = vmatpush1.msra.mxu0 0.0
    %2857 = vmatprep.subr.mxu0 0.0
    %2858 = vmatpush1.msra.mxu0 0.0
    %2859 = vmatprep.subr.mxu0 0.0
    %2860 = vmatpush1.msra.mxu0 0.0
    %2861 = vmatprep.subr.mxu0 0.0
    %2862 = vmatpush1.msra.mxu0 0.0
    %2863 = vmatprep.subr.mxu0 0.0
    %v2864 = vand.u32 %v21, 4294901760
    %v2865 = vsub.f32 %v21, %v2864
    %v2866 = vand.u32 %v2865, 4294901760
    %2867 = vmatpush1.msra.mxu0 %v2866
    %2868 = vmatprep.subr.mxu0 0.0
    %2869 = vmatpush2.msra.mxu0 0.0
    %2870 = vmatprep.subr.mxu0 0.0
    %2871 = vmatpush2.msra.mxu0 0.0
    %2872 = vmatprep.subr.mxu0 0.0
    %2873 = vmatpush2.msra.mxu0 0.0
    %2874 = vmatprep.subr.mxu0 0.0
    %2875 = vmatpush2.msra.mxu0 0.0
    %2876 = vmatprep.subr.mxu0 0.0
    %2877 = vmatpush2.msra.mxu0 0.0
    %2878 = vmatprep.subr.mxu0 0.0
    %2879 = vmatpush2.msra.mxu0 0.0
    %2880 = vmatprep.subr.mxu0 0.0
    %2881 = vmatpush2.msra.mxu0 0.0
    %2882 = vmatprep.subr.mxu0 0.0
    %2883 = vmatpush2.msra.mxu0 0.0
    %2884 = vmatprep.subr.mxu0 0.0
    %2885 = vmatpush2.msra.mxu0 0.0
    %2886 = vmatprep.subr.mxu0 0.0
    %2887 = vmatpush2.msra.mxu0 0.0
    %2888 = vmatprep.subr.mxu0 0.0
    %2889 = vmatpush2.msra.mxu0 0.0
    %2890 = vmatprep.subr.mxu0 0.0
    %2891 = vmatpush2.msra.mxu0 0.0
    %2892 = vmatprep.subr.mxu0 0.0
    %2893 = vmatpush2.msra.mxu0 0.0
    %2894 = vmatprep.subr.mxu0 0.0
    %2895 = vmatpush2.msra.mxu0 0.0
    %2896 = vmatprep.subr.mxu0 0.0
    %2897 = vmatpush2.msra.mxu0 0.0
    %2898 = vmatprep.subr.mxu0 0.0
    %2899 = vmatpush2.msra.mxu0 0.0
    %2900 = vmatprep.mubr.f32.mxu0 0.0
    %v2901 = vand.u32 %v2531, 4294901760
    %2902 = vmatmul.mubr.f32.gmra.mxu0 %v2901
    %v2903 = vpop.f32.mrf.mxu0
    %v2904 = vadd.f32 %v2830, %v2903
    %v2905 = vpop.f32.mrf.mxu0
    %2906 = vdwg.mxu0
    %2907 = vmatprep.subr.mxu0 0.0
    %2908 = vmatpush1.msra.mxu0 0.0
    %2909 = vmatprep.subr.mxu0 0.0
    %2910 = vmatpush1.msra.mxu0 0.0
    %2911 = vmatprep.subr.mxu0 0.0
    %2912 = vmatpush1.msra.mxu0 0.0
    %2913 = vmatprep.subr.mxu0 0.0
    %2914 = vmatpush1.msra.mxu0 0.0
    %2915 = vmatprep.subr.mxu0 0.0
    %2916 = vmatpush1.msra.mxu0 0.0
    %2917 = vmatprep.subr.mxu0 0.0
    %2918 = vmatpush1.msra.mxu0 0.0
    %2919 = vmatprep.subr.mxu0 0.0
    %2920 = vmatpush1.msra.mxu0 0.0
    %2921 = vmatprep.subr.mxu0 0.0
    %2922 = vmatpush1.msra.mxu0 0.0
    %2923 = vmatprep.subr.mxu0 0.0
    %2924 = vmatpush1.msra.mxu0 0.0
    %2925 = vmatprep.subr.mxu0 0.0
    %2926 = vmatpush1.msra.mxu0 0.0
    %2927 = vmatprep.subr.mxu0 0.0
    %2928 = vmatpush1.msra.mxu0 0.0
    %2929 = vmatprep.subr.mxu0 0.0
    %2930 = vmatpush1.msra.mxu0 0.0
    %2931 = vmatprep.subr.mxu0 0.0
    %2932 = vmatpush1.msra.mxu0 0.0
    %2933 = vmatprep.subr.mxu0 0.0
    %2934 = vmatpush1.msra.mxu0 0.0
    %2935 = vmatprep.subr.mxu0 0.0
    %2936 = vmatpush1.msra.mxu0 0.0
    %2937 = vmatprep.subr.mxu0 0.0
    %v2938 = vand.u32 %v21, 4294901760
    %2939 = vmatpush1.msra.mxu0 %v2938
    %2940 = vmatprep.subr.mxu0 0.0
    %2941 = vmatpush2.msra.mxu0 0.0
    %2942 = vmatprep.subr.mxu0 0.0
    %2943 = vmatpush2.msra.mxu0 0.0
    %2944 = vmatprep.subr.mxu0 0.0
    %2945 = vmatpush2.msra.mxu0 0.0
    %2946 = vmatprep.subr.mxu0 0.0
    %2947 = vmatpush2.msra.mxu0 0.0
    %2948 = vmatprep.subr.mxu0 0.0
    %2949 = vmatpush2.msra.mxu0 0.0
    %2950 = vmatprep.subr.mxu0 0.0
    %2951 = vmatpush2.msra.mxu0 0.0
    %2952 = vmatprep.subr.mxu0 0.0
    %2953 = vmatpush2.msra.mxu0 0.0
    %2954 = vmatprep.subr.mxu0 0.0
    %2955 = vmatpush2.msra.mxu0 0.0
    %2956 = vmatprep.subr.mxu0 0.0
    %2957 = vmatpush2.msra.mxu0 0.0
    %2958 = vmatprep.subr.mxu0 0.0
    %2959 = vmatpush2.msra.mxu0 0.0
    %2960 = vmatprep.subr.mxu0 0.0
    %2961 = vmatpush2.msra.mxu0 0.0
    %2962 = vmatprep.subr.mxu0 0.0
    %2963 = vmatpush2.msra.mxu0 0.0
    %2964 = vmatprep.subr.mxu0 0.0
    %2965 = vmatpush2.msra.mxu0 0.0
    %2966 = vmatprep.subr.mxu0 0.0
    %2967 = vmatpush2.msra.mxu0 0.0
    %2968 = vmatprep.subr.mxu0 0.0
    %2969 = vmatpush2.msra.mxu0 0.0
    %2970 = vmatprep.subr.mxu0 0.0
    %2971 = vmatpush2.msra.mxu0 0.0
    %2972 = vmatprep.mubr.f32.mxu0 0.0
    %v2973 = vand.u32 %v2531, 4294901760
    %2974 = vmatmul.mubr.f32.gmra.mxu0 %v2973
    %v2975 = vpop.f32.mrf.mxu0
    %v2976 = vadd.f32 %v2904, %v2975
    %v2977 = vpop.f32.mrf.mxu0
    %2978 = vdwg.mxu0
    %v2979 = vadd.f32 %v2494, %v2976
    %s2980 = sadd.s32 %s18, 48
    %s2981 = scalar_lea.vmem %s1, %s2980
    %v2982 = vld [vmem:[%s2981] sm:$0xff]
    %2983 = vxpose.xlu0.b32.start [1/16] %v2982, 128
    %2984 = vxpose.xlu0.b32.cont [2/16] 0.0, 128
    %2985 = vxpose.xlu0.b32.cont [3/16] 0.0, 128
    %2986 = vxpose.xlu0.b32.cont [4/16] 0.0, 128
    %2987 = vxpose.xlu0.b32.cont [5/16] 0.0, 128
    %2988 = vxpose.xlu0.b32.cont [6/16] 0.0, 128
    %2989 = vxpose.xlu0.b32.cont [7/16] 0.0, 128
    %2990 = vxpose.xlu0.b32.cont [8/16] 0.0, 128
    %2991 = vxpose.xlu0.b32.cont [9/16] 0.0, 128
    %2992 = vxpose.xlu0.b32.cont [10/16] 0.0, 128
    %2993 = vxpose.xlu0.b32.cont [11/16] 0.0, 128
    %2994 = vxpose.xlu0.b32.cont [12/16] 0.0, 128
    %2995 = vxpose.xlu0.b32.cont [13/16] 0.0, 128
    %2996 = vxpose.xlu0.b32.cont [14/16] 0.0, 128
    %2997 = vxpose.xlu0.b32.cont [15/16] 0.0, 128
    %2998 = vxpose.xlu0.b32.end [16/16] 0.0, 128
    %v2999 = vpop.trf.xlu0
    %v3000 = vpop.trf.xlu0
    %v3001 = vpop.trf.xlu0
    %v3002 = vpop.trf.xlu0
    %v3003 = vpop.trf.xlu0
    %v3004 = vpop.trf.xlu0
    %v3005 = vpop.trf.xlu0
    %v3006 = vpop.trf.xlu0
    %v3007 = vpop.trf.xlu0
    %v3008 = vpop.trf.xlu0
    %v3009 = vpop.trf.xlu0
    %v3010 = vpop.trf.xlu0
    %v3011 = vpop.trf.xlu0
    %v3012 = vpop.trf.xlu0
    %v3013 = vpop.trf.xlu0
    %v3014 = vpop.trf.xlu0
    %v3016 = vsel %vm53, %v2999, 0
    %3018 = vmatprep.subr.mxu0 0.0
    %3019 = vmatpush1.msra.mxu0 0.0
    %3020 = vmatprep.subr.mxu0 0.0
    %3021 = vmatpush1.msra.mxu0 0.0
    %3022 = vmatprep.subr.mxu0 0.0
    %3023 = vmatpush1.msra.mxu0 0.0
    %3024 = vmatprep.subr.mxu0 0.0
    %3025 = vmatpush1.msra.mxu0 0.0
    %3026 = vmatprep.subr.mxu0 0.0
    %3027 = vmatpush1.msra.mxu0 0.0
    %3028 = vmatprep.subr.mxu0 0.0
    %3029 = vmatpush1.msra.mxu0 0.0
    %3030 = vmatprep.subr.mxu0 0.0
    %3031 = vmatpush1.msra.mxu0 0.0
    %3032 = vmatprep.subr.mxu0 0.0
    %3033 = vmatpush1.msra.mxu0 0.0
    %3034 = vmatprep.subr.mxu0 0.0
    %3035 = vmatpush1.msra.mxu0 0.0
    %3036 = vmatprep.subr.mxu0 0.0
    %3037 = vmatpush1.msra.mxu0 0.0
    %3038 = vmatprep.subr.mxu0 0.0
    %3039 = vmatpush1.msra.mxu0 0.0
    %3040 = vmatprep.subr.mxu0 0.0
    %3041 = vmatpush1.msra.mxu0 0.0
    %3042 = vmatprep.subr.mxu0 0.0
    %3043 = vmatpush1.msra.mxu0 0.0
    %3044 = vmatprep.subr.mxu0 0.0
    %3045 = vmatpush1.msra.mxu0 0.0
    %3046 = vmatprep.subr.mxu0 0.0
    %3047 = vmatpush1.msra.mxu0 0.0
    %3048 = vmatprep.subr.mxu0 0.0
    %v3049 = vand.u32 %v72, 4294901760
    %3050 = vmatpush1.msra.mxu0 %v3049
    %3051 = vmatprep.subr.mxu0 0.0
    %3052 = vmatpush2.msra.mxu0 0.0
    %3053 = vmatprep.subr.mxu0 0.0
    %3054 = vmatpush2.msra.mxu0 0.0
    %3055 = vmatprep.subr.mxu0 0.0
    %3056 = vmatpush2.msra.mxu0 0.0
    %3057 = vmatprep.subr.mxu0 0.0
    %3058 = vmatpush2.msra.mxu0 0.0
    %3059 = vmatprep.subr.mxu0 0.0
    %3060 = vmatpush2.msra.mxu0 0.0
    %3061 = vmatprep.subr.mxu0 0.0
    %3062 = vmatpush2.msra.mxu0 0.0
    %3063 = vmatprep.subr.mxu0 0.0
    %3064 = vmatpush2.msra.mxu0 0.0
    %3065 = vmatprep.subr.mxu0 0.0
    %3066 = vmatpush2.msra.mxu0 0.0
    %3067 = vmatprep.subr.mxu0 0.0
    %3068 = vmatpush2.msra.mxu0 0.0
    %3069 = vmatprep.subr.mxu0 0.0
    %3070 = vmatpush2.msra.mxu0 0.0
    %3071 = vmatprep.subr.mxu0 0.0
    %3072 = vmatpush2.msra.mxu0 0.0
    %3073 = vmatprep.subr.mxu0 0.0
    %3074 = vmatpush2.msra.mxu0 0.0
    %3075 = vmatprep.subr.mxu0 0.0
    %3076 = vmatpush2.msra.mxu0 0.0
    %3077 = vmatprep.subr.mxu0 0.0
    %3078 = vmatpush2.msra.mxu0 0.0
    %3079 = vmatprep.subr.mxu0 0.0
    %3080 = vmatpush2.msra.mxu0 0.0
    %3081 = vmatprep.subr.mxu0 0.0
    %3082 = vmatpush2.msra.mxu0 0.0
    %3083 = vmatprep.mubr.f32.mxu0 0.0
    %v3084 = vand.u32 %v3016, 4294901760
    %v3085 = vsub.f32 %v3016, %v3084
    %v3086 = vand.u32 %v3085, 4294901760
    %v3087 = vsub.f32 %v3085, %v3086
    %v3088 = vand.u32 %v3087, 4294901760
    %3089 = vmatmul.mubr.f32.gmra.mxu0 %v3088
    %v3090 = vpop.f32.mrf.mxu0
    %v3091 = vadd.f32 0.0, %v3090
    %v3092 = vpop.f32.mrf.mxu0
    %3093 = vdwg.mxu0
    %3094 = vmatprep.subr.mxu0 0.0
    %3095 = vmatpush1.msra.mxu0 0.0
    %3096 = vmatprep.subr.mxu0 0.0
    %3097 = vmatpush1.msra.mxu0 0.0
    %3098 = vmatprep.subr.mxu0 0.0
    %3099 = vmatpush1.msra.mxu0 0.0
    %3100 = vmatprep.subr.mxu0 0.0
    %3101 = vmatpush1.msra.mxu0 0.0
    %3102 = vmatprep.subr.mxu0 0.0
    %3103 = vmatpush1.msra.mxu0 0.0
    %3104 = vmatprep.subr.mxu0 0.0
    %3105 = vmatpush1.msra.mxu0 0.0
    %3106 = vmatprep.subr.mxu0 0.0
    %3107 = vmatpush1.msra.mxu0 0.0
    %3108 = vmatprep.subr.mxu0 0.0
    %3109 = vmatpush1.msra.mxu0 0.0
    %3110 = vmatprep.subr.mxu0 0.0
    %3111 = vmatpush1.msra.mxu0 0.0
    %3112 = vmatprep.subr.mxu0 0.0
    %3113 = vmatpush1.msra.mxu0 0.0
    %3114 = vmatprep.subr.mxu0 0.0
    %3115 = vmatpush1.msra.mxu0 0.0
    %3116 = vmatprep.subr.mxu0 0.0
    %3117 = vmatpush1.msra.mxu0 0.0
    %3118 = vmatprep.subr.mxu0 0.0
    %3119 = vmatpush1.msra.mxu0 0.0
    %3120 = vmatprep.subr.mxu0 0.0
    %3121 = vmatpush1.msra.mxu0 0.0
    %3122 = vmatprep.subr.mxu0 0.0
    %3123 = vmatpush1.msra.mxu0 0.0
    %3124 = vmatprep.subr.mxu0 0.0
    %v3125 = vand.u32 %v72, 4294901760
    %v3126 = vsub.f32 %v72, %v3125
    %v3127 = vand.u32 %v3126, 4294901760
    %v3128 = vsub.f32 %v3126, %v3127
    %v3129 = vand.u32 %v3128, 4294901760
    %3130 = vmatpush1.msra.mxu0 %v3129
    %3131 = vmatprep.subr.mxu0 0.0
    %3132 = vmatpush2.msra.mxu0 0.0
    %3133 = vmatprep.subr.mxu0 0.0
    %3134 = vmatpush2.msra.mxu0 0.0
    %3135 = vmatprep.subr.mxu0 0.0
    %3136 = vmatpush2.msra.mxu0 0.0
    %3137 = vmatprep.subr.mxu0 0.0
    %3138 = vmatpush2.msra.mxu0 0.0
    %3139 = vmatprep.subr.mxu0 0.0
    %3140 = vmatpush2.msra.mxu0 0.0
    %3141 = vmatprep.subr.mxu0 0.0
    %3142 = vmatpush2.msra.mxu0 0.0
    %3143 = vmatprep.subr.mxu0 0.0
    %3144 = vmatpush2.msra.mxu0 0.0
    %3145 = vmatprep.subr.mxu0 0.0
    %3146 = vmatpush2.msra.mxu0 0.0
    %3147 = vmatprep.subr.mxu0 0.0
    %3148 = vmatpush2.msra.mxu0 0.0
    %3149 = vmatprep.subr.mxu0 0.0
    %3150 = vmatpush2.msra.mxu0 0.0
    %3151 = vmatprep.subr.mxu0 0.0
    %3152 = vmatpush2.msra.mxu0 0.0
    %3153 = vmatprep.subr.mxu0 0.0
    %3154 = vmatpush2.msra.mxu0 0.0
    %3155 = vmatprep.subr.mxu0 0.0
    %3156 = vmatpush2.msra.mxu0 0.0
    %3157 = vmatprep.subr.mxu0 0.0
    %3158 = vmatpush2.msra.mxu0 0.0
    %3159 = vmatprep.subr.mxu0 0.0
    %3160 = vmatpush2.msra.mxu0 0.0
    %3161 = vmatprep.subr.mxu0 0.0
    %3162 = vmatpush2.msra.mxu0 0.0
    %3163 = vmatprep.mubr.f32.mxu0 0.0
    %v3164 = vand.u32 %v3016, 4294901760
    %3165 = vmatmul.mubr.f32.gmra.mxu0 %v3164
    %v3166 = vpop.f32.mrf.mxu0
    %v3167 = vadd.f32 %v3091, %v3166
    %v3168 = vpop.f32.mrf.mxu0
    %3169 = vdwg.mxu0
    %3170 = vmatprep.subr.mxu0 0.0
    %3171 = vmatpush1.msra.mxu0 0.0
    %3172 = vmatprep.subr.mxu0 0.0
    %3173 = vmatpush1.msra.mxu0 0.0
    %3174 = vmatprep.subr.mxu0 0.0
    %3175 = vmatpush1.msra.mxu0 0.0
    %3176 = vmatprep.subr.mxu0 0.0
    %3177 = vmatpush1.msra.mxu0 0.0
    %3178 = vmatprep.subr.mxu0 0.0
    %3179 = vmatpush1.msra.mxu0 0.0
    %3180 = vmatprep.subr.mxu0 0.0
    %3181 = vmatpush1.msra.mxu0 0.0
    %3182 = vmatprep.subr.mxu0 0.0
    %3183 = vmatpush1.msra.mxu0 0.0
    %3184 = vmatprep.subr.mxu0 0.0
    %3185 = vmatpush1.msra.mxu0 0.0
    %3186 = vmatprep.subr.mxu0 0.0
    %3187 = vmatpush1.msra.mxu0 0.0
    %3188 = vmatprep.subr.mxu0 0.0
    %3189 = vmatpush1.msra.mxu0 0.0
    %3190 = vmatprep.subr.mxu0 0.0
    %3191 = vmatpush1.msra.mxu0 0.0
    %3192 = vmatprep.subr.mxu0 0.0
    %3193 = vmatpush1.msra.mxu0 0.0
    %3194 = vmatprep.subr.mxu0 0.0
    %3195 = vmatpush1.msra.mxu0 0.0
    %3196 = vmatprep.subr.mxu0 0.0
    %3197 = vmatpush1.msra.mxu0 0.0
    %3198 = vmatprep.subr.mxu0 0.0
    %3199 = vmatpush1.msra.mxu0 0.0
    %3200 = vmatprep.subr.mxu0 0.0
    %v3201 = vand.u32 %v72, 4294901760
    %v3202 = vsub.f32 %v72, %v3201
    %3203 = vmatpush1.msra.mxu0 %v3202
    %3204 = vmatprep.subr.mxu0 0.0
    %3205 = vmatpush2.msra.mxu0 0.0
    %3206 = vmatprep.subr.mxu0 0.0
    %3207 = vmatpush2.msra.mxu0 0.0
    %3208 = vmatprep.subr.mxu0 0.0
    %3209 = vmatpush2.msra.mxu0 0.0
    %3210 = vmatprep.subr.mxu0 0.0
    %3211 = vmatpush2.msra.mxu0 0.0
    %3212 = vmatprep.subr.mxu0 0.0
    %3213 = vmatpush2.msra.mxu0 0.0
    %3214 = vmatprep.subr.mxu0 0.0
    %3215 = vmatpush2.msra.mxu0 0.0
    %3216 = vmatprep.subr.mxu0 0.0
    %3217 = vmatpush2.msra.mxu0 0.0
    %3218 = vmatprep.subr.mxu0 0.0
    %3219 = vmatpush2.msra.mxu0 0.0
    %3220 = vmatprep.subr.mxu0 0.0
    %3221 = vmatpush2.msra.mxu0 0.0
    %3222 = vmatprep.subr.mxu0 0.0
    %3223 = vmatpush2.msra.mxu0 0.0
    %3224 = vmatprep.subr.mxu0 0.0
    %3225 = vmatpush2.msra.mxu0 0.0
    %3226 = vmatprep.subr.mxu0 0.0
    %3227 = vmatpush2.msra.mxu0 0.0
    %3228 = vmatprep.subr.mxu0 0.0
    %3229 = vmatpush2.msra.mxu0 0.0
    %3230 = vmatprep.subr.mxu0 0.0
    %3231 = vmatpush2.msra.mxu0 0.0
    %3232 = vmatprep.subr.mxu0 0.0
    %3233 = vmatpush2.msra.mxu0 0.0
    %3234 = vmatprep.subr.mxu0 0.0
    %3235 = vmatpush2.msra.mxu0 0.0
    %3236 = vmatprep.mubr.f32.mxu0 0.0
    %v3237 = vand.u32 %v3016, 4294901760
    %v3238 = vsub.f32 %v3016, %v3237
    %3239 = vmatmul.mubr.f32.gmra.mxu0 %v3238
    %v3240 = vpop.f32.mrf.mxu0
    %v3241 = vadd.f32 %v3167, %v3240
    %v3242 = vpop.f32.mrf.mxu0
    %3243 = vdwg.mxu0
    %3244 = vmatprep.subr.mxu0 0.0
    %3245 = vmatpush1.msra.mxu0 0.0
    %3246 = vmatprep.subr.mxu0 0.0
    %3247 = vmatpush1.msra.mxu0 0.0
    %3248 = vmatprep.subr.mxu0 0.0
    %3249 = vmatpush1.msra.mxu0 0.0
    %3250 = vmatprep.subr.mxu0 0.0
    %3251 = vmatpush1.msra.mxu0 0.0
    %3252 = vmatprep.subr.mxu0 0.0
    %3253 = vmatpush1.msra.mxu0 0.0
    %3254 = vmatprep.subr.mxu0 0.0
    %3255 = vmatpush1.msra.mxu0 0.0
    %3256 = vmatprep.subr.mxu0 0.0
    %3257 = vmatpush1.msra.mxu0 0.0
    %3258 = vmatprep.subr.mxu0 0.0
    %3259 = vmatpush1.msra.mxu0 0.0
    %3260 = vmatprep.subr.mxu0 0.0
    %3261 = vmatpush1.msra.mxu0 0.0
    %3262 = vmatprep.subr.mxu0 0.0
    %3263 = vmatpush1.msra.mxu0 0.0
    %3264 = vmatprep.subr.mxu0 0.0
    %3265 = vmatpush1.msra.mxu0 0.0
    %3266 = vmatprep.subr.mxu0 0.0
    %3267 = vmatpush1.msra.mxu0 0.0
    %3268 = vmatprep.subr.mxu0 0.0
    %3269 = vmatpush1.msra.mxu0 0.0
    %3270 = vmatprep.subr.mxu0 0.0
    %3271 = vmatpush1.msra.mxu0 0.0
    %3272 = vmatprep.subr.mxu0 0.0
    %3273 = vmatpush1.msra.mxu0 0.0
    %3274 = vmatprep.subr.mxu0 0.0
    %v3275 = vand.u32 %v72, 4294901760
    %3276 = vmatpush1.msra.mxu0 %v3275
    %3277 = vmatprep.subr.mxu0 0.0
    %3278 = vmatpush2.msra.mxu0 0.0
    %3279 = vmatprep.subr.mxu0 0.0
    %3280 = vmatpush2.msra.mxu0 0.0
    %3281 = vmatprep.subr.mxu0 0.0
    %3282 = vmatpush2.msra.mxu0 0.0
    %3283 = vmatprep.subr.mxu0 0.0
    %3284 = vmatpush2.msra.mxu0 0.0
    %3285 = vmatprep.subr.mxu0 0.0
    %3286 = vmatpush2.msra.mxu0 0.0
    %3287 = vmatprep.subr.mxu0 0.0
    %3288 = vmatpush2.msra.mxu0 0.0
    %3289 = vmatprep.subr.mxu0 0.0
    %3290 = vmatpush2.msra.mxu0 0.0
    %3291 = vmatprep.subr.mxu0 0.0
    %3292 = vmatpush2.msra.mxu0 0.0
    %3293 = vmatprep.subr.mxu0 0.0
    %3294 = vmatpush2.msra.mxu0 0.0
    %3295 = vmatprep.subr.mxu0 0.0
    %3296 = vmatpush2.msra.mxu0 0.0
    %3297 = vmatprep.subr.mxu0 0.0
    %3298 = vmatpush2.msra.mxu0 0.0
    %3299 = vmatprep.subr.mxu0 0.0
    %3300 = vmatpush2.msra.mxu0 0.0
    %3301 = vmatprep.subr.mxu0 0.0
    %3302 = vmatpush2.msra.mxu0 0.0
    %3303 = vmatprep.subr.mxu0 0.0
    %3304 = vmatpush2.msra.mxu0 0.0
    %3305 = vmatprep.subr.mxu0 0.0
    %3306 = vmatpush2.msra.mxu0 0.0
    %3307 = vmatprep.subr.mxu0 0.0
    %3308 = vmatpush2.msra.mxu0 0.0
    %3309 = vmatprep.mubr.f32.mxu0 0.0
    %v3310 = vand.u32 %v3016, 4294901760
    %v3311 = vsub.f32 %v3016, %v3310
    %v3312 = vand.u32 %v3311, 4294901760
    %3313 = vmatmul.mubr.f32.gmra.mxu0 %v3312
    %v3314 = vpop.f32.mrf.mxu0
    %v3315 = vadd.f32 %v3241, %v3314
    %v3316 = vpop.f32.mrf.mxu0
    %3317 = vdwg.mxu0
    %3318 = vmatprep.subr.mxu0 0.0
    %3319 = vmatpush1.msra.mxu0 0.0
    %3320 = vmatprep.subr.mxu0 0.0
    %3321 = vmatpush1.msra.mxu0 0.0
    %3322 = vmatprep.subr.mxu0 0.0
    %3323 = vmatpush1.msra.mxu0 0.0
    %3324 = vmatprep.subr.mxu0 0.0
    %3325 = vmatpush1.msra.mxu0 0.0
    %3326 = vmatprep.subr.mxu0 0.0
    %3327 = vmatpush1.msra.mxu0 0.0
    %3328 = vmatprep.subr.mxu0 0.0
    %3329 = vmatpush1.msra.mxu0 0.0
    %3330 = vmatprep.subr.mxu0 0.0
    %3331 = vmatpush1.msra.mxu0 0.0
    %3332 = vmatprep.subr.mxu0 0.0
    %3333 = vmatpush1.msra.mxu0 0.0
    %3334 = vmatprep.subr.mxu0 0.0
    %3335 = vmatpush1.msra.mxu0 0.0
    %3336 = vmatprep.subr.mxu0 0.0
    %3337 = vmatpush1.msra.mxu0 0.0
    %3338 = vmatprep.subr.mxu0 0.0
    %3339 = vmatpush1.msra.mxu0 0.0
    %3340 = vmatprep.subr.mxu0 0.0
    %3341 = vmatpush1.msra.mxu0 0.0
    %3342 = vmatprep.subr.mxu0 0.0
    %3343 = vmatpush1.msra.mxu0 0.0
    %3344 = vmatprep.subr.mxu0 0.0
    %3345 = vmatpush1.msra.mxu0 0.0
    %3346 = vmatprep.subr.mxu0 0.0
    %3347 = vmatpush1.msra.mxu0 0.0
    %3348 = vmatprep.subr.mxu0 0.0
    %v3349 = vand.u32 %v72, 4294901760
    %v3350 = vsub.f32 %v72, %v3349
    %v3351 = vand.u32 %v3350, 4294901760
    %3352 = vmatpush1.msra.mxu0 %v3351
    %3353 = vmatprep.subr.mxu0 0.0
    %3354 = vmatpush2.msra.mxu0 0.0
    %3355 = vmatprep.subr.mxu0 0.0
    %3356 = vmatpush2.msra.mxu0 0.0
    %3357 = vmatprep.subr.mxu0 0.0
    %3358 = vmatpush2.msra.mxu0 0.0
    %3359 = vmatprep.subr.mxu0 0.0
    %3360 = vmatpush2.msra.mxu0 0.0
    %3361 = vmatprep.subr.mxu0 0.0
    %3362 = vmatpush2.msra.mxu0 0.0
    %3363 = vmatprep.subr.mxu0 0.0
    %3364 = vmatpush2.msra.mxu0 0.0
    %3365 = vmatprep.subr.mxu0 0.0
    %3366 = vmatpush2.msra.mxu0 0.0
    %3367 = vmatprep.subr.mxu0 0.0
    %3368 = vmatpush2.msra.mxu0 0.0
    %3369 = vmatprep.subr.mxu0 0.0
    %3370 = vmatpush2.msra.mxu0 0.0
    %3371 = vmatprep.subr.mxu0 0.0
    %3372 = vmatpush2.msra.mxu0 0.0
    %3373 = vmatprep.subr.mxu0 0.0
    %3374 = vmatpush2.msra.mxu0 0.0
    %3375 = vmatprep.subr.mxu0 0.0
    %3376 = vmatpush2.msra.mxu0 0.0
    %3377 = vmatprep.subr.mxu0 0.0
    %3378 = vmatpush2.msra.mxu0 0.0
    %3379 = vmatprep.subr.mxu0 0.0
    %3380 = vmatpush2.msra.mxu0 0.0
    %3381 = vmatprep.subr.mxu0 0.0
    %3382 = vmatpush2.msra.mxu0 0.0
    %3383 = vmatprep.subr.mxu0 0.0
    %3384 = vmatpush2.msra.mxu0 0.0
    %3385 = vmatprep.mubr.f32.mxu0 0.0
    %v3386 = vand.u32 %v3016, 4294901760
    %3387 = vmatmul.mubr.f32.gmra.mxu0 %v3386
    %v3388 = vpop.f32.mrf.mxu0
    %v3389 = vadd.f32 %v3315, %v3388
    %v3390 = vpop.f32.mrf.mxu0
    %3391 = vdwg.mxu0
    %3392 = vmatprep.subr.mxu0 0.0
    %3393 = vmatpush1.msra.mxu0 0.0
    %3394 = vmatprep.subr.mxu0 0.0
    %3395 = vmatpush1.msra.mxu0 0.0
    %3396 = vmatprep.subr.mxu0 0.0
    %3397 = vmatpush1.msra.mxu0 0.0
    %3398 = vmatprep.subr.mxu0 0.0
    %3399 = vmatpush1.msra.mxu0 0.0
    %3400 = vmatprep.subr.mxu0 0.0
    %3401 = vmatpush1.msra.mxu0 0.0
    %3402 = vmatprep.subr.mxu0 0.0
    %3403 = vmatpush1.msra.mxu0 0.0
    %3404 = vmatprep.subr.mxu0 0.0
    %3405 = vmatpush1.msra.mxu0 0.0
    %3406 = vmatprep.subr.mxu0 0.0
    %3407 = vmatpush1.msra.mxu0 0.0
    %3408 = vmatprep.subr.mxu0 0.0
    %3409 = vmatpush1.msra.mxu0 0.0
    %3410 = vmatprep.subr.mxu0 0.0
    %3411 = vmatpush1.msra.mxu0 0.0
    %3412 = vmatprep.subr.mxu0 0.0
    %3413 = vmatpush1.msra.mxu0 0.0
    %3414 = vmatprep.subr.mxu0 0.0
    %3415 = vmatpush1.msra.mxu0 0.0
    %3416 = vmatprep.subr.mxu0 0.0
    %3417 = vmatpush1.msra.mxu0 0.0
    %3418 = vmatprep.subr.mxu0 0.0
    %3419 = vmatpush1.msra.mxu0 0.0
    %3420 = vmatprep.subr.mxu0 0.0
    %3421 = vmatpush1.msra.mxu0 0.0
    %3422 = vmatprep.subr.mxu0 0.0
    %v3423 = vand.u32 %v72, 4294901760
    %3424 = vmatpush1.msra.mxu0 %v3423
    %3425 = vmatprep.subr.mxu0 0.0
    %3426 = vmatpush2.msra.mxu0 0.0
    %3427 = vmatprep.subr.mxu0 0.0
    %3428 = vmatpush2.msra.mxu0 0.0
    %3429 = vmatprep.subr.mxu0 0.0
    %3430 = vmatpush2.msra.mxu0 0.0
    %3431 = vmatprep.subr.mxu0 0.0
    %3432 = vmatpush2.msra.mxu0 0.0
    %3433 = vmatprep.subr.mxu0 0.0
    %3434 = vmatpush2.msra.mxu0 0.0
    %3435 = vmatprep.subr.mxu0 0.0
    %3436 = vmatpush2.msra.mxu0 0.0
    %3437 = vmatprep.subr.mxu0 0.0
    %3438 = vmatpush2.msra.mxu0 0.0
    %3439 = vmatprep.subr.mxu0 0.0
    %3440 = vmatpush2.msra.mxu0 0.0
    %3441 = vmatprep.subr.mxu0 0.0
    %3442 = vmatpush2.msra.mxu0 0.0
    %3443 = vmatprep.subr.mxu0 0.0
    %3444 = vmatpush2.msra.mxu0 0.0
    %3445 = vmatprep.subr.mxu0 0.0
    %3446 = vmatpush2.msra.mxu0 0.0
    %3447 = vmatprep.subr.mxu0 0.0
    %3448 = vmatpush2.msra.mxu0 0.0
    %3449 = vmatprep.subr.mxu0 0.0
    %3450 = vmatpush2.msra.mxu0 0.0
    %3451 = vmatprep.subr.mxu0 0.0
    %3452 = vmatpush2.msra.mxu0 0.0
    %3453 = vmatprep.subr.mxu0 0.0
    %3454 = vmatpush2.msra.mxu0 0.0
    %3455 = vmatprep.subr.mxu0 0.0
    %3456 = vmatpush2.msra.mxu0 0.0
    %3457 = vmatprep.mubr.f32.mxu0 0.0
    %v3458 = vand.u32 %v3016, 4294901760
    %3459 = vmatmul.mubr.f32.gmra.mxu0 %v3458
    %v3460 = vpop.f32.mrf.mxu0
    %v3461 = vadd.f32 %v3389, %v3460
    %v3462 = vpop.f32.mrf.mxu0
    %3463 = vdwg.mxu0
    %v3464 = vadd.f32 %v2979, %v3461
    %s3465 = sadd.s32 %s18, 56
    %s3466 = scalar_lea.vmem %s1, %s3465
    %v3467 = vld [vmem:[%s3466] sm:$0xff]
    %3468 = vxpose.xlu0.b32.start [1/16] %v3467, 128
    %3469 = vxpose.xlu0.b32.cont [2/16] 0.0, 128
    %3470 = vxpose.xlu0.b32.cont [3/16] 0.0, 128
    %3471 = vxpose.xlu0.b32.cont [4/16] 0.0, 128
    %3472 = vxpose.xlu0.b32.cont [5/16] 0.0, 128
    %3473 = vxpose.xlu0.b32.cont [6/16] 0.0, 128
    %3474 = vxpose.xlu0.b32.cont [7/16] 0.0, 128
    %3475 = vxpose.xlu0.b32.cont [8/16] 0.0, 128
    %3476 = vxpose.xlu0.b32.cont [9/16] 0.0, 128
    %3477 = vxpose.xlu0.b32.cont [10/16] 0.0, 128
    %3478 = vxpose.xlu0.b32.cont [11/16] 0.0, 128
    %3479 = vxpose.xlu0.b32.cont [12/16] 0.0, 128
    %3480 = vxpose.xlu0.b32.cont [13/16] 0.0, 128
    %3481 = vxpose.xlu0.b32.cont [14/16] 0.0, 128
    %3482 = vxpose.xlu0.b32.cont [15/16] 0.0, 128
    %3483 = vxpose.xlu0.b32.end [16/16] 0.0, 128
    %v3484 = vpop.trf.xlu0
    %v3485 = vpop.trf.xlu0
    %v3486 = vpop.trf.xlu0
    %v3487 = vpop.trf.xlu0
    %v3488 = vpop.trf.xlu0
    %v3489 = vpop.trf.xlu0
    %v3490 = vpop.trf.xlu0
    %v3491 = vpop.trf.xlu0
    %v3492 = vpop.trf.xlu0
    %v3493 = vpop.trf.xlu0
    %v3494 = vpop.trf.xlu0
    %v3495 = vpop.trf.xlu0
    %v3496 = vpop.trf.xlu0
    %v3497 = vpop.trf.xlu0
    %v3498 = vpop.trf.xlu0
    %v3499 = vpop.trf.xlu0
    %v3501 = vsel %vm53, %v3484, 0
    %3503 = vmatprep.subr.mxu0 0.0
    %3504 = vmatpush1.msra.mxu0 0.0
    %3505 = vmatprep.subr.mxu0 0.0
    %3506 = vmatpush1.msra.mxu0 0.0
    %3507 = vmatprep.subr.mxu0 0.0
    %3508 = vmatpush1.msra.mxu0 0.0
    %3509 = vmatprep.subr.mxu0 0.0
    %3510 = vmatpush1.msra.mxu0 0.0
    %3511 = vmatprep.subr.mxu0 0.0
    %3512 = vmatpush1.msra.mxu0 0.0
    %3513 = vmatprep.subr.mxu0 0.0
    %3514 = vmatpush1.msra.mxu0 0.0
    %3515 = vmatprep.subr.mxu0 0.0
    %3516 = vmatpush1.msra.mxu0 0.0
    %3517 = vmatprep.subr.mxu0 0.0
    %3518 = vmatpush1.msra.mxu0 0.0
    %3519 = vmatprep.subr.mxu0 0.0
    %3520 = vmatpush1.msra.mxu0 0.0
    %3521 = vmatprep.subr.mxu0 0.0
    %3522 = vmatpush1.msra.mxu0 0.0
    %3523 = vmatprep.subr.mxu0 0.0
    %3524 = vmatpush1.msra.mxu0 0.0
    %3525 = vmatprep.subr.mxu0 0.0
    %3526 = vmatpush1.msra.mxu0 0.0
    %3527 = vmatprep.subr.mxu0 0.0
    %3528 = vmatpush1.msra.mxu0 0.0
    %3529 = vmatprep.subr.mxu0 0.0
    %3530 = vmatpush1.msra.mxu0 0.0
    %3531 = vmatprep.subr.mxu0 0.0
    %3532 = vmatpush1.msra.mxu0 0.0
    %3533 = vmatprep.subr.mxu0 0.0
    %v3534 = vand.u32 %v23, 4294901760
    %3535 = vmatpush1.msra.mxu0 %v3534
    %3536 = vmatprep.subr.mxu0 0.0
    %3537 = vmatpush2.msra.mxu0 0.0
    %3538 = vmatprep.subr.mxu0 0.0
    %3539 = vmatpush2.msra.mxu0 0.0
    %3540 = vmatprep.subr.mxu0 0.0
    %3541 = vmatpush2.msra.mxu0 0.0
    %3542 = vmatprep.subr.mxu0 0.0
    %3543 = vmatpush2.msra.mxu0 0.0
    %3544 = vmatprep.subr.mxu0 0.0
    %3545 = vmatpush2.msra.mxu0 0.0
    %3546 = vmatprep.subr.mxu0 0.0
    %3547 = vmatpush2.msra.mxu0 0.0
    %3548 = vmatprep.subr.mxu0 0.0
    %3549 = vmatpush2.msra.mxu0 0.0
    %3550 = vmatprep.subr.mxu0 0.0
    %3551 = vmatpush2.msra.mxu0 0.0
    %3552 = vmatprep.subr.mxu0 0.0
    %3553 = vmatpush2.msra.mxu0 0.0
    %3554 = vmatprep.subr.mxu0 0.0
    %3555 = vmatpush2.msra.mxu0 0.0
    %3556 = vmatprep.subr.mxu0 0.0
    %3557 = vmatpush2.msra.mxu0 0.0
    %3558 = vmatprep.subr.mxu0 0.0
    %3559 = vmatpush2.msra.mxu0 0.0
    %3560 = vmatprep.subr.mxu0 0.0
    %3561 = vmatpush2.msra.mxu0 0.0
    %3562 = vmatprep.subr.mxu0 0.0
    %3563 = vmatpush2.msra.mxu0 0.0
    %3564 = vmatprep.subr.mxu0 0.0
    %3565 = vmatpush2.msra.mxu0 0.0
    %3566 = vmatprep.subr.mxu0 0.0
    %3567 = vmatpush2.msra.mxu0 0.0
    %3568 = vmatprep.mubr.f32.mxu0 0.0
    %v3569 = vand.u32 %v3501, 4294901760
    %v3570 = vsub.f32 %v3501, %v3569
    %v3571 = vand.u32 %v3570, 4294901760
    %v3572 = vsub.f32 %v3570, %v3571
    %v3573 = vand.u32 %v3572, 4294901760
    %3574 = vmatmul.mubr.f32.gmra.mxu0 %v3573
    %v3575 = vpop.f32.mrf.mxu0
    %v3576 = vadd.f32 0.0, %v3575
    %v3577 = vpop.f32.mrf.mxu0
    %3578 = vdwg.mxu0
    %3579 = vmatprep.subr.mxu0 0.0
    %3580 = vmatpush1.msra.mxu0 0.0
    %3581 = vmatprep.subr.mxu0 0.0
    %3582 = vmatpush1.msra.mxu0 0.0
    %3583 = vmatprep.subr.mxu0 0.0
    %3584 = vmatpush1.msra.mxu0 0.0
    %3585 = vmatprep.subr.mxu0 0.0
    %3586 = vmatpush1.msra.mxu0 0.0
    %3587 = vmatprep.subr.mxu0 0.0
    %3588 = vmatpush1.msra.mxu0 0.0
    %3589 = vmatprep.subr.mxu0 0.0
    %3590 = vmatpush1.msra.mxu0 0.0
    %3591 = vmatprep.subr.mxu0 0.0
    %3592 = vmatpush1.msra.mxu0 0.0
    %3593 = vmatprep.subr.mxu0 0.0
    %3594 = vmatpush1.msra.mxu0 0.0
    %3595 = vmatprep.subr.mxu0 0.0
    %3596 = vmatpush1.msra.mxu0 0.0
    %3597 = vmatprep.subr.mxu0 0.0
    %3598 = vmatpush1.msra.mxu0 0.0
    %3599 = vmatprep.subr.mxu0 0.0
    %3600 = vmatpush1.msra.mxu0 0.0
    %3601 = vmatprep.subr.mxu0 0.0
    %3602 = vmatpush1.msra.mxu0 0.0
    %3603 = vmatprep.subr.mxu0 0.0
    %3604 = vmatpush1.msra.mxu0 0.0
    %3605 = vmatprep.subr.mxu0 0.0
    %3606 = vmatpush1.msra.mxu0 0.0
    %3607 = vmatprep.subr.mxu0 0.0
    %3608 = vmatpush1.msra.mxu0 0.0
    %3609 = vmatprep.subr.mxu0 0.0
    %v3610 = vand.u32 %v23, 4294901760
    %v3611 = vsub.f32 %v23, %v3610
    %v3612 = vand.u32 %v3611, 4294901760
    %v3613 = vsub.f32 %v3611, %v3612
    %v3614 = vand.u32 %v3613, 4294901760
    %3615 = vmatpush1.msra.mxu0 %v3614
    %3616 = vmatprep.subr.mxu0 0.0
    %3617 = vmatpush2.msra.mxu0 0.0
    %3618 = vmatprep.subr.mxu0 0.0
    %3619 = vmatpush2.msra.mxu0 0.0
    %3620 = vmatprep.subr.mxu0 0.0
    %3621 = vmatpush2.msra.mxu0 0.0
    %3622 = vmatprep.subr.mxu0 0.0
    %3623 = vmatpush2.msra.mxu0 0.0
    %3624 = vmatprep.subr.mxu0 0.0
    %3625 = vmatpush2.msra.mxu0 0.0
    %3626 = vmatprep.subr.mxu0 0.0
    %3627 = vmatpush2.msra.mxu0 0.0
    %3628 = vmatprep.subr.mxu0 0.0
    %3629 = vmatpush2.msra.mxu0 0.0
    %3630 = vmatprep.subr.mxu0 0.0
    %3631 = vmatpush2.msra.mxu0 0.0
    %3632 = vmatprep.subr.mxu0 0.0
    %3633 = vmatpush2.msra.mxu0 0.0
    %3634 = vmatprep.subr.mxu0 0.0
    %3635 = vmatpush2.msra.mxu0 0.0
    %3636 = vmatprep.subr.mxu0 0.0
    %3637 = vmatpush2.msra.mxu0 0.0
    %3638 = vmatprep.subr.mxu0 0.0
    %3639 = vmatpush2.msra.mxu0 0.0
    %3640 = vmatprep.subr.mxu0 0.0
    %3641 = vmatpush2.msra.mxu0 0.0
    %3642 = vmatprep.subr.mxu0 0.0
    %3643 = vmatpush2.msra.mxu0 0.0
    %3644 = vmatprep.subr.mxu0 0.0
    %3645 = vmatpush2.msra.mxu0 0.0
    %3646 = vmatprep.subr.mxu0 0.0
    %3647 = vmatpush2.msra.mxu0 0.0
    %3648 = vmatprep.mubr.f32.mxu0 0.0
    %v3649 = vand.u32 %v3501, 4294901760
    %3650 = vmatmul.mubr.f32.gmra.mxu0 %v3649
    %v3651 = vpop.f32.mrf.mxu0
    %v3652 = vadd.f32 %v3576, %v3651
    %v3653 = vpop.f32.mrf.mxu0
    %3654 = vdwg.mxu0
    %3655 = vmatprep.subr.mxu0 0.0
    %3656 = vmatpush1.msra.mxu0 0.0
    %3657 = vmatprep.subr.mxu0 0.0
    %3658 = vmatpush1.msra.mxu0 0.0
    %3659 = vmatprep.subr.mxu0 0.0
    %3660 = vmatpush1.msra.mxu0 0.0
    %3661 = vmatprep.subr.mxu0 0.0
    %3662 = vmatpush1.msra.mxu0 0.0
    %3663 = vmatprep.subr.mxu0 0.0
    %3664 = vmatpush1.msra.mxu0 0.0
    %3665 = vmatprep.subr.mxu0 0.0
    %3666 = vmatpush1.msra.mxu0 0.0
    %3667 = vmatprep.subr.mxu0 0.0
    %3668 = vmatpush1.msra.mxu0 0.0
    %3669 = vmatprep.subr.mxu0 0.0
    %3670 = vmatpush1.msra.mxu0 0.0
    %3671 = vmatprep.subr.mxu0 0.0
    %3672 = vmatpush1.msra.mxu0 0.0
    %3673 = vmatprep.subr.mxu0 0.0
    %3674 = vmatpush1.msra.mxu0 0.0
    %3675 = vmatprep.subr.mxu0 0.0
    %3676 = vmatpush1.msra.mxu0 0.0
    %3677 = vmatprep.subr.mxu0 0.0
    %3678 = vmatpush1.msra.mxu0 0.0
    %3679 = vmatprep.subr.mxu0 0.0
    %3680 = vmatpush1.msra.mxu0 0.0
    %3681 = vmatprep.subr.mxu0 0.0
    %3682 = vmatpush1.msra.mxu0 0.0
    %3683 = vmatprep.subr.mxu0 0.0
    %3684 = vmatpush1.msra.mxu0 0.0
    %3685 = vmatprep.subr.mxu0 0.0
    %v3686 = vand.u32 %v23, 4294901760
    %v3687 = vsub.f32 %v23, %v3686
    %3688 = vmatpush1.msra.mxu0 %v3687
    %3689 = vmatprep.subr.mxu0 0.0
    %3690 = vmatpush2.msra.mxu0 0.0
    %3691 = vmatprep.subr.mxu0 0.0
    %3692 = vmatpush2.msra.mxu0 0.0
    %3693 = vmatprep.subr.mxu0 0.0
    %3694 = vmatpush2.msra.mxu0 0.0
    %3695 = vmatprep.subr.mxu0 0.0
    %3696 = vmatpush2.msra.mxu0 0.0
    %3697 = vmatprep.subr.mxu0 0.0
    %3698 = vmatpush2.msra.mxu0 0.0
    %3699 = vmatprep.subr.mxu0 0.0
    %3700 = vmatpush2.msra.mxu0 0.0
    %3701 = vmatprep.subr.mxu0 0.0
    %3702 = vmatpush2.msra.mxu0 0.0
    %3703 = vmatprep.subr.mxu0 0.0
    %3704 = vmatpush2.msra.mxu0 0.0
    %3705 = vmatprep.subr.mxu0 0.0
    %3706 = vmatpush2.msra.mxu0 0.0
    %3707 = vmatprep.subr.mxu0 0.0
    %3708 = vmatpush2.msra.mxu0 0.0
    %3709 = vmatprep.subr.mxu0 0.0
    %3710 = vmatpush2.msra.mxu0 0.0
    %3711 = vmatprep.subr.mxu0 0.0
    %3712 = vmatpush2.msra.mxu0 0.0
    %3713 = vmatprep.subr.mxu0 0.0
    %3714 = vmatpush2.msra.mxu0 0.0
    %3715 = vmatprep.subr.mxu0 0.0
    %3716 = vmatpush2.msra.mxu0 0.0
    %3717 = vmatprep.subr.mxu0 0.0
    %3718 = vmatpush2.msra.mxu0 0.0
    %3719 = vmatprep.subr.mxu0 0.0
    %3720 = vmatpush2.msra.mxu0 0.0
    %3721 = vmatprep.mubr.f32.mxu0 0.0
    %v3722 = vand.u32 %v3501, 4294901760
    %v3723 = vsub.f32 %v3501, %v3722
    %3724 = vmatmul.mubr.f32.gmra.mxu0 %v3723
    %v3725 = vpop.f32.mrf.mxu0
    %v3726 = vadd.f32 %v3652, %v3725
    %v3727 = vpop.f32.mrf.mxu0
    %3728 = vdwg.mxu0
    %3729 = vmatprep.subr.mxu0 0.0
    %3730 = vmatpush1.msra.mxu0 0.0
    %3731 = vmatprep.subr.mxu0 0.0
    %3732 = vmatpush1.msra.mxu0 0.0
    %3733 = vmatprep.subr.mxu0 0.0
    %3734 = vmatpush1.msra.mxu0 0.0
    %3735 = vmatprep.subr.mxu0 0.0
    %3736 = vmatpush1.msra.mxu0 0.0
    %3737 = vmatprep.subr.mxu0 0.0
    %3738 = vmatpush1.msra.mxu0 0.0
    %3739 = vmatprep.subr.mxu0 0.0
    %3740 = vmatpush1.msra.mxu0 0.0
    %3741 = vmatprep.subr.mxu0 0.0
    %3742 = vmatpush1.msra.mxu0 0.0
    %3743 = vmatprep.subr.mxu0 0.0
    %3744 = vmatpush1.msra.mxu0 0.0
    %3745 = vmatprep.subr.mxu0 0.0
    %3746 = vmatpush1.msra.mxu0 0.0
    %3747 = vmatprep.subr.mxu0 0.0
    %3748 = vmatpush1.msra.mxu0 0.0
    %3749 = vmatprep.subr.mxu0 0.0
    %3750 = vmatpush1.msra.mxu0 0.0
    %3751 = vmatprep.subr.mxu0 0.0
    %3752 = vmatpush1.msra.mxu0 0.0
    %3753 = vmatprep.subr.mxu0 0.0
    %3754 = vmatpush1.msra.mxu0 0.0
    %3755 = vmatprep.subr.mxu0 0.0
    %3756 = vmatpush1.msra.mxu0 0.0
    %3757 = vmatprep.subr.mxu0 0.0
    %3758 = vmatpush1.msra.mxu0 0.0
    %3759 = vmatprep.subr.mxu0 0.0
    %v3760 = vand.u32 %v23, 4294901760
    %3761 = vmatpush1.msra.mxu0 %v3760
    %3762 = vmatprep.subr.mxu0 0.0
    %3763 = vmatpush2.msra.mxu0 0.0
    %3764 = vmatprep.subr.mxu0 0.0
    %3765 = vmatpush2.msra.mxu0 0.0
    %3766 = vmatprep.subr.mxu0 0.0
    %3767 = vmatpush2.msra.mxu0 0.0
    %3768 = vmatprep.subr.mxu0 0.0
    %3769 = vmatpush2.msra.mxu0 0.0
    %3770 = vmatprep.subr.mxu0 0.0
    %3771 = vmatpush2.msra.mxu0 0.0
    %3772 = vmatprep.subr.mxu0 0.0
    %3773 = vmatpush2.msra.mxu0 0.0
    %3774 = vmatprep.subr.mxu0 0.0
    %3775 = vmatpush2.msra.mxu0 0.0
    %3776 = vmatprep.subr.mxu0 0.0
    %3777 = vmatpush2.msra.mxu0 0.0
    %3778 = vmatprep.subr.mxu0 0.0
    %3779 = vmatpush2.msra.mxu0 0.0
    %3780 = vmatprep.subr.mxu0 0.0
    %3781 = vmatpush2.msra.mxu0 0.0
    %3782 = vmatprep.subr.mxu0 0.0
    %3783 = vmatpush2.msra.mxu0 0.0
    %3784 = vmatprep.subr.mxu0 0.0
    %3785 = vmatpush2.msra.mxu0 0.0
    %3786 = vmatprep.subr.mxu0 0.0
    %3787 = vmatpush2.msra.mxu0 0.0
    %3788 = vmatprep.subr.mxu0 0.0
    %3789 = vmatpush2.msra.mxu0 0.0
    %3790 = vmatprep.subr.mxu0 0.0
    %3791 = vmatpush2.msra.mxu0 0.0
    %3792 = vmatprep.subr.mxu0 0.0
    %3793 = vmatpush2.msra.mxu0 0.0
    %3794 = vmatprep.mubr.f32.mxu0 0.0
    %v3795 = vand.u32 %v3501, 4294901760
    %v3796 = vsub.f32 %v3501, %v3795
    %v3797 = vand.u32 %v3796, 4294901760
    %3798 = vmatmul.mubr.f32.gmra.mxu0 %v3797
    %v3799 = vpop.f32.mrf.mxu0
    %v3800 = vadd.f32 %v3726, %v3799
    %v3801 = vpop.f32.mrf.mxu0
    %3802 = vdwg.mxu0
    %3803 = vmatprep.subr.mxu0 0.0
    %3804 = vmatpush1.msra.mxu0 0.0
    %3805 = vmatprep.subr.mxu0 0.0
    %3806 = vmatpush1.msra.mxu0 0.0
    %3807 = vmatprep.subr.mxu0 0.0
    %3808 = vmatpush1.msra.mxu0 0.0
    %3809 = vmatprep.subr.mxu0 0.0
    %3810 = vmatpush1.msra.mxu0 0.0
    %3811 = vmatprep.subr.mxu0 0.0
    %3812 = vmatpush1.msra.mxu0 0.0
    %3813 = vmatprep.subr.mxu0 0.0
    %3814 = vmatpush1.msra.mxu0 0.0
    %3815 = vmatprep.subr.mxu0 0.0
    %3816 = vmatpush1.msra.mxu0 0.0
    %3817 = vmatprep.subr.mxu0 0.0
    %3818 = vmatpush1.msra.mxu0 0.0
    %3819 = vmatprep.subr.mxu0 0.0
    %3820 = vmatpush1.msra.mxu0 0.0
    %3821 = vmatprep.subr.mxu0 0.0
    %3822 = vmatpush1.msra.mxu0 0.0
    %3823 = vmatprep.subr.mxu0 0.0
    %3824 = vmatpush1.msra.mxu0 0.0
    %3825 = vmatprep.subr.mxu0 0.0
    %3826 = vmatpush1.msra.mxu0 0.0
    %3827 = vmatprep.subr.mxu0 0.0
    %3828 = vmatpush1.msra.mxu0 0.0
    %3829 = vmatprep.subr.mxu0 0.0
    %3830 = vmatpush1.msra.mxu0 0.0
    %3831 = vmatprep.subr.mxu0 0.0
    %3832 = vmatpush1.msra.mxu0 0.0
    %3833 = vmatprep.subr.mxu0 0.0
    %v3834 = vand.u32 %v23, 4294901760
    %v3835 = vsub.f32 %v23, %v3834
    %v3836 = vand.u32 %v3835, 4294901760
    %3837 = vmatpush1.msra.mxu0 %v3836
    %3838 = vmatprep.subr.mxu0 0.0
    %3839 = vmatpush2.msra.mxu0 0.0
    %3840 = vmatprep.subr.mxu0 0.0
    %3841 = vmatpush2.msra.mxu0 0.0
    %3842 = vmatprep.subr.mxu0 0.0
    %3843 = vmatpush2.msra.mxu0 0.0
    %3844 = vmatprep.subr.mxu0 0.0
    %3845 = vmatpush2.msra.mxu0 0.0
    %3846 = vmatprep.subr.mxu0 0.0
    %3847 = vmatpush2.msra.mxu0 0.0
    %3848 = vmatprep.subr.mxu0 0.0
    %3849 = vmatpush2.msra.mxu0 0.0
    %3850 = vmatprep.subr.mxu0 0.0
    %3851 = vmatpush2.msra.mxu0 0.0
    %3852 = vmatprep.subr.mxu0 0.0
    %3853 = vmatpush2.msra.mxu0 0.0
    %3854 = vmatprep.subr.mxu0 0.0
    %3855 = vmatpush2.msra.mxu0 0.0
    %3856 = vmatprep.subr.mxu0 0.0
    %3857 = vmatpush2.msra.mxu0 0.0
    %3858 = vmatprep.subr.mxu0 0.0
    %3859 = vmatpush2.msra.mxu0 0.0
    %3860 = vmatprep.subr.mxu0 0.0
    %3861 = vmatpush2.msra.mxu0 0.0
    %3862 = vmatprep.subr.mxu0 0.0
    %3863 = vmatpush2.msra.mxu0 0.0
    %3864 = vmatprep.subr.mxu0 0.0
    %3865 = vmatpush2.msra.mxu0 0.0
    %3866 = vmatprep.subr.mxu0 0.0
    %3867 = vmatpush2.msra.mxu0 0.0
    %3868 = vmatprep.subr.mxu0 0.0
    %3869 = vmatpush2.msra.mxu0 0.0
    %3870 = vmatprep.mubr.f32.mxu0 0.0
    %v3871 = vand.u32 %v3501, 4294901760
    %3872 = vmatmul.mubr.f32.gmra.mxu0 %v3871
    %v3873 = vpop.f32.mrf.mxu0
    %v3874 = vadd.f32 %v3800, %v3873
    %v3875 = vpop.f32.mrf.mxu0
    %3876 = vdwg.mxu0
    %3877 = vmatprep.subr.mxu0 0.0
    %3878 = vmatpush1.msra.mxu0 0.0
    %3879 = vmatprep.subr.mxu0 0.0
    %3880 = vmatpush1.msra.mxu0 0.0
    %3881 = vmatprep.subr.mxu0 0.0
    %3882 = vmatpush1.msra.mxu0 0.0
    %3883 = vmatprep.subr.mxu0 0.0
    %3884 = vmatpush1.msra.mxu0 0.0
    %3885 = vmatprep.subr.mxu0 0.0
    %3886 = vmatpush1.msra.mxu0 0.0
    %3887 = vmatprep.subr.mxu0 0.0
    %3888 = vmatpush1.msra.mxu0 0.0
    %3889 = vmatprep.subr.mxu0 0.0
    %3890 = vmatpush1.msra.mxu0 0.0
    %3891 = vmatprep.subr.mxu0 0.0
    %3892 = vmatpush1.msra.mxu0 0.0
    %3893 = vmatprep.subr.mxu0 0.0
    %3894 = vmatpush1.msra.mxu0 0.0
    %3895 = vmatprep.subr.mxu0 0.0
    %3896 = vmatpush1.msra.mxu0 0.0
    %3897 = vmatprep.subr.mxu0 0.0
    %3898 = vmatpush1.msra.mxu0 0.0
    %3899 = vmatprep.subr.mxu0 0.0
    %3900 = vmatpush1.msra.mxu0 0.0
    %3901 = vmatprep.subr.mxu0 0.0
    %3902 = vmatpush1.msra.mxu0 0.0
    %3903 = vmatprep.subr.mxu0 0.0
    %3904 = vmatpush1.msra.mxu0 0.0
    %3905 = vmatprep.subr.mxu0 0.0
    %3906 = vmatpush1.msra.mxu0 0.0
    %3907 = vmatprep.subr.mxu0 0.0
    %v3908 = vand.u32 %v23, 4294901760
    %3909 = vmatpush1.msra.mxu0 %v3908
    %3910 = vmatprep.subr.mxu0 0.0
    %3911 = vmatpush2.msra.mxu0 0.0
    %3912 = vmatprep.subr.mxu0 0.0
    %3913 = vmatpush2.msra.mxu0 0.0
    %3914 = vmatprep.subr.mxu0 0.0
    %3915 = vmatpush2.msra.mxu0 0.0
    %3916 = vmatprep.subr.mxu0 0.0
    %3917 = vmatpush2.msra.mxu0 0.0
    %3918 = vmatprep.subr.mxu0 0.0
    %3919 = vmatpush2.msra.mxu0 0.0
    %3920 = vmatprep.subr.mxu0 0.0
    %3921 = vmatpush2.msra.mxu0 0.0
    %3922 = vmatprep.subr.mxu0 0.0
    %3923 = vmatpush2.msra.mxu0 0.0
    %3924 = vmatprep.subr.mxu0 0.0
    %3925 = vmatpush2.msra.mxu0 0.0
    %3926 = vmatprep.subr.mxu0 0.0
    %3927 = vmatpush2.msra.mxu0 0.0
    %3928 = vmatprep.subr.mxu0 0.0
    %3929 = vmatpush2.msra.mxu0 0.0
    %3930 = vmatprep.subr.mxu0 0.0
    %3931 = vmatpush2.msra.mxu0 0.0
    %3932 = vmatprep.subr.mxu0 0.0
    %3933 = vmatpush2.msra.mxu0 0.0
    %3934 = vmatprep.subr.mxu0 0.0
    %3935 = vmatpush2.msra.mxu0 0.0
    %3936 = vmatprep.subr.mxu0 0.0
    %3937 = vmatpush2.msra.mxu0 0.0
    %3938 = vmatprep.subr.mxu0 0.0
    %3939 = vmatpush2.msra.mxu0 0.0
    %3940 = vmatprep.subr.mxu0 0.0
    %3941 = vmatpush2.msra.mxu0 0.0
    %3942 = vmatprep.mubr.f32.mxu0 0.0
    %v3943 = vand.u32 %v3501, 4294901760
    %3944 = vmatmul.mubr.f32.gmra.mxu0 %v3943
    %v3945 = vpop.f32.mrf.mxu0
    %v3946 = vadd.f32 %v3874, %v3945
    %v3947 = vpop.f32.mrf.mxu0
    %3948 = vdwg.mxu0
    %v3949 = vadd.f32 %v3464, %v3946
    %s3950 = sadd.s32 %s18, 64
    %s3951 = scalar_lea.vmem %s1, %s3950
    %v3952 = vld [vmem:[%s3951] sm:$0xff]
    %3953 = vxpose.xlu0.b32.start [1/16] %v3952, 128
    %3954 = vxpose.xlu0.b32.cont [2/16] 0.0, 128
    %3955 = vxpose.xlu0.b32.cont [3/16] 0.0, 128
    %3956 = vxpose.xlu0.b32.cont [4/16] 0.0, 128
    %3957 = vxpose.xlu0.b32.cont [5/16] 0.0, 128
    %3958 = vxpose.xlu0.b32.cont [6/16] 0.0, 128
    %3959 = vxpose.xlu0.b32.cont [7/16] 0.0, 128
    %3960 = vxpose.xlu0.b32.cont [8/16] 0.0, 128
    %3961 = vxpose.xlu0.b32.cont [9/16] 0.0, 128
    %3962 = vxpose.xlu0.b32.cont [10/16] 0.0, 128
    %3963 = vxpose.xlu0.b32.cont [11/16] 0.0, 128
    %3964 = vxpose.xlu0.b32.cont [12/16] 0.0, 128
    %3965 = vxpose.xlu0.b32.cont [13/16] 0.0, 128
    %3966 = vxpose.xlu0.b32.cont [14/16] 0.0, 128
    %3967 = vxpose.xlu0.b32.cont [15/16] 0.0, 128
    %3968 = vxpose.xlu0.b32.end [16/16] 0.0, 128
    %v3969 = vpop.trf.xlu0
    %v3970 = vpop.trf.xlu0
    %v3971 = vpop.trf.xlu0
    %v3972 = vpop.trf.xlu0
    %v3973 = vpop.trf.xlu0
    %v3974 = vpop.trf.xlu0
    %v3975 = vpop.trf.xlu0
    %v3976 = vpop.trf.xlu0
    %v3977 = vpop.trf.xlu0
    %v3978 = vpop.trf.xlu0
    %v3979 = vpop.trf.xlu0
    %v3980 = vpop.trf.xlu0
    %v3981 = vpop.trf.xlu0
    %v3982 = vpop.trf.xlu0
    %v3983 = vpop.trf.xlu0
    %v3984 = vpop.trf.xlu0
    %v3986 = vsel %vm53, %v3969, 0
    %3988 = vmatprep.subr.mxu0 0.0
    %3989 = vmatpush1.msra.mxu0 0.0
    %3990 = vmatprep.subr.mxu0 0.0
    %3991 = vmatpush1.msra.mxu0 0.0
    %3992 = vmatprep.subr.mxu0 0.0
    %3993 = vmatpush1.msra.mxu0 0.0
    %3994 = vmatprep.subr.mxu0 0.0
    %3995 = vmatpush1.msra.mxu0 0.0
    %3996 = vmatprep.subr.mxu0 0.0
    %3997 = vmatpush1.msra.mxu0 0.0
    %3998 = vmatprep.subr.mxu0 0.0
    %3999 = vmatpush1.msra.mxu0 0.0
    %4000 = vmatprep.subr.mxu0 0.0
    %4001 = vmatpush1.msra.mxu0 0.0
    %4002 = vmatprep.subr.mxu0 0.0
    %4003 = vmatpush1.msra.mxu0 0.0
    %4004 = vmatprep.subr.mxu0 0.0
    %4005 = vmatpush1.msra.mxu0 0.0
    %4006 = vmatprep.subr.mxu0 0.0
    %4007 = vmatpush1.msra.mxu0 0.0
    %4008 = vmatprep.subr.mxu0 0.0
    %4009 = vmatpush1.msra.mxu0 0.0
    %4010 = vmatprep.subr.mxu0 0.0
    %4011 = vmatpush1.msra.mxu0 0.0
    %4012 = vmatprep.subr.mxu0 0.0
    %4013 = vmatpush1.msra.mxu0 0.0
    %4014 = vmatprep.subr.mxu0 0.0
    %4015 = vmatpush1.msra.mxu0 0.0
    %4016 = vmatprep.subr.mxu0 0.0
    %4017 = vmatpush1.msra.mxu0 0.0
    %4018 = vmatprep.subr.mxu0 0.0
    %v4019 = vand.u32 %v25, 4294901760
    %4020 = vmatpush1.msra.mxu0 %v4019
    %4021 = vmatprep.subr.mxu0 0.0
    %4022 = vmatpush2.msra.mxu0 0.0
    %4023 = vmatprep.subr.mxu0 0.0
    %4024 = vmatpush2.msra.mxu0 0.0
    %4025 = vmatprep.subr.mxu0 0.0
    %4026 = vmatpush2.msra.mxu0 0.0
    %4027 = vmatprep.subr.mxu0 0.0
    %4028 = vmatpush2.msra.mxu0 0.0
    %4029 = vmatprep.subr.mxu0 0.0
    %4030 = vmatpush2.msra.mxu0 0.0
    %4031 = vmatprep.subr.mxu0 0.0
    %4032 = vmatpush2.msra.mxu0 0.0
    %4033 = vmatprep.subr.mxu0 0.0
    %4034 = vmatpush2.msra.mxu0 0.0
    %4035 = vmatprep.subr.mxu0 0.0
    %4036 = vmatpush2.msra.mxu0 0.0
    %4037 = vmatprep.subr.mxu0 0.0
    %4038 = vmatpush2.msra.mxu0 0.0
    %4039 = vmatprep.subr.mxu0 0.0
    %4040 = vmatpush2.msra.mxu0 0.0
    %4041 = vmatprep.subr.mxu0 0.0
    %4042 = vmatpush2.msra.mxu0 0.0
    %4043 = vmatprep.subr.mxu0 0.0
    %4044 = vmatpush2.msra.mxu0 0.0
    %4045 = vmatprep.subr.mxu0 0.0
    %4046 = vmatpush2.msra.mxu0 0.0
    %4047 = vmatprep.subr.mxu0 0.0
    %4048 = vmatpush2.msra.mxu0 0.0
    %4049 = vmatprep.subr.mxu0 0.0
    %4050 = vmatpush2.msra.mxu0 0.0
    %4051 = vmatprep.subr.mxu0 0.0
    %4052 = vmatpush2.msra.mxu0 0.0
    %4053 = vmatprep.mubr.f32.mxu0 0.0
    %v4054 = vand.u32 %v3986, 4294901760
    %v4055 = vsub.f32 %v3986, %v4054
    %v4056 = vand.u32 %v4055, 4294901760
    %v4057 = vsub.f32 %v4055, %v4056
    %v4058 = vand.u32 %v4057, 4294901760
    %4059 = vmatmul.mubr.f32.gmra.mxu0 %v4058
    %v4060 = vpop.f32.mrf.mxu0
    %v4061 = vadd.f32 0.0, %v4060
    %v4062 = vpop.f32.mrf.mxu0
    %4063 = vdwg.mxu0
    %4064 = vmatprep.subr.mxu0 0.0
    %4065 = vmatpush1.msra.mxu0 0.0
    %4066 = vmatprep.subr.mxu0 0.0
    %4067 = vmatpush1.msra.mxu0 0.0
    %4068 = vmatprep.subr.mxu0 0.0
    %4069 = vmatpush1.msra.mxu0 0.0
    %4070 = vmatprep.subr.mxu0 0.0
    %4071 = vmatpush1.msra.mxu0 0.0
    %4072 = vmatprep.subr.mxu0 0.0
    %4073 = vmatpush1.msra.mxu0 0.0
    %4074 = vmatprep.subr.mxu0 0.0
    %4075 = vmatpush1.msra.mxu0 0.0
    %4076 = vmatprep.subr.mxu0 0.0
    %4077 = vmatpush1.msra.mxu0 0.0
    %4078 = vmatprep.subr.mxu0 0.0
    %4079 = vmatpush1.msra.mxu0 0.0
    %4080 = vmatprep.subr.mxu0 0.0
    %4081 = vmatpush1.msra.mxu0 0.0
    %4082 = vmatprep.subr.mxu0 0.0
    %4083 = vmatpush1.msra.mxu0 0.0
    %4084 = vmatprep.subr.mxu0 0.0
    %4085 = vmatpush1.msra.mxu0 0.0
    %4086 = vmatprep.subr.mxu0 0.0
    %4087 = vmatpush1.msra.mxu0 0.0
    %4088 = vmatprep.subr.mxu0 0.0
    %4089 = vmatpush1.msra.mxu0 0.0
    %4090 = vmatprep.subr.mxu0 0.0
    %4091 = vmatpush1.msra.mxu0 0.0
    %4092 = vmatprep.subr.mxu0 0.0
    %4093 = vmatpush1.msra.mxu0 0.0
    %4094 = vmatprep.subr.mxu0 0.0
    %v4095 = vand.u32 %v25, 4294901760
    %v4096 = vsub.f32 %v25, %v4095
    %v4097 = vand.u32 %v4096, 4294901760
    %v4098 = vsub.f32 %v4096, %v4097
    %v4099 = vand.u32 %v4098, 4294901760
    %4100 = vmatpush1.msra.mxu0 %v4099
    %4101 = vmatprep.subr.mxu0 0.0
    %4102 = vmatpush2.msra.mxu0 0.0
    %4103 = vmatprep.subr.mxu0 0.0
    %4104 = vmatpush2.msra.mxu0 0.0
    %4105 = vmatprep.subr.mxu0 0.0
    %4106 = vmatpush2.msra.mxu0 0.0
    %4107 = vmatprep.subr.mxu0 0.0
    %4108 = vmatpush2.msra.mxu0 0.0
    %4109 = vmatprep.subr.mxu0 0.0
    %4110 = vmatpush2.msra.mxu0 0.0
    %4111 = vmatprep.subr.mxu0 0.0
    %4112 = vmatpush2.msra.mxu0 0.0
    %4113 = vmatprep.subr.mxu0 0.0
    %4114 = vmatpush2.msra.mxu0 0.0
    %4115 = vmatprep.subr.mxu0 0.0
    %4116 = vmatpush2.msra.mxu0 0.0
    %4117 = vmatprep.subr.mxu0 0.0
    %4118 = vmatpush2.msra.mxu0 0.0
    %4119 = vmatprep.subr.mxu0 0.0
    %4120 = vmatpush2.msra.mxu0 0.0
    %4121 = vmatprep.subr.mxu0 0.0
    %4122 = vmatpush2.msra.mxu0 0.0
    %4123 = vmatprep.subr.mxu0 0.0
    %4124 = vmatpush2.msra.mxu0 0.0
    %4125 = vmatprep.subr.mxu0 0.0
    %4126 = vmatpush2.msra.mxu0 0.0
    %4127 = vmatprep.subr.mxu0 0.0
    %4128 = vmatpush2.msra.mxu0 0.0
    %4129 = vmatprep.subr.mxu0 0.0
    %4130 = vmatpush2.msra.mxu0 0.0
    %4131 = vmatprep.subr.mxu0 0.0
    %4132 = vmatpush2.msra.mxu0 0.0
    %4133 = vmatprep.mubr.f32.mxu0 0.0
    %v4134 = vand.u32 %v3986, 4294901760
    %4135 = vmatmul.mubr.f32.gmra.mxu0 %v4134
    %v4136 = vpop.f32.mrf.mxu0
    %v4137 = vadd.f32 %v4061, %v4136
    %v4138 = vpop.f32.mrf.mxu0
    %4139 = vdwg.mxu0
    %4140 = vmatprep.subr.mxu0 0.0
    %4141 = vmatpush1.msra.mxu0 0.0
    %4142 = vmatprep.subr.mxu0 0.0
    %4143 = vmatpush1.msra.mxu0 0.0
    %4144 = vmatprep.subr.mxu0 0.0
    %4145 = vmatpush1.msra.mxu0 0.0
    %4146 = vmatprep.subr.mxu0 0.0
    %4147 = vmatpush1.msra.mxu0 0.0
    %4148 = vmatprep.subr.mxu0 0.0
    %4149 = vmatpush1.msra.mxu0 0.0
    %4150 = vmatprep.subr.mxu0 0.0
    %4151 = vmatpush1.msra.mxu0 0.0
    %4152 = vmatprep.subr.mxu0 0.0
    %4153 = vmatpush1.msra.mxu0 0.0
    %4154 = vmatprep.subr.mxu0 0.0
    %4155 = vmatpush1.msra.mxu0 0.0
    %4156 = vmatprep.subr.mxu0 0.0
    %4157 = vmatpush1.msra.mxu0 0.0
    %4158 = vmatprep.subr.mxu0 0.0
    %4159 = vmatpush1.msra.mxu0 0.0
    %4160 = vmatprep.subr.mxu0 0.0
    %4161 = vmatpush1.msra.mxu0 0.0
    %4162 = vmatprep.subr.mxu0 0.0
    %4163 = vmatpush1.msra.mxu0 0.0
    %4164 = vmatprep.subr.mxu0 0.0
    %4165 = vmatpush1.msra.mxu0 0.0
    %4166 = vmatprep.subr.mxu0 0.0
    %4167 = vmatpush1.msra.mxu0 0.0
    %4168 = vmatprep.subr.mxu0 0.0
    %4169 = vmatpush1.msra.mxu0 0.0
    %4170 = vmatprep.subr.mxu0 0.0
    %v4171 = vand.u32 %v25, 4294901760
    %v4172 = vsub.f32 %v25, %v4171
    %4173 = vmatpush1.msra.mxu0 %v4172
    %4174 = vmatprep.subr.mxu0 0.0
    %4175 = vmatpush2.msra.mxu0 0.0
    %4176 = vmatprep.subr.mxu0 0.0
    %4177 = vmatpush2.msra.mxu0 0.0
    %4178 = vmatprep.subr.mxu0 0.0
    %4179 = vmatpush2.msra.mxu0 0.0
    %4180 = vmatprep.subr.mxu0 0.0
    %4181 = vmatpush2.msra.mxu0 0.0
    %4182 = vmatprep.subr.mxu0 0.0
    %4183 = vmatpush2.msra.mxu0 0.0
    %4184 = vmatprep.subr.mxu0 0.0
    %4185 = vmatpush2.msra.mxu0 0.0
    %4186 = vmatprep.subr.mxu0 0.0
    %4187 = vmatpush2.msra.mxu0 0.0
    %4188 = vmatprep.subr.mxu0 0.0
    %4189 = vmatpush2.msra.mxu0 0.0
    %4190 = vmatprep.subr.mxu0 0.0
    %4191 = vmatpush2.msra.mxu0 0.0
    %4192 = vmatprep.subr.mxu0 0.0
    %4193 = vmatpush2.msra.mxu0 0.0
    %4194 = vmatprep.subr.mxu0 0.0
    %4195 = vmatpush2.msra.mxu0 0.0
    %4196 = vmatprep.subr.mxu0 0.0
    %4197 = vmatpush2.msra.mxu0 0.0
    %4198 = vmatprep.subr.mxu0 0.0
    %4199 = vmatpush2.msra.mxu0 0.0
    %4200 = vmatprep.subr.mxu0 0.0
    %4201 = vmatpush2.msra.mxu0 0.0
    %4202 = vmatprep.subr.mxu0 0.0
    %4203 = vmatpush2.msra.mxu0 0.0
    %4204 = vmatprep.subr.mxu0 0.0
    %4205 = vmatpush2.msra.mxu0 0.0
    %4206 = vmatprep.mubr.f32.mxu0 0.0
    %v4207 = vand.u32 %v3986, 4294901760
    %v4208 = vsub.f32 %v3986, %v4207
    %4209 = vmatmul.mubr.f32.gmra.mxu0 %v4208
    %v4210 = vpop.f32.mrf.mxu0
    %v4211 = vadd.f32 %v4137, %v4210
    %v4212 = vpop.f32.mrf.mxu0
    %4213 = vdwg.mxu0
    %4214 = vmatprep.subr.mxu0 0.0
    %4215 = vmatpush1.msra.mxu0 0.0
    %4216 = vmatprep.subr.mxu0 0.0
    %4217 = vmatpush1.msra.mxu0 0.0
    %4218 = vmatprep.subr.mxu0 0.0
    %4219 = vmatpush1.msra.mxu0 0.0
    %4220 = vmatprep.subr.mxu0 0.0
    %4221 = vmatpush1.msra.mxu0 0.0
    %4222 = vmatprep.subr.mxu0 0.0
    %4223 = vmatpush1.msra.mxu0 0.0
    %4224 = vmatprep.subr.mxu0 0.0
    %4225 = vmatpush1.msra.mxu0 0.0
    %4226 = vmatprep.subr.mxu0 0.0
    %4227 = vmatpush1.msra.mxu0 0.0
    %4228 = vmatprep.subr.mxu0 0.0
    %4229 = vmatpush1.msra.mxu0 0.0
    %4230 = vmatprep.subr.mxu0 0.0
    %4231 = vmatpush1.msra.mxu0 0.0
    %4232 = vmatprep.subr.mxu0 0.0
    %4233 = vmatpush1.msra.mxu0 0.0
    %4234 = vmatprep.subr.mxu0 0.0
    %4235 = vmatpush1.msra.mxu0 0.0
    %4236 = vmatprep.subr.mxu0 0.0
    %4237 = vmatpush1.msra.mxu0 0.0
    %4238 = vmatprep.subr.mxu0 0.0
    %4239 = vmatpush1.msra.mxu0 0.0
    %4240 = vmatprep.subr.mxu0 0.0
    %4241 = vmatpush1.msra.mxu0 0.0
    %4242 = vmatprep.subr.mxu0 0.0
    %4243 = vmatpush1.msra.mxu0 0.0
    %4244 = vmatprep.subr.mxu0 0.0
    %v4245 = vand.u32 %v25, 4294901760
    %4246 = vmatpush1.msra.mxu0 %v4245
    %4247 = vmatprep.subr.mxu0 0.0
    %4248 = vmatpush2.msra.mxu0 0.0
    %4249 = vmatprep.subr.mxu0 0.0
    %4250 = vmatpush2.msra.mxu0 0.0
    %4251 = vmatprep.subr.mxu0 0.0
    %4252 = vmatpush2.msra.mxu0 0.0
    %4253 = vmatprep.subr.mxu0 0.0
    %4254 = vmatpush2.msra.mxu0 0.0
    %4255 = vmatprep.subr.mxu0 0.0
    %4256 = vmatpush2.msra.mxu0 0.0
    %4257 = vmatprep.subr.mxu0 0.0
    %4258 = vmatpush2.msra.mxu0 0.0
    %4259 = vmatprep.subr.mxu0 0.0
    %4260 = vmatpush2.msra.mxu0 0.0
    %4261 = vmatprep.subr.mxu0 0.0
    %4262 = vmatpush2.msra.mxu0 0.0
    %4263 = vmatprep.subr.mxu0 0.0
    %4264 = vmatpush2.msra.mxu0 0.0
    %4265 = vmatprep.subr.mxu0 0.0
    %4266 = vmatpush2.msra.mxu0 0.0
    %4267 = vmatprep.subr.mxu0 0.0
    %4268 = vmatpush2.msra.mxu0 0.0
    %4269 = vmatprep.subr.mxu0 0.0
    %4270 = vmatpush2.msra.mxu0 0.0
    %4271 = vmatprep.subr.mxu0 0.0
    %4272 = vmatpush2.msra.mxu0 0.0
    %4273 = vmatprep.subr.mxu0 0.0
    %4274 = vmatpush2.msra.mxu0 0.0
    %4275 = vmatprep.subr.mxu0 0.0
    %4276 = vmatpush2.msra.mxu0 0.0
    %4277 = vmatprep.subr.mxu0 0.0
    %4278 = vmatpush2.msra.mxu0 0.0
    %4279 = vmatprep.mubr.f32.mxu0 0.0
    %v4280 = vand.u32 %v3986, 4294901760
    %v4281 = vsub.f32 %v3986, %v4280
    %v4282 = vand.u32 %v4281, 4294901760
    %4283 = vmatmul.mubr.f32.gmra.mxu0 %v4282
    %v4284 = vpop.f32.mrf.mxu0
    %v4285 = vadd.f32 %v4211, %v4284
    %v4286 = vpop.f32.mrf.mxu0
    %4287 = vdwg.mxu0
    %4288 = vmatprep.subr.mxu0 0.0
    %4289 = vmatpush1.msra.mxu0 0.0
    %4290 = vmatprep.subr.mxu0 0.0
    %4291 = vmatpush1.msra.mxu0 0.0
    %4292 = vmatprep.subr.mxu0 0.0
    %4293 = vmatpush1.msra.mxu0 0.0
    %4294 = vmatprep.subr.mxu0 0.0
    %4295 = vmatpush1.msra.mxu0 0.0
    %4296 = vmatprep.subr.mxu0 0.0
    %4297 = vmatpush1.msra.mxu0 0.0
    %4298 = vmatprep.subr.mxu0 0.0
    %4299 = vmatpush1.msra.mxu0 0.0
    %4300 = vmatprep.subr.mxu0 0.0
    %4301 = vmatpush1.msra.mxu0 0.0
    %4302 = vmatprep.subr.mxu0 0.0
    %4303 = vmatpush1.msra.mxu0 0.0
    %4304 = vmatprep.subr.mxu0 0.0
    %4305 = vmatpush1.msra.mxu0 0.0
    %4306 = vmatprep.subr.mxu0 0.0
    %4307 = vmatpush1.msra.mxu0 0.0
    %4308 = vmatprep.subr.mxu0 0.0
    %4309 = vmatpush1.msra.mxu0 0.0
    %4310 = vmatprep.subr.mxu0 0.0
    %4311 = vmatpush1.msra.mxu0 0.0
    %4312 = vmatprep.subr.mxu0 0.0
    %4313 = vmatpush1.msra.mxu0 0.0
    %4314 = vmatprep.subr.mxu0 0.0
    %4315 = vmatpush1.msra.mxu0 0.0
    %4316 = vmatprep.subr.mxu0 0.0
    %4317 = vmatpush1.msra.mxu0 0.0
    %4318 = vmatprep.subr.mxu0 0.0
    %v4319 = vand.u32 %v25, 4294901760
    %v4320 = vsub.f32 %v25, %v4319
    %v4321 = vand.u32 %v4320, 4294901760
    %4322 = vmatpush1.msra.mxu0 %v4321
    %4323 = vmatprep.subr.mxu0 0.0
    %4324 = vmatpush2.msra.mxu0 0.0
    %4325 = vmatprep.subr.mxu0 0.0
    %4326 = vmatpush2.msra.mxu0 0.0
    %4327 = vmatprep.subr.mxu0 0.0
    %4328 = vmatpush2.msra.mxu0 0.0
    %4329 = vmatprep.subr.mxu0 0.0
    %4330 = vmatpush2.msra.mxu0 0.0
    %4331 = vmatprep.subr.mxu0 0.0
    %4332 = vmatpush2.msra.mxu0 0.0
    %4333 = vmatprep.subr.mxu0 0.0
    %4334 = vmatpush2.msra.mxu0 0.0
    %4335 = vmatprep.subr.mxu0 0.0
    %4336 = vmatpush2.msra.mxu0 0.0
    %4337 = vmatprep.subr.mxu0 0.0
    %4338 = vmatpush2.msra.mxu0 0.0
    %4339 = vmatprep.subr.mxu0 0.0
    %4340 = vmatpush2.msra.mxu0 0.0
    %4341 = vmatprep.subr.mxu0 0.0
    %4342 = vmatpush2.msra.mxu0 0.0
    %4343 = vmatprep.subr.mxu0 0.0
    %4344 = vmatpush2.msra.mxu0 0.0
    %4345 = vmatprep.subr.mxu0 0.0
    %4346 = vmatpush2.msra.mxu0 0.0
    %4347 = vmatprep.subr.mxu0 0.0
    %4348 = vmatpush2.msra.mxu0 0.0
    %4349 = vmatprep.subr.mxu0 0.0
    %4350 = vmatpush2.msra.mxu0 0.0
    %4351 = vmatprep.subr.mxu0 0.0
    %4352 = vmatpush2.msra.mxu0 0.0
    %4353 = vmatprep.subr.mxu0 0.0
    %4354 = vmatpush2.msra.mxu0 0.0
    %4355 = vmatprep.mubr.f32.mxu0 0.0
    %v4356 = vand.u32 %v3986, 4294901760
    %4357 = vmatmul.mubr.f32.gmra.mxu0 %v4356
    %v4358 = vpop.f32.mrf.mxu0
    %v4359 = vadd.f32 %v4285, %v4358
    %v4360 = vpop.f32.mrf.mxu0
    %4361 = vdwg.mxu0
    %4362 = vmatprep.subr.mxu0 0.0
    %4363 = vmatpush1.msra.mxu0 0.0
    %4364 = vmatprep.subr.mxu0 0.0
    %4365 = vmatpush1.msra.mxu0 0.0
    %4366 = vmatprep.subr.mxu0 0.0
    %4367 = vmatpush1.msra.mxu0 0.0
    %4368 = vmatprep.subr.mxu0 0.0
    %4369 = vmatpush1.msra.mxu0 0.0
    %4370 = vmatprep.subr.mxu0 0.0
    %4371 = vmatpush1.msra.mxu0 0.0
    %4372 = vmatprep.subr.mxu0 0.0
    %4373 = vmatpush1.msra.mxu0 0.0
    %4374 = vmatprep.subr.mxu0 0.0
    %4375 = vmatpush1.msra.mxu0 0.0
    %4376 = vmatprep.subr.mxu0 0.0
    %4377 = vmatpush1.msra.mxu0 0.0
    %4378 = vmatprep.subr.mxu0 0.0
    %4379 = vmatpush1.msra.mxu0 0.0
    %4380 = vmatprep.subr.mxu0 0.0
    %4381 = vmatpush1.msra.mxu0 0.0
    %4382 = vmatprep.subr.mxu0 0.0
    %4383 = vmatpush1.msra.mxu0 0.0
    %4384 = vmatprep.subr.mxu0 0.0
    %4385 = vmatpush1.msra.mxu0 0.0
    %4386 = vmatprep.subr.mxu0 0.0
    %4387 = vmatpush1.msra.mxu0 0.0
    %4388 = vmatprep.subr.mxu0 0.0
    %4389 = vmatpush1.msra.mxu0 0.0
    %4390 = vmatprep.subr.mxu0 0.0
    %4391 = vmatpush1.msra.mxu0 0.0
    %4392 = vmatprep.subr.mxu0 0.0
    %v4393 = vand.u32 %v25, 4294901760
    %4394 = vmatpush1.msra.mxu0 %v4393
    %4395 = vmatprep.subr.mxu0 0.0
    %4396 = vmatpush2.msra.mxu0 0.0
    %4397 = vmatprep.subr.mxu0 0.0
    %4398 = vmatpush2.msra.mxu0 0.0
    %4399 = vmatprep.subr.mxu0 0.0
    %4400 = vmatpush2.msra.mxu0 0.0
    %4401 = vmatprep.subr.mxu0 0.0
    %4402 = vmatpush2.msra.mxu0 0.0
    %4403 = vmatprep.subr.mxu0 0.0
    %4404 = vmatpush2.msra.mxu0 0.0
    %4405 = vmatprep.subr.mxu0 0.0
    %4406 = vmatpush2.msra.mxu0 0.0
    %4407 = vmatprep.subr.mxu0 0.0
    %4408 = vmatpush2.msra.mxu0 0.0
    %4409 = vmatprep.subr.mxu0 0.0
    %4410 = vmatpush2.msra.mxu0 0.0
    %4411 = vmatprep.subr.mxu0 0.0
    %4412 = vmatpush2.msra.mxu0 0.0
    %4413 = vmatprep.subr.mxu0 0.0
    %4414 = vmatpush2.msra.mxu0 0.0
    %4415 = vmatprep.subr.mxu0 0.0
    %4416 = vmatpush2.msra.mxu0 0.0
    %4417 = vmatprep.subr.mxu0 0.0
    %4418 = vmatpush2.msra.mxu0 0.0
    %4419 = vmatprep.subr.mxu0 0.0
    %4420 = vmatpush2.msra.mxu0 0.0
    %4421 = vmatprep.subr.mxu0 0.0
    %4422 = vmatpush2.msra.mxu0 0.0
    %4423 = vmatprep.subr.mxu0 0.0
    %4424 = vmatpush2.msra.mxu0 0.0
    %4425 = vmatprep.subr.mxu0 0.0
    %4426 = vmatpush2.msra.mxu0 0.0
    %4427 = vmatprep.mubr.f32.mxu0 0.0
    %v4428 = vand.u32 %v3986, 4294901760
    %4429 = vmatmul.mubr.f32.gmra.mxu0 %v4428
    %v4430 = vpop.f32.mrf.mxu0
    %v4431 = vadd.f32 %v4359, %v4430
    %v4432 = vpop.f32.mrf.mxu0
    %4433 = vdwg.mxu0
    %v4434 = vadd.f32 %v3949, %v4431
    %p4435 = scmp.eq.s32.totalorder 0, 0
    // Predicated region
    $region18: #{tpu_custom_call.1} parent=1 // pred_check
      %p4436 = pneg %p4435
    $region19: #{tpu_custom_call.1} parent=1 // pred_check_branch
      %4438 = sbr.rel (%p4436) target = $region21
    $region20: #{tpu_custom_call.1} parent=1 // pred_region
      %4439 = vst [vmem:[#allocation2] sm:$0xf] 0.0
    $region21: #{tpu_custom_call.1} parent=1 // pred_fallthru
      _
    %v4440 = vld [vmem:[#allocation2] sm:$0xf]
    %v4441 = vadd.f32 %v4440, %v4434
    %4442 = vst [vmem:[#allocation2] sm:$0xf] %v4441
    %v4443 = vmax.f32 %v19, %v21
    %v4444 = vmax.f32 %v23, %v25
    %v4445 = vmax.f32 %v4443, %v4444
    %s4446 = scalar_lea.vmem %s2, %s75
    %v4447 = vld [vmem:[%s4446] sm:$0xff]
    %s4448 = sadd.s32 %s75, 16
    %s4449 = scalar_lea.vmem %s2, %s4448
    %v4450 = vld [vmem:[%s4449] sm:$0xff]
    %s4451 = sadd.s32 %s75, 32
    %s4452 = scalar_lea.vmem %s2, %s4451
    %v4453 = vld [vmem:[%s4452] sm:$0xff]
    %4455 = vset.pattern.permute.xlu0 0
    %4456 = vperm.xlu0 %4455, %v4447
    %v4457 = vpop.permute.xlu0 %4456
    %v4459 = vmul.f32 %v4445, %v4457
    %4461 = vset.pattern.permute.xlu0 0
    %4462 = vperm.xlu0 %4461, %v4450
    %v4463 = vpop.permute.xlu0 %4462
    %v4465 = vadd.f32 %v4459, %v4463
    %vm4466 = vcmp.gt.f32.partialorder %v4465, 0.0
    %4468 = vset.pattern.permute.xlu0 0
    %4469 = vperm.xlu0 %4468, %v4453
    %v4470 = vpop.permute.xlu0 %4469
    %v4472 = vmul.f32 %v4470, %v4465
    %v4473 = vsel %vm4466, %v4465, %v4472
    %s4474 = scalar_lea.vmem [#allocation2], %s75
    %4475 = vst [vmem:[%s4474] sm:$0xff] %v4473
    // Predicated region
    $region22: #{tpu_custom_call.1} parent=1 // pred_check
      %p4476 = pneg %p4435
    $region23: #{tpu_custom_call.1} parent=1 // pred_check_branch
      %4478 = sbr.rel (%p4476) target = $region25
    $region24: #{tpu_custom_call.1} parent=1 // pred_region
      %v4479 = vld [vmem:[%s2] sm:$0xf]
      %s4480 = scalar_lea.vmem %s2, 16
      %v4481 = vld [vmem:[%s4480] sm:$0xf]
      %s4482 = scalar_lea.vmem %s2, 32
      %v4483 = vld [vmem:[%s4482] sm:$0xf]
      %v4484 = vld [vmem:[#allocation2] sm:$0xf]
      %4486 = vset.pattern.permute.xlu0 0
      %4487 = vperm.xlu0 %4486, %v4479
      %v4488 = vpop.permute.xlu0 %4487
      %v4490 = vmul.f32 %v4484, %v4488
      %4492 = vset.pattern.permute.xlu0 0
      %4493 = vperm.xlu0 %4492, %v4481
      %v4494 = vpop.permute.xlu0 %4493
      %v4496 = vadd.f32 %v4490, %v4494
      %vm4497 = vcmp.gt.f32.partialorder %v4496, 0.0
      %4499 = vset.pattern.permute.xlu0 0
      %4500 = vperm.xlu0 %4499, %v4483
      %v4501 = vpop.permute.xlu0 %4500
      %v4503 = vmul.f32 %v4501, %v4496
      %v4504 = vsel %vm4497, %v4496, %v4503
      %4505 = vst [vmem:[#allocation2] sm:$0xf] %v4504
    $region25: #{tpu_custom_call.1} parent=1 // pred_fallthru
      _
    // Predicated region
    $region26: #{tpu_custom_call.1} parent=1 // pred_check
      _
    $region27: #{tpu_custom_call.1} parent=1 // pred_check_branch
      %4507 = sbr.rel (0) target = $region29
    $region28: #{tpu_custom_call.1} parent=1 // pred_region
      %s4509 = ssub.s32 256, 256
      %4510 = vsyncadd [#allocation3], %s4509
      %s4511 = sshll.u32 [#allocation2], 4
      %s4512 = int_to_ptr.vmem [resolvable:$true] %s4511
      %4517 = dma.vmem_to_hbm [thread:$0]  %s4512, 256, %s4, [#allocation3], 128, 128, 8
    $region29: #{tpu_custom_call.1} parent=1 // pred_fallthru
      _
    // Predicated region
    $region30: #{tpu_custom_call.1} parent=1 // pred_check
      _
    $region31: #{tpu_custom_call.1} parent=1 // pred_check_branch
      %4519 = sbr.rel (0) target = $region33
    $region32: #{tpu_custom_call.1} parent=1 // pred_region
      %4520 = dma.done [#allocation3], 256
    $region33: #{tpu_custom_call.1} parent=1 // pred_fallthru
      _
    %4521 = vsyncpa [#allocation3], 1

</llo_original>
